<compile_context>
chip_gen: v7x
topology: tpu7x:2x2x1
jax: 0.10.0
libtpu: 0.0.40
codegen_flags: <defaults>
</compile_context>

<pallas_src>
import functools
import jax
import jax.numpy as jnp
from jax import lax
from jax.experimental import pallas as pl
from jax.experimental.pallas import tpu as pltpu


# ------------------------------ fused kernel (per batch tile) ------------------------------

def _fused_kernel(H, T, BB, inv_tau,
                  emb_ref, h0_ref, c0_ref, ctx_ref, bias_ref,
                  wih0_ref, whh0_ref, b0_ref,
                  wih1_ref, whh1_ref, b1_ref,
                  wp_rnn_ref, wp_ant_ref, wdec_ref, bdec_ref,
                  out_ref, hn_ref, cn_ref):
    # ---------------- 2-layer LSTM, batched over the BB-row tile ----------------
    # Gate order in the pre-packed weights/biases is [i, f, o | g].
    wih0 = wih0_ref[...]                                   # (E, 4H)
    whh0 = whh0_ref[...]                                   # (H, 4H)
    wih1 = wih1_ref[...]                                   # (H, 4H)
    whh1 = whh1_ref[...]                                   # (H, 4H)
    b0 = b0_ref[...]                                       # (1, 4H)
    b1 = b1_ref[...]                                       # (1, 4H)

    # Layer-0 input projections: independent of the recurrence carry, computed up front so
    # only the recurrent matmul sits on the serial chain.
    xg = [jnp.dot(emb_ref[t], wih0, preferred_element_type=jnp.float32) + b0
          for t in range(T)]                               # T x (BB, 4H)

    h0c = h0_ref[0]                                        # (BB, H)
    h1c = h0_ref[1]
    c0c = c0_ref[0]
    c1c = c0_ref[1]

    def gates_to_hc(g, c_prev):
        sg = jax.nn.sigmoid(g[:, :3 * H])                  # i, f, o  (one EUP pass over 3H)
        gg = jnp.tanh(g[:, 3 * H:])                        # g        (tanh over H only)
        i = sg[:, 0:H]
        f = sg[:, H:2 * H]
        o = sg[:, 2 * H:3 * H]
        c_new = f * c_prev + i * gg
        h_new = o * jnp.tanh(c_new)
        return h_new, c_new

    h1_steps = []
    for t in range(T):                                     # static unroll (T small)
        # layer 0: only the recurrent matmul stays on the serial chain
        g0 = xg[t] + jnp.dot(h0c, whh0, preferred_element_type=jnp.float32)
        h0c, c0c = gates_to_hc(g0, c0c)
        # layer 1: two accumulated matmuls, no per-step concat
        g1 = (jnp.dot(h0c, wih1, preferred_element_type=jnp.float32)
              + jnp.dot(h1c, whh1, preferred_element_type=jnp.float32) + b1)
        h1c, c1c = gates_to_hc(g1, c1c)
        h1_steps.append(h1c)                               # keep in vregs

    # final hidden state written once (disjoint per-batch-tile block)
    hn_ref[...] = jnp.stack([h0c, h1c], axis=0)            # (L, BB, H)
    cn_ref[...] = jnp.stack([c0c, c1c], axis=0)

    wp_rnn = wp_rnn_ref[...]                               # (H, A)
    wp_ant = wp_ant_ref[...]                               # (H, A)
    wdec = wdec_ref[...]                                   # (A, Vp)
    bdec = bdec_ref[...]                                   # (1, Vp), -1e30 in pad columns

    # -------- attention + concat_proj + decoder + log_softmax, per row of the tile --------
    # Post-LSTM work is off the recurrence chain and uses only plain 2-D MXU matmuls.
    for b in range(BB):
        q_b = jnp.concatenate([h1_steps[t][b:b + 1, :] for t in range(T)], axis=0)  # (T, H)
        ck_b = ctx_ref[b]                                  # (S, H)

        # dot-product source attention, (T, S) oriented, additive 0/-1e30 pad bias
        score = lax.dot_general(q_b, ck_b, (((1,), (1,)), ((), ())),
                                preferred_element_type=jnp.float32)                  # (T, S)
        score = score + bias_ref[b]                        # (1, S) broadcast over T
        smax = jnp.max(score, axis=-1, keepdims=True)
        p = jnp.exp(score - smax)
        p = p / jnp.sum(p, axis=-1, keepdims=True)         # softmax over source dim
        ant = jnp.dot(p, ck_b, preferred_element_type=jnp.float32)                   # (T, H)

        # concat_proj (tanh, no bias for 'dotprod') + decoder + log_softmax
        proj = jnp.tanh(
            jnp.dot(q_b, wp_rnn, preferred_element_type=jnp.float32)
            + jnp.dot(ant, wp_ant, preferred_element_type=jnp.float32))               # (T, A)
        logit = (jnp.dot(proj, wdec, preferred_element_type=jnp.float32)
                 + bdec) * inv_tau                         # (T, Vp), lane-dense
        lmax = jnp.max(logit, axis=-1, keepdims=True)
        lse = jnp.log(jnp.sum(jnp.exp(logit - lmax), axis=-1, keepdims=True)) + lmax
        out_ref[b] = logit - lse                           # log_softmax


def fused_decoder(emb_tb, h0, c0, ctx_b, bias_b, p, tau):
    """emb_tb (T,B,E) time-major, h0/c0 (L,B,H), ctx_b (B,S,H), bias_b (B,1,S).
    Returns (dec (B,T,Vp) log-probs over padded vocab, hN (L,B,H), cN (L,B,H))."""
    T, B, E = emb_tb.shape
    L, _, H = h0.shape
    _, S, _ = ctx_b.shape
    Vp = p["wdec_t"].shape[1]

    BB = B if B <= 8 else 8                                # batch-tile size (sublane fill)
    Bp = ((B + BB - 1) // BB) * BB
    if Bp != B:
        def padb(a, ax):
            pad = [(0, 0)] * a.ndim
            pad[ax] = (0, Bp - B)
            return jnp.pad(a, pad)
        emb_tb = padb(emb_tb, 1)
        h0 = padb(h0, 1)
        c0 = padb(c0, 1)
        ctx_b = padb(ctx_b, 0)
        bias_b = padb(bias_b, 0)

    kernel = functools.partial(_fused_kernel, H, T, BB, 1.0 / tau)

    def wspec(arr):
        return pl.BlockSpec(arr.shape, lambda b: (0, 0))

    dec, hn, cn = pl.pallas_call(
        kernel,
        out_shape=(jax.ShapeDtypeStruct((Bp, T, Vp), jnp.float32),
                   jax.ShapeDtypeStruct((L, Bp, H), jnp.float32),
                   jax.ShapeDtypeStruct((L, Bp, H), jnp.float32)),
        grid=(Bp // BB,),
        in_specs=[
            pl.BlockSpec((T, BB, E), lambda b: (0, b, 0)),   # embeddings (time-major)
            pl.BlockSpec((L, BB, H), lambda b: (0, b, 0)),   # h0
            pl.BlockSpec((L, BB, H), lambda b: (0, b, 0)),   # c0
            pl.BlockSpec((BB, S, H), lambda b: (b, 0, 0)),   # context (batch-major)
            pl.BlockSpec((BB, 1, S), lambda b: (b, 0, 0)),   # additive pad bias
            wspec(p["wih0_t"]), wspec(p["whh0_t"]), wspec(p["b0"]),
            wspec(p["wih1_t"]), wspec(p["whh1_t"]), wspec(p["b1"]),
            wspec(p["wp_rnn_t"]), wspec(p["wp_ant_t"]),
            wspec(p["wdec_t"]), wspec(p["bdec"]),
        ],
        out_specs=(
            pl.BlockSpec((BB, T, Vp), lambda b: (b, 0, 0)),  # log-probs (lane-dense Vp)
            pl.BlockSpec((L, BB, H), lambda b: (0, b, 0)),   # hN
            pl.BlockSpec((L, BB, H), lambda b: (0, b, 0)),   # cN
        ),
        compiler_params=pltpu.CompilerParams(dimension_semantics=("parallel",)),
    )(emb_tb, h0, c0, ctx_b, bias_b,
      p["wih0_t"], p["whh0_t"], p["b0"],
      p["wih1_t"], p["whh1_t"], p["b1"],
      p["wp_rnn_t"], p["wp_ant_t"], p["wdec_t"], p["bdec"])
    return dec[:B], hn[:, :B], cn[:, :B]


# ----------------------------------- full forward -----------------------------------

def decoder_forward(tgt, hid, context, pad_mask, params, ntoken, tau=1.0):
    """Decoder.forward(tgt, hid, context, pad_mask) with defaults (eval, no input_feed):
    returns (dec_out (T,B,ntoken) log-probs, (hN, cN))."""
    h0, c0 = hid
    # embedding gather stays in plain JAX (glue); dropout is a no-op in eval mode
    emb_tb = jnp.take(params["emb"], tgt, axis=0)                              # (T, B, E)
    ctx_b = jnp.transpose(context, (1, 0, 2))                                  # (B, S, H)
    bias_b = jnp.where(pad_mask, -1e30, 0.0).astype(jnp.float32).T[:, None, :]  # (B, 1, S)

    dec_b, hN, cN = fused_decoder(emb_tb, h0, c0, ctx_b, bias_b, params, tau)

    dec_out = jnp.transpose(dec_b, (1, 0, 2))[:, :, :ntoken]                   # (T, B, V)
    return dec_out, (hN, cN)


# ----------------------------------- pure-JAX reference -----------------------------------

def ref_forward(tgt, hid, context, pad_mask, raw, tau):
    h0, c0 = hid
    H = h0.shape[2]
    emb = jnp.take(raw["emb"], tgt, axis=0)                                    # (T, B, E)

    def run_layer(x_seq, h_init, c_init, wih, whh, b):
        wih_t, whh_t = wih.T, whh.T

        def step(carry, xt):
            h, c = carry
            g = xt @ wih_t + h @ whh_t + b
            i = jax.nn.sigmoid(g[:, 0 * H:1 * H])
            f = jax.nn.sigmoid(g[:, 1 * H:2 * H])
            gg = jnp.tanh(g[:, 2 * H:3 * H])
            o = jax.nn.sigmoid(g[:, 3 * H:4 * H])
            c = f * c + i * gg
            h = o * jnp.tanh(c)
            return (h, c), h

        (hT, cT), ys = lax.scan(step, (h_init, c_init), x_seq)
        return ys, hT, cT

    y0, h0f, c0f = run_layer(emb, h0[0], c0[0], raw["wih0"], raw["whh0"], raw["b0"])
    y1, h1f, c1f = run_layer(y0, h0[1], c0[1], raw["wih1"], raw["whh1"], raw["b1"])
    rnn_out = y1
    hN = jnp.stack([h0f, h1f]); cN = jnp.stack([c0f, c1f])

    score = jnp.einsum("sbh,tbh->stb", context, rnn_out)
    score = jnp.where(pad_mask[:, None, :], -jnp.inf, score)
    prob = jax.nn.softmax(score, axis=0)
    ant = jnp.einsum("stb,sbh->tbh", prob, context)
    proj = jnp.tanh(jnp.concatenate([rnn_out, ant], axis=-1) @ raw["wproj"].T)
    logit = proj @ raw["wdec"].T + raw["bdec"]
    dec_out = jax.nn.log_softmax(logit / tau, axis=-1)
    return dec_out, (hN, cN)


# ----------------------------------- main -----------------------------------

if __name__ == "__main__":
    # Module hyperparameters (small, consistent with Decoder.__init__)
    V = 50        # ntoken
    E = 32        # nemb
    H = 32        # nhid
    A = 32        # natthid
    L = 2         # nlayer (kernel implements the nlayer=2 configuration)
    T = 8         # tgt_len
    B = 2         # batch
    S = 6         # src_len
    pad_idx, bos_idx, eos_idx = 0, 1, 2
    tau = 1.0
    Vp = ((V + 127) // 128) * 128   # lane-dense padded vocab width

    key = jax.random.PRNGKey(0)
    ks = jax.random.split(key, 16)

    def nrm(k, shape, scale=0.1):
        return (scale * jax.random.normal(k, shape)).astype(jnp.float32)

    emb = nrm(ks[0], (V, E)).at[pad_idx].set(0.0)        # padding_idx row is zero

    # LSTM parameters (PyTorch gate order i, f, g, o); biases fused (b_ih + b_hh)
    wih0 = nrm(ks[1], (4 * H, E)); whh0 = nrm(ks[2], (4 * H, H))
    b0 = nrm(ks[3], (4 * H,)) + nrm(ks[4], (4 * H,))
    wih1 = nrm(ks[5], (4 * H, H)); whh1 = nrm(ks[6], (4 * H, H))
    b1 = nrm(ks[7], (4 * H,)) + nrm(ks[8], (4 * H,))

    # concat_proj: Linear(2*nhid -> natthid, bias=False for att_mode='dotprod')
    wproj = nrm(ks[9], (A, 2 * H))
    # decoder: Linear(natthid -> ntoken)
    wdec = nrm(ks[10], (V, A)); bdec = nrm(ks[11], (V,))

    raw = {"emb": emb, "wih0": wih0, "whh0": whh0, "b0": b0,
           "wih1": wih1, "whh1": whh1, "b1": b1,
           "wproj": wproj, "wdec": wdec, "bdec": bdec}

    # kernel-side parameter layout: gate rows reordered [i, f, g, o] -> [i, f, o, g],
    # weights transposed, vocab padded to 128 lanes with -1e30 bias in the pad columns
    def reorder_gates(w):
        return jnp.concatenate([w[0:H], w[H:2 * H], w[3 * H:4 * H], w[2 * H:3 * H]], axis=0)

    wdec_t_pad = jnp.zeros((A, Vp), jnp.float32).at[:, :V].set(wdec.T)
    bdec_pad = jnp.full((1, Vp), -1e30, jnp.float32).at[0, :V].set(bdec)
    params = {
        "emb": emb,
        "wih0_t": reorder_gates(wih0).T,                   # (E, 4H)
        "whh0_t": reorder_gates(whh0).T,                   # (H, 4H)
        "b0": reorder_gates(b0)[None, :],                  # (1, 4H)
        "wih1_t": reorder_gates(wih1).T,                   # (H, 4H)
        "whh1_t": reorder_gates(whh1).T,                   # (H, 4H)
        "b1": reorder_gates(b1)[None, :],                  # (1, 4H)
        "wp_rnn_t": wproj[:, :H].T, "wp_ant_t": wproj[:, H:].T,
        "wdec_t": wdec_t_pad, "bdec": bdec_pad,
    }

    # Inputs
    tgt = jax.random.randint(ks[12], (T, B), 3, V).astype(jnp.int32)
    h0 = nrm(ks[13], (L, B, H), 0.5)
    c0 = nrm(ks[14], (L, B, H), 0.5)
    context = nrm(ks[15], (S, B, H), 0.5)
    pad_mask = jnp.zeros((S, B), dtype=bool).at[S - 1, 1].set(True)  # last src pos padded for b=1

    @jax.jit
    def run(tgt_, h_, c_, ctx_, m_):
        return decoder_forward(tgt_, (h_, c_), ctx_, m_, params, V, tau)

    dec_out, (hN, cN) = run(tgt, h0, c0, context, pad_mask)
    jax.block_until_ready(dec_out)

    # sanity check vs pure-JAX reference
    ref_dec, (ref_h, ref_c) = ref_forward(tgt, (h0, c0), context, pad_mask, raw, tau)
    err = max(float(jnp.max(jnp.abs(dec_out - ref_dec))),
              float(jnp.max(jnp.abs(hN - ref_h))),
              float(jnp.max(jnp.abs(cN - ref_c))))
    assert err < 2e-3, f"mismatch vs reference: {err}"
    assert dec_out.shape == (T, B, V) and hN.shape == (L, B, H) and cN.shape == (L, B, H)

    print("KERNEL_OK")
</pallas_src>

<mosaic_0001>
module attributes {stable_mosaic.version = 11 : i64} {
  func.func @_fused_kernel(%arg0: i32, %arg1: memref<8x2x32xf32, #tpu.memory_space<vmem>>, %arg2: memref<2x2x32xf32, #tpu.memory_space<vmem>>, %arg3: memref<2x2x32xf32, #tpu.memory_space<vmem>>, %arg4: memref<2x6x32xf32, #tpu.memory_space<vmem>>, %arg5: memref<2x1x6xf32, #tpu.memory_space<vmem>>, %arg6: memref<32x128xf32, #tpu.memory_space<vmem>>, %arg7: memref<32x128xf32, #tpu.memory_space<vmem>>, %arg8: memref<1x128xf32, #tpu.memory_space<vmem>>, %arg9: memref<32x128xf32, #tpu.memory_space<vmem>>, %arg10: memref<32x128xf32, #tpu.memory_space<vmem>>, %arg11: memref<1x128xf32, #tpu.memory_space<vmem>>, %arg12: memref<32x32xf32, #tpu.memory_space<vmem>>, %arg13: memref<32x32xf32, #tpu.memory_space<vmem>>, %arg14: memref<32x128xf32, #tpu.memory_space<vmem>>, %arg15: memref<1x128xf32, #tpu.memory_space<vmem>>, %arg16: memref<2x8x128xf32, #tpu.memory_space<vmem>>, %arg17: memref<2x2x32xf32, #tpu.memory_space<vmem>>, %arg18: memref<2x2x32xf32, #tpu.memory_space<vmem>>) attributes {dimension_semantics = [#tpu.dimension_semantics<parallel>], iteration_bounds = array<i64: 1>, scalar_prefetch = 0 : i64, scratch_operands = 0 : i64, tpu.core_type = #tpu.core_type<tc>, window_params = [{transform_indices = @transform_0, window_bounds = array<i64: 8, 2, 32>}, {transform_indices = @transform_1, window_bounds = array<i64: 2, 2, 32>}, {transform_indices = @transform_2, window_bounds = array<i64: 2, 2, 32>}, {transform_indices = @transform_3, window_bounds = array<i64: 2, 6, 32>}, {transform_indices = @transform_4, window_bounds = array<i64: 2, 1, 6>}, {pipeline_mode = #tpu.pipeline_mode<synchronous>, transform_indices = @transform_5, window_bounds = array<i64: 32, 128>}, {pipeline_mode = #tpu.pipeline_mode<synchronous>, transform_indices = @transform_6, window_bounds = array<i64: 32, 128>}, {pipeline_mode = #tpu.pipeline_mode<synchronous>, transform_indices = @transform_7, window_bounds = array<i64: 1, 128>}, {pipeline_mode = #tpu.pipeline_mode<synchronous>, transform_indices = @transform_8, window_bounds = array<i64: 32, 128>}, {pipeline_mode = #tpu.pipeline_mode<synchronous>, transform_indices = @transform_9, window_bounds = array<i64: 32, 128>}, {pipeline_mode = #tpu.pipeline_mode<synchronous>, transform_indices = @transform_10, window_bounds = array<i64: 1, 128>}, {pipeline_mode = #tpu.pipeline_mode<synchronous>, transform_indices = @transform_11, window_bounds = array<i64: 32, 32>}, {pipeline_mode = #tpu.pipeline_mode<synchronous>, transform_indices = @transform_12, window_bounds = array<i64: 32, 32>}, {pipeline_mode = #tpu.pipeline_mode<synchronous>, transform_indices = @transform_13, window_bounds = array<i64: 32, 128>}, {pipeline_mode = #tpu.pipeline_mode<synchronous>, transform_indices = @transform_14, window_bounds = array<i64: 1, 128>}, {transform_indices = @transform_15, window_bounds = array<i64: 2, 8, 128>}, {transform_indices = @transform_16, window_bounds = array<i64: 2, 2, 32>}, {transform_indices = @transform_17, window_bounds = array<i64: 2, 2, 32>}]} {
    %c0 = arith.constant 0 : index
    %c0_0 = arith.constant 0 : index
    %0 = vector.load %arg6[%c0, %c0_0] : memref<32x128xf32, #tpu.memory_space<vmem>>, vector<32x128xf32>
    %c0_1 = arith.constant 0 : index
    %c0_2 = arith.constant 0 : index
    %1 = vector.load %arg7[%c0_1, %c0_2] : memref<32x128xf32, #tpu.memory_space<vmem>>, vector<32x128xf32>
    %c0_3 = arith.constant 0 : index
    %c0_4 = arith.constant 0 : index
    %2 = vector.load %arg9[%c0_3, %c0_4] : memref<32x128xf32, #tpu.memory_space<vmem>>, vector<32x128xf32>
    %c0_5 = arith.constant 0 : index
    %c0_6 = arith.constant 0 : index
    %3 = vector.load %arg10[%c0_5, %c0_6] : memref<32x128xf32, #tpu.memory_space<vmem>>, vector<32x128xf32>
    %c0_7 = arith.constant 0 : index
    %c0_8 = arith.constant 0 : index
    %4 = vector.load %arg8[%c0_7, %c0_8] : memref<1x128xf32, #tpu.memory_space<vmem>>, vector<1x128xf32>
    %c0_9 = arith.constant 0 : index
    %c0_10 = arith.constant 0 : index
    %5 = vector.load %arg11[%c0_9, %c0_10] : memref<1x128xf32, #tpu.memory_space<vmem>>, vector<1x128xf32>
    %c0_11 = arith.constant 0 : index
    %c0_12 = arith.constant 0 : index
    %c0_13 = arith.constant 0 : index
    %6 = vector.load %arg1[%c0_11, %c0_12, %c0_13] : memref<8x2x32xf32, #tpu.memory_space<vmem>>, vector<1x2x32xf32>
    %7 = vector.shape_cast %6 : vector<1x2x32xf32> to vector<2x32xf32>
    %cst = arith.constant dense<0.000000e+00> : vector<2x128xf32>
    %8 = tpu.matmul %7, %0, %cst {dimension_numbers = #tpu.dot_dimension_numbers<[1], [0], [0], [1], [0, 0, 1, 1], [], []>} : vector<2x32xf32>, vector<32x128xf32>, vector<2x128xf32> -> vector<2x128xf32>
    %9 = vector.broadcast %4 : vector<1x128xf32> to vector<2x128xf32>
    %10 = arith.addf %8, %9 : vector<2x128xf32>
    %c1 = arith.constant 1 : index
    %c0_14 = arith.constant 0 : index
    %c0_15 = arith.constant 0 : index
    %11 = vector.load %arg1[%c1, %c0_14, %c0_15] : memref<8x2x32xf32, #tpu.memory_space<vmem>>, vector<1x2x32xf32>
    %12 = vector.shape_cast %11 : vector<1x2x32xf32> to vector<2x32xf32>
    %cst_16 = arith.constant dense<0.000000e+00> : vector<2x128xf32>
    %13 = tpu.matmul %12, %0, %cst_16 {dimension_numbers = #tpu.dot_dimension_numbers<[1], [0], [0], [1], [0, 0, 1, 1], [], []>} : vector<2x32xf32>, vector<32x128xf32>, vector<2x128xf32> -> vector<2x128xf32>
    %14 = vector.broadcast %4 : vector<1x128xf32> to vector<2x128xf32>
    %15 = arith.addf %13, %14 : vector<2x128xf32>
    %c2 = arith.constant 2 : index
    %c0_17 = arith.constant 0 : index
    %c0_18 = arith.constant 0 : index
    %16 = vector.load %arg1[%c2, %c0_17, %c0_18] : memref<8x2x32xf32, #tpu.memory_space<vmem>>, vector<1x2x32xf32>
    %17 = vector.shape_cast %16 : vector<1x2x32xf32> to vector<2x32xf32>
    %cst_19 = arith.constant dense<0.000000e+00> : vector<2x128xf32>
    %18 = tpu.matmul %17, %0, %cst_19 {dimension_numbers = #tpu.dot_dimension_numbers<[1], [0], [0], [1], [0, 0, 1, 1], [], []>} : vector<2x32xf32>, vector<32x128xf32>, vector<2x128xf32> -> vector<2x128xf32>
    %19 = vector.broadcast %4 : vector<1x128xf32> to vector<2x128xf32>
    %20 = arith.addf %18, %19 : vector<2x128xf32>
    %c3 = arith.constant 3 : index
    %c0_20 = arith.constant 0 : index
    %c0_21 = arith.constant 0 : index
    %21 = vector.load %arg1[%c3, %c0_20, %c0_21] : memref<8x2x32xf32, #tpu.memory_space<vmem>>, vector<1x2x32xf32>
    %22 = vector.shape_cast %21 : vector<1x2x32xf32> to vector<2x32xf32>
    %cst_22 = arith.constant dense<0.000000e+00> : vector<2x128xf32>
    %23 = tpu.matmul %22, %0, %cst_22 {dimension_numbers = #tpu.dot_dimension_numbers<[1], [0], [0], [1], [0, 0, 1, 1], [], []>} : vector<2x32xf32>, vector<32x128xf32>, vector<2x128xf32> -> vector<2x128xf32>
    %24 = vector.broadcast %4 : vector<1x128xf32> to vector<2x128xf32>
    %25 = arith.addf %23, %24 : vector<2x128xf32>
    %c4 = arith.constant 4 : index
    %c0_23 = arith.constant 0 : index
    %c0_24 = arith.constant 0 : index
    %26 = vector.load %arg1[%c4, %c0_23, %c0_24] : memref<8x2x32xf32, #tpu.memory_space<vmem>>, vector<1x2x32xf32>
    %27 = vector.shape_cast %26 : vector<1x2x32xf32> to vector<2x32xf32>
    %cst_25 = arith.constant dense<0.000000e+00> : vector<2x128xf32>
    %28 = tpu.matmul %27, %0, %cst_25 {dimension_numbers = #tpu.dot_dimension_numbers<[1], [0], [0], [1], [0, 0, 1, 1], [], []>} : vector<2x32xf32>, vector<32x128xf32>, vector<2x128xf32> -> vector<2x128xf32>
    %29 = vector.broadcast %4 : vector<1x128xf32> to vector<2x128xf32>
    %30 = arith.addf %28, %29 : vector<2x128xf32>
    %c5 = arith.constant 5 : index
    %c0_26 = arith.constant 0 : index
    %c0_27 = arith.constant 0 : index
    %31 = vector.load %arg1[%c5, %c0_26, %c0_27] : memref<8x2x32xf32, #tpu.memory_space<vmem>>, vector<1x2x32xf32>
    %32 = vector.shape_cast %31 : vector<1x2x32xf32> to vector<2x32xf32>
    %cst_28 = arith.constant dense<0.000000e+00> : vector<2x128xf32>
    %33 = tpu.matmul %32, %0, %cst_28 {dimension_numbers = #tpu.dot_dimension_numbers<[1], [0], [0], [1], [0, 0, 1, 1], [], []>} : vector<2x32xf32>, vector<32x128xf32>, vector<2x128xf32> -> vector<2x128xf32>
    %34 = vector.broadcast %4 : vector<1x128xf32> to vector<2x128xf32>
    %35 = arith.addf %33, %34 : vector<2x128xf32>
    %c6 = arith.constant 6 : index
    %c0_29 = arith.constant 0 : index
    %c0_30 = arith.constant 0 : index
    %36 = vector.load %arg1[%c6, %c0_29, %c0_30] : memref<8x2x32xf32, #tpu.memory_space<vmem>>, vector<1x2x32xf32>
    %37 = vector.shape_cast %36 : vector<1x2x32xf32> to vector<2x32xf32>
    %cst_31 = arith.constant dense<0.000000e+00> : vector<2x128xf32>
    %38 = tpu.matmul %37, %0, %cst_31 {dimension_numbers = #tpu.dot_dimension_numbers<[1], [0], [0], [1], [0, 0, 1, 1], [], []>} : vector<2x32xf32>, vector<32x128xf32>, vector<2x128xf32> -> vector<2x128xf32>
    %39 = vector.broadcast %4 : vector<1x128xf32> to vector<2x128xf32>
    %40 = arith.addf %38, %39 : vector<2x128xf32>
    %c7 = arith.constant 7 : index
    %c0_32 = arith.constant 0 : index
    %c0_33 = arith.constant 0 : index
    %41 = vector.load %arg1[%c7, %c0_32, %c0_33] : memref<8x2x32xf32, #tpu.memory_space<vmem>>, vector<1x2x32xf32>
    %42 = vector.shape_cast %41 : vector<1x2x32xf32> to vector<2x32xf32>
    %cst_34 = arith.constant dense<0.000000e+00> : vector<2x128xf32>
    %43 = tpu.matmul %42, %0, %cst_34 {dimension_numbers = #tpu.dot_dimension_numbers<[1], [0], [0], [1], [0, 0, 1, 1], [], []>} : vector<2x32xf32>, vector<32x128xf32>, vector<2x128xf32> -> vector<2x128xf32>
    %44 = vector.broadcast %4 : vector<1x128xf32> to vector<2x128xf32>
    %45 = arith.addf %43, %44 : vector<2x128xf32>
    %c0_35 = arith.constant 0 : index
    %c0_36 = arith.constant 0 : index
    %c0_37 = arith.constant 0 : index
    %46 = vector.load %arg2[%c0_35, %c0_36, %c0_37] : memref<2x2x32xf32, #tpu.memory_space<vmem>>, vector<1x2x32xf32>
    %47 = vector.shape_cast %46 : vector<1x2x32xf32> to vector<2x32xf32>
    %c1_38 = arith.constant 1 : index
    %c0_39 = arith.constant 0 : index
    %c0_40 = arith.constant 0 : index
    %48 = vector.load %arg2[%c1_38, %c0_39, %c0_40] : memref<2x2x32xf32, #tpu.memory_space<vmem>>, vector<1x2x32xf32>
    %49 = vector.shape_cast %48 : vector<1x2x32xf32> to vector<2x32xf32>
    %c0_41 = arith.constant 0 : index
    %c0_42 = arith.constant 0 : index
    %c0_43 = arith.constant 0 : index
    %50 = vector.load %arg3[%c0_41, %c0_42, %c0_43] : memref<2x2x32xf32, #tpu.memory_space<vmem>>, vector<1x2x32xf32>
    %51 = vector.shape_cast %50 : vector<1x2x32xf32> to vector<2x32xf32>
    %c1_44 = arith.constant 1 : index
    %c0_45 = arith.constant 0 : index
    %c0_46 = arith.constant 0 : index
    %52 = vector.load %arg3[%c1_44, %c0_45, %c0_46] : memref<2x2x32xf32, #tpu.memory_space<vmem>>, vector<1x2x32xf32>
    %53 = vector.shape_cast %52 : vector<1x2x32xf32> to vector<2x32xf32>
    %cst_47 = arith.constant dense<0.000000e+00> : vector<2x128xf32>
    %54 = tpu.matmul %47, %1, %cst_47 {dimension_numbers = #tpu.dot_dimension_numbers<[1], [0], [0], [1], [0, 0, 1, 1], [], []>} : vector<2x32xf32>, vector<32x128xf32>, vector<2x128xf32> -> vector<2x128xf32>
    %55 = arith.addf %10, %54 : vector<2x128xf32>
    %56 = vector.extract_strided_slice %55 {offsets = [0, 0], sizes = [2, 96], strides = [1, 1]} : vector<2x128xf32> to vector<2x96xf32>
    %57 = arith.negf %56 : vector<2x96xf32>
    %58 = math.exp %57 : vector<2x96xf32>
    %cst_48 = arith.constant 1.000000e+00 : f32
    %59 = vector.broadcast %cst_48 : f32 to vector<2x96xf32>
    %60 = arith.addf %59, %58 : vector<2x96xf32>
    %61 = arith.divf %59, %60 : vector<2x96xf32>
    %62 = vector.extract_strided_slice %55 {offsets = [0, 96], sizes = [2, 32], strides = [1, 1]} : vector<2x128xf32> to vector<2x32xf32>
    %63 = math.tanh %62 : vector<2x32xf32>
    %64 = vector.extract_strided_slice %61 {offsets = [0, 0], sizes = [2, 32], strides = [1, 1]} : vector<2x96xf32> to vector<2x32xf32>
    %65 = vector.extract_strided_slice %61 {offsets = [0, 32], sizes = [2, 32], strides = [1, 1]} : vector<2x96xf32> to vector<2x32xf32>
    %66 = vector.extract_strided_slice %61 {offsets = [0, 64], sizes = [2, 32], strides = [1, 1]} : vector<2x96xf32> to vector<2x32xf32>
    %67 = arith.mulf %65, %51 : vector<2x32xf32>
    %68 = arith.mulf %64, %63 : vector<2x32xf32>
    %69 = arith.addf %67, %68 : vector<2x32xf32>
    %70 = math.tanh %69 : vector<2x32xf32>
    %71 = arith.mulf %66, %70 : vector<2x32xf32>
    %cst_49 = arith.constant dense<0.000000e+00> : vector<2x128xf32>
    %72 = tpu.matmul %71, %2, %cst_49 {dimension_numbers = #tpu.dot_dimension_numbers<[1], [0], [0], [1], [0, 0, 1, 1], [], []>} : vector<2x32xf32>, vector<32x128xf32>, vector<2x128xf32> -> vector<2x128xf32>
    %cst_50 = arith.constant dense<0.000000e+00> : vector<2x128xf32>
    %73 = tpu.matmul %49, %3, %cst_50 {dimension_numbers = #tpu.dot_dimension_numbers<[1], [0], [0], [1], [0, 0, 1, 1], [], []>} : vector<2x32xf32>, vector<32x128xf32>, vector<2x128xf32> -> vector<2x128xf32>
    %74 = arith.addf %72, %73 : vector<2x128xf32>
    %75 = vector.broadcast %5 : vector<1x128xf32> to vector<2x128xf32>
    %76 = arith.addf %74, %75 : vector<2x128xf32>
    %77 = vector.extract_strided_slice %76 {offsets = [0, 0], sizes = [2, 96], strides = [1, 1]} : vector<2x128xf32> to vector<2x96xf32>
    %78 = arith.negf %77 : vector<2x96xf32>
    %79 = math.exp %78 : vector<2x96xf32>
    %cst_51 = arith.constant 1.000000e+00 : f32
    %80 = vector.broadcast %cst_51 : f32 to vector<2x96xf32>
    %81 = arith.addf %80, %79 : vector<2x96xf32>
    %82 = arith.divf %80, %81 : vector<2x96xf32>
    %83 = vector.extract_strided_slice %76 {offsets = [0, 96], sizes = [2, 32], strides = [1, 1]} : vector<2x128xf32> to vector<2x32xf32>
    %84 = math.tanh %83 : vector<2x32xf32>
    %85 = vector.extract_strided_slice %82 {offsets = [0, 0], sizes = [2, 32], strides = [1, 1]} : vector<2x96xf32> to vector<2x32xf32>
    %86 = vector.extract_strided_slice %82 {offsets = [0, 32], sizes = [2, 32], strides = [1, 1]} : vector<2x96xf32> to vector<2x32xf32>
    %87 = vector.extract_strided_slice %82 {offsets = [0, 64], sizes = [2, 32], strides = [1, 1]} : vector<2x96xf32> to vector<2x32xf32>
    %88 = arith.mulf %86, %53 : vector<2x32xf32>
    %89 = arith.mulf %85, %84 : vector<2x32xf32>
    %90 = arith.addf %88, %89 : vector<2x32xf32>
    %91 = math.tanh %90 : vector<2x32xf32>
    %92 = arith.mulf %87, %91 : vector<2x32xf32>
    %cst_52 = arith.constant dense<0.000000e+00> : vector<2x128xf32>
    %93 = tpu.matmul %71, %1, %cst_52 {dimension_numbers = #tpu.dot_dimension_numbers<[1], [0], [0], [1], [0, 0, 1, 1], [], []>} : vector<2x32xf32>, vector<32x128xf32>, vector<2x128xf32> -> vector<2x128xf32>
    %94 = arith.addf %15, %93 : vector<2x128xf32>
    %95 = vector.extract_strided_slice %94 {offsets = [0, 0], sizes = [2, 96], strides = [1, 1]} : vector<2x128xf32> to vector<2x96xf32>
    %96 = arith.negf %95 : vector<2x96xf32>
    %97 = math.exp %96 : vector<2x96xf32>
    %cst_53 = arith.constant 1.000000e+00 : f32
    %98 = vector.broadcast %cst_53 : f32 to vector<2x96xf32>
    %99 = arith.addf %98, %97 : vector<2x96xf32>
    %100 = arith.divf %98, %99 : vector<2x96xf32>
    %101 = vector.extract_strided_slice %94 {offsets = [0, 96], sizes = [2, 32], strides = [1, 1]} : vector<2x128xf32> to vector<2x32xf32>
    %102 = math.tanh %101 : vector<2x32xf32>
    %103 = vector.extract_strided_slice %100 {offsets = [0, 0], sizes = [2, 32], strides = [1, 1]} : vector<2x96xf32> to vector<2x32xf32>
    %104 = vector.extract_strided_slice %100 {offsets = [0, 32], sizes = [2, 32], strides = [1, 1]} : vector<2x96xf32> to vector<2x32xf32>
    %105 = vector.extract_strided_slice %100 {offsets = [0, 64], sizes = [2, 32], strides = [1, 1]} : vector<2x96xf32> to vector<2x32xf32>
    %106 = arith.mulf %104, %69 : vector<2x32xf32>
    %107 = arith.mulf %103, %102 : vector<2x32xf32>
    %108 = arith.addf %106, %107 : vector<2x32xf32>
    %109 = math.tanh %108 : vector<2x32xf32>
    %110 = arith.mulf %105, %109 : vector<2x32xf32>
    %cst_54 = arith.constant dense<0.000000e+00> : vector<2x128xf32>
    %111 = tpu.matmul %110, %2, %cst_54 {dimension_numbers = #tpu.dot_dimension_numbers<[1], [0], [0], [1], [0, 0, 1, 1], [], []>} : vector<2x32xf32>, vector<32x128xf32>, vector<2x128xf32> -> vector<2x128xf32>
    %cst_55 = arith.constant dense<0.000000e+00> : vector<2x128xf32>
    %112 = tpu.matmul %92, %3, %cst_55 {dimension_numbers = #tpu.dot_dimension_numbers<[1], [0], [0], [1], [0, 0, 1, 1], [], []>} : vector<2x32xf32>, vector<32x128xf32>, vector<2x128xf32> -> vector<2x128xf32>
    %113 = arith.addf %111, %112 : vector<2x128xf32>
    %114 = vector.broadcast %5 : vector<1x128xf32> to vector<2x128xf32>
    %115 = arith.addf %113, %114 : vector<2x128xf32>
    %116 = vector.extract_strided_slice %115 {offsets = [0, 0], sizes = [2, 96], strides = [1, 1]} : vector<2x128xf32> to vector<2x96xf32>
    %117 = arith.negf %116 : vector<2x96xf32>
    %118 = math.exp %117 : vector<2x96xf32>
    %cst_56 = arith.constant 1.000000e+00 : f32
    %119 = vector.broadcast %cst_56 : f32 to vector<2x96xf32>
    %120 = arith.addf %119, %118 : vector<2x96xf32>
    %121 = arith.divf %119, %120 : vector<2x96xf32>
    %122 = vector.extract_strided_slice %115 {offsets = [0, 96], sizes = [2, 32], strides = [1, 1]} : vector<2x128xf32> to vector<2x32xf32>
    %123 = math.tanh %122 : vector<2x32xf32>
    %124 = vector.extract_strided_slice %121 {offsets = [0, 0], sizes = [2, 32], strides = [1, 1]} : vector<2x96xf32> to vector<2x32xf32>
    %125 = vector.extract_strided_slice %121 {offsets = [0, 32], sizes = [2, 32], strides = [1, 1]} : vector<2x96xf32> to vector<2x32xf32>
    %126 = vector.extract_strided_slice %121 {offsets = [0, 64], sizes = [2, 32], strides = [1, 1]} : vector<2x96xf32> to vector<2x32xf32>
    %127 = arith.mulf %125, %90 : vector<2x32xf32>
    %128 = arith.mulf %124, %123 : vector<2x32xf32>
    %129 = arith.addf %127, %128 : vector<2x32xf32>
    %130 = math.tanh %129 : vector<2x32xf32>
    %131 = arith.mulf %126, %130 : vector<2x32xf32>
    %cst_57 = arith.constant dense<0.000000e+00> : vector<2x128xf32>
    %132 = tpu.matmul %110, %1, %cst_57 {dimension_numbers = #tpu.dot_dimension_numbers<[1], [0], [0], [1], [0, 0, 1, 1], [], []>} : vector<2x32xf32>, vector<32x128xf32>, vector<2x128xf32> -> vector<2x128xf32>
    %133 = arith.addf %20, %132 : vector<2x128xf32>
    %134 = vector.extract_strided_slice %133 {offsets = [0, 0], sizes = [2, 96], strides = [1, 1]} : vector<2x128xf32> to vector<2x96xf32>
    %135 = arith.negf %134 : vector<2x96xf32>
    %136 = math.exp %135 : vector<2x96xf32>
    %cst_58 = arith.constant 1.000000e+00 : f32
    %137 = vector.broadcast %cst_58 : f32 to vector<2x96xf32>
    %138 = arith.addf %137, %136 : vector<2x96xf32>
    %139 = arith.divf %137, %138 : vector<2x96xf32>
    %140 = vector.extract_strided_slice %133 {offsets = [0, 96], sizes = [2, 32], strides = [1, 1]} : vector<2x128xf32> to vector<2x32xf32>
    %141 = math.tanh %140 : vector<2x32xf32>
    %142 = vector.extract_strided_slice %139 {offsets = [0, 0], sizes = [2, 32], strides = [1, 1]} : vector<2x96xf32> to vector<2x32xf32>
    %143 = vector.extract_strided_slice %139 {offsets = [0, 32], sizes = [2, 32], strides = [1, 1]} : vector<2x96xf32> to vector<2x32xf32>
    %144 = vector.extract_strided_slice %139 {offsets = [0, 64], sizes = [2, 32], strides = [1, 1]} : vector<2x96xf32> to vector<2x32xf32>
    %145 = arith.mulf %143, %108 : vector<2x32xf32>
    %146 = arith.mulf %142, %141 : vector<2x32xf32>
    %147 = arith.addf %145, %146 : vector<2x32xf32>
    %148 = math.tanh %147 : vector<2x32xf32>
    %149 = arith.mulf %144, %148 : vector<2x32xf32>
    %cst_59 = arith.constant dense<0.000000e+00> : vector<2x128xf32>
    %150 = tpu.matmul %149, %2, %cst_59 {dimension_numbers = #tpu.dot_dimension_numbers<[1], [0], [0], [1], [0, 0, 1, 1], [], []>} : vector<2x32xf32>, vector<32x128xf32>, vector<2x128xf32> -> vector<2x128xf32>
    %cst_60 = arith.constant dense<0.000000e+00> : vector<2x128xf32>
    %151 = tpu.matmul %131, %3, %cst_60 {dimension_numbers = #tpu.dot_dimension_numbers<[1], [0], [0], [1], [0, 0, 1, 1], [], []>} : vector<2x32xf32>, vector<32x128xf32>, vector<2x128xf32> -> vector<2x128xf32>
    %152 = arith.addf %150, %151 : vector<2x128xf32>
    %153 = vector.broadcast %5 : vector<1x128xf32> to vector<2x128xf32>
    %154 = arith.addf %152, %153 : vector<2x128xf32>
    %155 = vector.extract_strided_slice %154 {offsets = [0, 0], sizes = [2, 96], strides = [1, 1]} : vector<2x128xf32> to vector<2x96xf32>
    %156 = arith.negf %155 : vector<2x96xf32>
    %157 = math.exp %156 : vector<2x96xf32>
    %cst_61 = arith.constant 1.000000e+00 : f32
    %158 = vector.broadcast %cst_61 : f32 to vector<2x96xf32>
    %159 = arith.addf %158, %157 : vector<2x96xf32>
    %160 = arith.divf %158, %159 : vector<2x96xf32>
    %161 = vector.extract_strided_slice %154 {offsets = [0, 96], sizes = [2, 32], strides = [1, 1]} : vector<2x128xf32> to vector<2x32xf32>
    %162 = math.tanh %161 : vector<2x32xf32>
    %163 = vector.extract_strided_slice %160 {offsets = [0, 0], sizes = [2, 32], strides = [1, 1]} : vector<2x96xf32> to vector<2x32xf32>
    %164 = vector.extract_strided_slice %160 {offsets = [0, 32], sizes = [2, 32], strides = [1, 1]} : vector<2x96xf32> to vector<2x32xf32>
    %165 = vector.extract_strided_slice %160 {offsets = [0, 64], sizes = [2, 32], strides = [1, 1]} : vector<2x96xf32> to vector<2x32xf32>
    %166 = arith.mulf %164, %129 : vector<2x32xf32>
    %167 = arith.mulf %163, %162 : vector<2x32xf32>
    %168 = arith.addf %166, %167 : vector<2x32xf32>
    %169 = math.tanh %168 : vector<2x32xf32>
    %170 = arith.mulf %165, %169 : vector<2x32xf32>
    %cst_62 = arith.constant dense<0.000000e+00> : vector<2x128xf32>
    %171 = tpu.matmul %149, %1, %cst_62 {dimension_numbers = #tpu.dot_dimension_numbers<[1], [0], [0], [1], [0, 0, 1, 1], [], []>} : vector<2x32xf32>, vector<32x128xf32>, vector<2x128xf32> -> vector<2x128xf32>
    %172 = arith.addf %25, %171 : vector<2x128xf32>
    %173 = vector.extract_strided_slice %172 {offsets = [0, 0], sizes = [2, 96], strides = [1, 1]} : vector<2x128xf32> to vector<2x96xf32>
    %174 = arith.negf %173 : vector<2x96xf32>
    %175 = math.exp %174 : vector<2x96xf32>
    %cst_63 = arith.constant 1.000000e+00 : f32
    %176 = vector.broadcast %cst_63 : f32 to vector<2x96xf32>
    %177 = arith.addf %176, %175 : vector<2x96xf32>
    %178 = arith.divf %176, %177 : vector<2x96xf32>
    %179 = vector.extract_strided_slice %172 {offsets = [0, 96], sizes = [2, 32], strides = [1, 1]} : vector<2x128xf32> to vector<2x32xf32>
    %180 = math.tanh %179 : vector<2x32xf32>
    %181 = vector.extract_strided_slice %178 {offsets = [0, 0], sizes = [2, 32], strides = [1, 1]} : vector<2x96xf32> to vector<2x32xf32>
    %182 = vector.extract_strided_slice %178 {offsets = [0, 32], sizes = [2, 32], strides = [1, 1]} : vector<2x96xf32> to vector<2x32xf32>
    %183 = vector.extract_strided_slice %178 {offsets = [0, 64], sizes = [2, 32], strides = [1, 1]} : vector<2x96xf32> to vector<2x32xf32>
    %184 = arith.mulf %182, %147 : vector<2x32xf32>
    %185 = arith.mulf %181, %180 : vector<2x32xf32>
    %186 = arith.addf %184, %185 : vector<2x32xf32>
    %187 = math.tanh %186 : vector<2x32xf32>
    %188 = arith.mulf %183, %187 : vector<2x32xf32>
    %cst_64 = arith.constant dense<0.000000e+00> : vector<2x128xf32>
    %189 = tpu.matmul %188, %2, %cst_64 {dimension_numbers = #tpu.dot_dimension_numbers<[1], [0], [0], [1], [0, 0, 1, 1], [], []>} : vector<2x32xf32>, vector<32x128xf32>, vector<2x128xf32> -> vector<2x128xf32>
    %cst_65 = arith.constant dense<0.000000e+00> : vector<2x128xf32>
    %190 = tpu.matmul %170, %3, %cst_65 {dimension_numbers = #tpu.dot_dimension_numbers<[1], [0], [0], [1], [0, 0, 1, 1], [], []>} : vector<2x32xf32>, vector<32x128xf32>, vector<2x128xf32> -> vector<2x128xf32>
    %191 = arith.addf %189, %190 : vector<2x128xf32>
    %192 = vector.broadcast %5 : vector<1x128xf32> to vector<2x128xf32>
    %193 = arith.addf %191, %192 : vector<2x128xf32>
    %194 = vector.extract_strided_slice %193 {offsets = [0, 0], sizes = [2, 96], strides = [1, 1]} : vector<2x128xf32> to vector<2x96xf32>
    %195 = arith.negf %194 : vector<2x96xf32>
    %196 = math.exp %195 : vector<2x96xf32>
    %cst_66 = arith.constant 1.000000e+00 : f32
    %197 = vector.broadcast %cst_66 : f32 to vector<2x96xf32>
    %198 = arith.addf %197, %196 : vector<2x96xf32>
    %199 = arith.divf %197, %198 : vector<2x96xf32>
    %200 = vector.extract_strided_slice %193 {offsets = [0, 96], sizes = [2, 32], strides = [1, 1]} : vector<2x128xf32> to vector<2x32xf32>
    %201 = math.tanh %200 : vector<2x32xf32>
    %202 = vector.extract_strided_slice %199 {offsets = [0, 0], sizes = [2, 32], strides = [1, 1]} : vector<2x96xf32> to vector<2x32xf32>
    %203 = vector.extract_strided_slice %199 {offsets = [0, 32], sizes = [2, 32], strides = [1, 1]} : vector<2x96xf32> to vector<2x32xf32>
    %204 = vector.extract_strided_slice %199 {offsets = [0, 64], sizes = [2, 32], strides = [1, 1]} : vector<2x96xf32> to vector<2x32xf32>
    %205 = arith.mulf %203, %168 : vector<2x32xf32>
    %206 = arith.mulf %202, %201 : vector<2x32xf32>
    %207 = arith.addf %205, %206 : vector<2x32xf32>
    %208 = math.tanh %207 : vector<2x32xf32>
    %209 = arith.mulf %204, %208 : vector<2x32xf32>
    %cst_67 = arith.constant dense<0.000000e+00> : vector<2x128xf32>
    %210 = tpu.matmul %188, %1, %cst_67 {dimension_numbers = #tpu.dot_dimension_numbers<[1], [0], [0], [1], [0, 0, 1, 1], [], []>} : vector<2x32xf32>, vector<32x128xf32>, vector<2x128xf32> -> vector<2x128xf32>
    %211 = arith.addf %30, %210 : vector<2x128xf32>
    %212 = vector.extract_strided_slice %211 {offsets = [0, 0], sizes = [2, 96], strides = [1, 1]} : vector<2x128xf32> to vector<2x96xf32>
    %213 = arith.negf %212 : vector<2x96xf32>
    %214 = math.exp %213 : vector<2x96xf32>
    %cst_68 = arith.constant 1.000000e+00 : f32
    %215 = vector.broadcast %cst_68 : f32 to vector<2x96xf32>
    %216 = arith.addf %215, %214 : vector<2x96xf32>
    %217 = arith.divf %215, %216 : vector<2x96xf32>
    %218 = vector.extract_strided_slice %211 {offsets = [0, 96], sizes = [2, 32], strides = [1, 1]} : vector<2x128xf32> to vector<2x32xf32>
    %219 = math.tanh %218 : vector<2x32xf32>
    %220 = vector.extract_strided_slice %217 {offsets = [0, 0], sizes = [2, 32], strides = [1, 1]} : vector<2x96xf32> to vector<2x32xf32>
    %221 = vector.extract_strided_slice %217 {offsets = [0, 32], sizes = [2, 32], strides = [1, 1]} : vector<2x96xf32> to vector<2x32xf32>
    %222 = vector.extract_strided_slice %217 {offsets = [0, 64], sizes = [2, 32], strides = [1, 1]} : vector<2x96xf32> to vector<2x32xf32>
    %223 = arith.mulf %221, %186 : vector<2x32xf32>
    %224 = arith.mulf %220, %219 : vector<2x32xf32>
    %225 = arith.addf %223, %224 : vector<2x32xf32>
    %226 = math.tanh %225 : vector<2x32xf32>
    %227 = arith.mulf %222, %226 : vector<2x32xf32>
    %cst_69 = arith.constant dense<0.000000e+00> : vector<2x128xf32>
    %228 = tpu.matmul %227, %2, %cst_69 {dimension_numbers = #tpu.dot_dimension_numbers<[1], [0], [0], [1], [0, 0, 1, 1], [], []>} : vector<2x32xf32>, vector<32x128xf32>, vector<2x128xf32> -> vector<2x128xf32>
    %cst_70 = arith.constant dense<0.000000e+00> : vector<2x128xf32>
    %229 = tpu.matmul %209, %3, %cst_70 {dimension_numbers = #tpu.dot_dimension_numbers<[1], [0], [0], [1], [0, 0, 1, 1], [], []>} : vector<2x32xf32>, vector<32x128xf32>, vector<2x128xf32> -> vector<2x128xf32>
    %230 = arith.addf %228, %229 : vector<2x128xf32>
    %231 = vector.broadcast %5 : vector<1x128xf32> to vector<2x128xf32>
    %232 = arith.addf %230, %231 : vector<2x128xf32>
    %233 = vector.extract_strided_slice %232 {offsets = [0, 0], sizes = [2, 96], strides = [1, 1]} : vector<2x128xf32> to vector<2x96xf32>
    %234 = arith.negf %233 : vector<2x96xf32>
    %235 = math.exp %234 : vector<2x96xf32>
    %cst_71 = arith.constant 1.000000e+00 : f32
    %236 = vector.broadcast %cst_71 : f32 to vector<2x96xf32>
    %237 = arith.addf %236, %235 : vector<2x96xf32>
    %238 = arith.divf %236, %237 : vector<2x96xf32>
    %239 = vector.extract_strided_slice %232 {offsets = [0, 96], sizes = [2, 32], strides = [1, 1]} : vector<2x128xf32> to vector<2x32xf32>
    %240 = math.tanh %239 : vector<2x32xf32>
    %241 = vector.extract_strided_slice %238 {offsets = [0, 0], sizes = [2, 32], strides = [1, 1]} : vector<2x96xf32> to vector<2x32xf32>
    %242 = vector.extract_strided_slice %238 {offsets = [0, 32], sizes = [2, 32], strides = [1, 1]} : vector<2x96xf32> to vector<2x32xf32>
    %243 = vector.extract_strided_slice %238 {offsets = [0, 64], sizes = [2, 32], strides = [1, 1]} : vector<2x96xf32> to vector<2x32xf32>
    %244 = arith.mulf %242, %207 : vector<2x32xf32>
    %245 = arith.mulf %241, %240 : vector<2x32xf32>
    %246 = arith.addf %244, %245 : vector<2x32xf32>
    %247 = math.tanh %246 : vector<2x32xf32>
    %248 = arith.mulf %243, %247 : vector<2x32xf32>
    %cst_72 = arith.constant dense<0.000000e+00> : vector<2x128xf32>
    %249 = tpu.matmul %227, %1, %cst_72 {dimension_numbers = #tpu.dot_dimension_numbers<[1], [0], [0], [1], [0, 0, 1, 1], [], []>} : vector<2x32xf32>, vector<32x128xf32>, vector<2x128xf32> -> vector<2x128xf32>
    %250 = arith.addf %35, %249 : vector<2x128xf32>
    %251 = vector.extract_strided_slice %250 {offsets = [0, 0], sizes = [2, 96], strides = [1, 1]} : vector<2x128xf32> to vector<2x96xf32>
    %252 = arith.negf %251 : vector<2x96xf32>
    %253 = math.exp %252 : vector<2x96xf32>
    %cst_73 = arith.constant 1.000000e+00 : f32
    %254 = vector.broadcast %cst_73 : f32 to vector<2x96xf32>
    %255 = arith.addf %254, %253 : vector<2x96xf32>
    %256 = arith.divf %254, %255 : vector<2x96xf32>
    %257 = vector.extract_strided_slice %250 {offsets = [0, 96], sizes = [2, 32], strides = [1, 1]} : vector<2x128xf32> to vector<2x32xf32>
    %258 = math.tanh %257 : vector<2x32xf32>
    %259 = vector.extract_strided_slice %256 {offsets = [0, 0], sizes = [2, 32], strides = [1, 1]} : vector<2x96xf32> to vector<2x32xf32>
    %260 = vector.extract_strided_slice %256 {offsets = [0, 32], sizes = [2, 32], strides = [1, 1]} : vector<2x96xf32> to vector<2x32xf32>
    %261 = vector.extract_strided_slice %256 {offsets = [0, 64], sizes = [2, 32], strides = [1, 1]} : vector<2x96xf32> to vector<2x32xf32>
    %262 = arith.mulf %260, %225 : vector<2x32xf32>
    %263 = arith.mulf %259, %258 : vector<2x32xf32>
    %264 = arith.addf %262, %263 : vector<2x32xf32>
    %265 = math.tanh %264 : vector<2x32xf32>
    %266 = arith.mulf %261, %265 : vector<2x32xf32>
    %cst_74 = arith.constant dense<0.000000e+00> : vector<2x128xf32>
    %267 = tpu.matmul %266, %2, %cst_74 {dimension_numbers = #tpu.dot_dimension_numbers<[1], [0], [0], [1], [0, 0, 1, 1], [], []>} : vector<2x32xf32>, vector<32x128xf32>, vector<2x128xf32> -> vector<2x128xf32>
    %cst_75 = arith.constant dense<0.000000e+00> : vector<2x128xf32>
    %268 = tpu.matmul %248, %3, %cst_75 {dimension_numbers = #tpu.dot_dimension_numbers<[1], [0], [0], [1], [0, 0, 1, 1], [], []>} : vector<2x32xf32>, vector<32x128xf32>, vector<2x128xf32> -> vector<2x128xf32>
    %269 = arith.addf %267, %268 : vector<2x128xf32>
    %270 = vector.broadcast %5 : vector<1x128xf32> to vector<2x128xf32>
    %271 = arith.addf %269, %270 : vector<2x128xf32>
    %272 = vector.extract_strided_slice %271 {offsets = [0, 0], sizes = [2, 96], strides = [1, 1]} : vector<2x128xf32> to vector<2x96xf32>
    %273 = arith.negf %272 : vector<2x96xf32>
    %274 = math.exp %273 : vector<2x96xf32>
    %cst_76 = arith.constant 1.000000e+00 : f32
    %275 = vector.broadcast %cst_76 : f32 to vector<2x96xf32>
    %276 = arith.addf %275, %274 : vector<2x96xf32>
    %277 = arith.divf %275, %276 : vector<2x96xf32>
    %278 = vector.extract_strided_slice %271 {offsets = [0, 96], sizes = [2, 32], strides = [1, 1]} : vector<2x128xf32> to vector<2x32xf32>
    %279 = math.tanh %278 : vector<2x32xf32>
    %280 = vector.extract_strided_slice %277 {offsets = [0, 0], sizes = [2, 32], strides = [1, 1]} : vector<2x96xf32> to vector<2x32xf32>
    %281 = vector.extract_strided_slice %277 {offsets = [0, 32], sizes = [2, 32], strides = [1, 1]} : vector<2x96xf32> to vector<2x32xf32>
    %282 = vector.extract_strided_slice %277 {offsets = [0, 64], sizes = [2, 32], strides = [1, 1]} : vector<2x96xf32> to vector<2x32xf32>
    %283 = arith.mulf %281, %246 : vector<2x32xf32>
    %284 = arith.mulf %280, %279 : vector<2x32xf32>
    %285 = arith.addf %283, %284 : vector<2x32xf32>
    %286 = math.tanh %285 : vector<2x32xf32>
    %287 = arith.mulf %282, %286 : vector<2x32xf32>
    %cst_77 = arith.constant dense<0.000000e+00> : vector<2x128xf32>
    %288 = tpu.matmul %266, %1, %cst_77 {dimension_numbers = #tpu.dot_dimension_numbers<[1], [0], [0], [1], [0, 0, 1, 1], [], []>} : vector<2x32xf32>, vector<32x128xf32>, vector<2x128xf32> -> vector<2x128xf32>
    %289 = arith.addf %40, %288 : vector<2x128xf32>
    %290 = vector.extract_strided_slice %289 {offsets = [0, 0], sizes = [2, 96], strides = [1, 1]} : vector<2x128xf32> to vector<2x96xf32>
    %291 = arith.negf %290 : vector<2x96xf32>
    %292 = math.exp %291 : vector<2x96xf32>
    %cst_78 = arith.constant 1.000000e+00 : f32
    %293 = vector.broadcast %cst_78 : f32 to vector<2x96xf32>
    %294 = arith.addf %293, %292 : vector<2x96xf32>
    %295 = arith.divf %293, %294 : vector<2x96xf32>
    %296 = vector.extract_strided_slice %289 {offsets = [0, 96], sizes = [2, 32], strides = [1, 1]} : vector<2x128xf32> to vector<2x32xf32>
    %297 = math.tanh %296 : vector<2x32xf32>
    %298 = vector.extract_strided_slice %295 {offsets = [0, 0], sizes = [2, 32], strides = [1, 1]} : vector<2x96xf32> to vector<2x32xf32>
    %299 = vector.extract_strided_slice %295 {offsets = [0, 32], sizes = [2, 32], strides = [1, 1]} : vector<2x96xf32> to vector<2x32xf32>
    %300 = vector.extract_strided_slice %295 {offsets = [0, 64], sizes = [2, 32], strides = [1, 1]} : vector<2x96xf32> to vector<2x32xf32>
    %301 = arith.mulf %299, %264 : vector<2x32xf32>
    %302 = arith.mulf %298, %297 : vector<2x32xf32>
    %303 = arith.addf %301, %302 : vector<2x32xf32>
    %304 = math.tanh %303 : vector<2x32xf32>
    %305 = arith.mulf %300, %304 : vector<2x32xf32>
    %cst_79 = arith.constant dense<0.000000e+00> : vector<2x128xf32>
    %306 = tpu.matmul %305, %2, %cst_79 {dimension_numbers = #tpu.dot_dimension_numbers<[1], [0], [0], [1], [0, 0, 1, 1], [], []>} : vector<2x32xf32>, vector<32x128xf32>, vector<2x128xf32> -> vector<2x128xf32>
    %cst_80 = arith.constant dense<0.000000e+00> : vector<2x128xf32>
    %307 = tpu.matmul %287, %3, %cst_80 {dimension_numbers = #tpu.dot_dimension_numbers<[1], [0], [0], [1], [0, 0, 1, 1], [], []>} : vector<2x32xf32>, vector<32x128xf32>, vector<2x128xf32> -> vector<2x128xf32>
    %308 = arith.addf %306, %307 : vector<2x128xf32>
    %309 = vector.broadcast %5 : vector<1x128xf32> to vector<2x128xf32>
    %310 = arith.addf %308, %309 : vector<2x128xf32>
    %311 = vector.extract_strided_slice %310 {offsets = [0, 0], sizes = [2, 96], strides = [1, 1]} : vector<2x128xf32> to vector<2x96xf32>
    %312 = arith.negf %311 : vector<2x96xf32>
    %313 = math.exp %312 : vector<2x96xf32>
    %cst_81 = arith.constant 1.000000e+00 : f32
    %314 = vector.broadcast %cst_81 : f32 to vector<2x96xf32>
    %315 = arith.addf %314, %313 : vector<2x96xf32>
    %316 = arith.divf %314, %315 : vector<2x96xf32>
    %317 = vector.extract_strided_slice %310 {offsets = [0, 96], sizes = [2, 32], strides = [1, 1]} : vector<2x128xf32> to vector<2x32xf32>
    %318 = math.tanh %317 : vector<2x32xf32>
    %319 = vector.extract_strided_slice %316 {offsets = [0, 0], sizes = [2, 32], strides = [1, 1]} : vector<2x96xf32> to vector<2x32xf32>
    %320 = vector.extract_strided_slice %316 {offsets = [0, 32], sizes = [2, 32], strides = [1, 1]} : vector<2x96xf32> to vector<2x32xf32>
    %321 = vector.extract_strided_slice %316 {offsets = [0, 64], sizes = [2, 32], strides = [1, 1]} : vector<2x96xf32> to vector<2x32xf32>
    %322 = arith.mulf %320, %285 : vector<2x32xf32>
    %323 = arith.mulf %319, %318 : vector<2x32xf32>
    %324 = arith.addf %322, %323 : vector<2x32xf32>
    %325 = math.tanh %324 : vector<2x32xf32>
    %326 = arith.mulf %321, %325 : vector<2x32xf32>
    %cst_82 = arith.constant dense<0.000000e+00> : vector<2x128xf32>
    %327 = tpu.matmul %305, %1, %cst_82 {dimension_numbers = #tpu.dot_dimension_numbers<[1], [0], [0], [1], [0, 0, 1, 1], [], []>} : vector<2x32xf32>, vector<32x128xf32>, vector<2x128xf32> -> vector<2x128xf32>
    %328 = arith.addf %45, %327 : vector<2x128xf32>
    %329 = vector.extract_strided_slice %328 {offsets = [0, 0], sizes = [2, 96], strides = [1, 1]} : vector<2x128xf32> to vector<2x96xf32>
    %330 = arith.negf %329 : vector<2x96xf32>
    %331 = math.exp %330 : vector<2x96xf32>
    %cst_83 = arith.constant 1.000000e+00 : f32
    %332 = vector.broadcast %cst_83 : f32 to vector<2x96xf32>
    %333 = arith.addf %332, %331 : vector<2x96xf32>
    %334 = arith.divf %332, %333 : vector<2x96xf32>
    %335 = vector.extract_strided_slice %328 {offsets = [0, 96], sizes = [2, 32], strides = [1, 1]} : vector<2x128xf32> to vector<2x32xf32>
    %336 = math.tanh %335 : vector<2x32xf32>
    %337 = vector.extract_strided_slice %334 {offsets = [0, 0], sizes = [2, 32], strides = [1, 1]} : vector<2x96xf32> to vector<2x32xf32>
    %338 = vector.extract_strided_slice %334 {offsets = [0, 32], sizes = [2, 32], strides = [1, 1]} : vector<2x96xf32> to vector<2x32xf32>
    %339 = vector.extract_strided_slice %334 {offsets = [0, 64], sizes = [2, 32], strides = [1, 1]} : vector<2x96xf32> to vector<2x32xf32>
    %340 = arith.mulf %338, %303 : vector<2x32xf32>
    %341 = arith.mulf %337, %336 : vector<2x32xf32>
    %342 = arith.addf %340, %341 : vector<2x32xf32>
    %343 = math.tanh %342 : vector<2x32xf32>
    %344 = arith.mulf %339, %343 : vector<2x32xf32>
    %cst_84 = arith.constant dense<0.000000e+00> : vector<2x128xf32>
    %345 = tpu.matmul %344, %2, %cst_84 {dimension_numbers = #tpu.dot_dimension_numbers<[1], [0], [0], [1], [0, 0, 1, 1], [], []>} : vector<2x32xf32>, vector<32x128xf32>, vector<2x128xf32> -> vector<2x128xf32>
    %cst_85 = arith.constant dense<0.000000e+00> : vector<2x128xf32>
    %346 = tpu.matmul %326, %3, %cst_85 {dimension_numbers = #tpu.dot_dimension_numbers<[1], [0], [0], [1], [0, 0, 1, 1], [], []>} : vector<2x32xf32>, vector<32x128xf32>, vector<2x128xf32> -> vector<2x128xf32>
    %347 = arith.addf %345, %346 : vector<2x128xf32>
    %348 = vector.broadcast %5 : vector<1x128xf32> to vector<2x128xf32>
    %349 = arith.addf %347, %348 : vector<2x128xf32>
    %350 = vector.extract_strided_slice %349 {offsets = [0, 0], sizes = [2, 96], strides = [1, 1]} : vector<2x128xf32> to vector<2x96xf32>
    %351 = arith.negf %350 : vector<2x96xf32>
    %352 = math.exp %351 : vector<2x96xf32>
    %cst_86 = arith.constant 1.000000e+00 : f32
    %353 = vector.broadcast %cst_86 : f32 to vector<2x96xf32>
    %354 = arith.addf %353, %352 : vector<2x96xf32>
    %355 = arith.divf %353, %354 : vector<2x96xf32>
    %356 = vector.extract_strided_slice %349 {offsets = [0, 96], sizes = [2, 32], strides = [1, 1]} : vector<2x128xf32> to vector<2x32xf32>
    %357 = math.tanh %356 : vector<2x32xf32>
    %358 = vector.extract_strided_slice %355 {offsets = [0, 0], sizes = [2, 32], strides = [1, 1]} : vector<2x96xf32> to vector<2x32xf32>
    %359 = vector.extract_strided_slice %355 {offsets = [0, 32], sizes = [2, 32], strides = [1, 1]} : vector<2x96xf32> to vector<2x32xf32>
    %360 = vector.extract_strided_slice %355 {offsets = [0, 64], sizes = [2, 32], strides = [1, 1]} : vector<2x96xf32> to vector<2x32xf32>
    %361 = arith.mulf %359, %324 : vector<2x32xf32>
    %362 = arith.mulf %358, %357 : vector<2x32xf32>
    %363 = arith.addf %361, %362 : vector<2x32xf32>
    %364 = math.tanh %363 : vector<2x32xf32>
    %365 = arith.mulf %360, %364 : vector<2x32xf32>
    %366 = vector.shape_cast %344 : vector<2x32xf32> to vector<1x2x32xf32>
    %367 = vector.shape_cast %365 : vector<2x32xf32> to vector<1x2x32xf32>
    %368 = tpu.concatenate %366, %367 in 0 : vector<1x2x32xf32>, vector<1x2x32xf32> -> vector<2x2x32xf32>
    %c0_87 = arith.constant 0 : index
    %c0_88 = arith.constant 0 : index
    %c0_89 = arith.constant 0 : index
    %369 = vector.load %arg17[%c0_87, %c0_88, %c0_89] : memref<2x2x32xf32, #tpu.memory_space<vmem>>, vector<2x2x32xf32>
    tpu.vector_store %arg17[%c0_87, %c0_88, %c0_89], %368 {strides = array<i32>} : memref<2x2x32xf32, #tpu.memory_space<vmem>>, vector<2x2x32xf32>,
    %370 = vector.shape_cast %342 : vector<2x32xf32> to vector<1x2x32xf32>
    %371 = vector.shape_cast %363 : vector<2x32xf32> to vector<1x2x32xf32>
    %372 = tpu.concatenate %370, %371 in 0 : vector<1x2x32xf32>, vector<1x2x32xf32> -> vector<2x2x32xf32>
    %c0_90 = arith.constant 0 : index
    %c0_91 = arith.constant 0 : index
    %c0_92 = arith.constant 0 : index
    %373 = vector.load %arg18[%c0_90, %c0_91, %c0_92] : memref<2x2x32xf32, #tpu.memory_space<vmem>>, vector<2x2x32xf32>
    tpu.vector_store %arg18[%c0_90, %c0_91, %c0_92], %372 {strides = array<i32>} : memref<2x2x32xf32, #tpu.memory_space<vmem>>, vector<2x2x32xf32>,
    %c0_93 = arith.constant 0 : index
    %c0_94 = arith.constant 0 : index
    %374 = vector.load %arg12[%c0_93, %c0_94] : memref<32x32xf32, #tpu.memory_space<vmem>>, vector<32x32xf32>
    %c0_95 = arith.constant 0 : index
    %c0_96 = arith.constant 0 : index
    %375 = vector.load %arg13[%c0_95, %c0_96] : memref<32x32xf32, #tpu.memory_space<vmem>>, vector<32x32xf32>
    %c0_97 = arith.constant 0 : index
    %c0_98 = arith.constant 0 : index
    %376 = vector.load %arg14[%c0_97, %c0_98] : memref<32x128xf32, #tpu.memory_space<vmem>>, vector<32x128xf32>
    %c0_99 = arith.constant 0 : index
    %c0_100 = arith.constant 0 : index
    %377 = vector.load %arg15[%c0_99, %c0_100] : memref<1x128xf32, #tpu.memory_space<vmem>>, vector<1x128xf32>
    %378 = vector.extract_strided_slice %92 {offsets = [0, 0], sizes = [1, 32], strides = [1, 1]} : vector<2x32xf32> to vector<1x32xf32>
    %379 = vector.extract_strided_slice %131 {offsets = [0, 0], sizes = [1, 32], strides = [1, 1]} : vector<2x32xf32> to vector<1x32xf32>
    %380 = vector.extract_strided_slice %170 {offsets = [0, 0], sizes = [1, 32], strides = [1, 1]} : vector<2x32xf32> to vector<1x32xf32>
    %381 = vector.extract_strided_slice %209 {offsets = [0, 0], sizes = [1, 32], strides = [1, 1]} : vector<2x32xf32> to vector<1x32xf32>
    %382 = vector.extract_strided_slice %248 {offsets = [0, 0], sizes = [1, 32], strides = [1, 1]} : vector<2x32xf32> to vector<1x32xf32>
    %383 = vector.extract_strided_slice %287 {offsets = [0, 0], sizes = [1, 32], strides = [1, 1]} : vector<2x32xf32> to vector<1x32xf32>
    %384 = vector.extract_strided_slice %326 {offsets = [0, 0], sizes = [1, 32], strides = [1, 1]} : vector<2x32xf32> to vector<1x32xf32>
    %385 = vector.extract_strided_slice %365 {offsets = [0, 0], sizes = [1, 32], strides = [1, 1]} : vector<2x32xf32> to vector<1x32xf32>
    %386 = tpu.concatenate %378, %379, %380, %381, %382, %383, %384, %385 in 0 : vector<1x32xf32>, vector<1x32xf32>, vector<1x32xf32>, vector<1x32xf32>, vector<1x32xf32>, vector<1x32xf32>, vector<1x32xf32>, vector<1x32xf32> -> vector<8x32xf32>
    %c0_101 = arith.constant 0 : index
    %c0_102 = arith.constant 0 : index
    %c0_103 = arith.constant 0 : index
    %387 = vector.load %arg4[%c0_101, %c0_102, %c0_103] : memref<2x6x32xf32, #tpu.memory_space<vmem>>, vector<1x6x32xf32>
    %388 = vector.shape_cast %387 : vector<1x6x32xf32> to vector<6x32xf32>
    %cst_104 = arith.constant dense<0.000000e+00> : vector<8x6xf32>
    %389 = tpu.matmul %386, %388, %cst_104 {dimension_numbers = #tpu.dot_dimension_numbers<[1], [1], [0], [0], [0, 0, 1, 0], [], []>} : vector<8x32xf32>, vector<6x32xf32>, vector<8x6xf32> -> vector<8x6xf32>
    %c0_105 = arith.constant 0 : index
    %c0_106 = arith.constant 0 : index
    %c0_107 = arith.constant 0 : index
    %390 = vector.load %arg5[%c0_105, %c0_106, %c0_107] : memref<2x1x6xf32, #tpu.memory_space<vmem>>, vector<1x1x6xf32>
    %391 = vector.shape_cast %390 : vector<1x1x6xf32> to vector<1x6xf32>
    %392 = vector.broadcast %391 : vector<1x6xf32> to vector<8x6xf32>
    %393 = arith.addf %389, %392 : vector<8x6xf32>
    %cst_108 = arith.constant dense<0xFF800000> : vector<8xf32>
    %394 = vector.multi_reduction <maximumf>, %393, %cst_108 [1] : vector<8x6xf32> to vector<8xf32>
    %395 = vector.shape_cast %394 : vector<8xf32> to vector<8x1xf32>
    %396 = vector.broadcast %395 : vector<8x1xf32> to vector<8x6xf32>
    %397 = arith.subf %393, %396 : vector<8x6xf32>
    %398 = math.exp %397 : vector<8x6xf32>
    %cst_109 = arith.constant dense<0.000000e+00> : vector<8xf32>
    %399 = vector.multi_reduction <add>, %398, %cst_109 [1] : vector<8x6xf32> to vector<8xf32>
    %400 = vector.shape_cast %399 : vector<8xf32> to vector<8x1xf32>
    %401 = vector.broadcast %400 : vector<8x1xf32> to vector<8x6xf32>
    %402 = arith.divf %398, %401 : vector<8x6xf32>
    %cst_110 = arith.constant dense<0.000000e+00> : vector<8x32xf32>
    %403 = tpu.matmul %402, %388, %cst_110 {dimension_numbers = #tpu.dot_dimension_numbers<[1], [0], [0], [1], [0, 0, 1, 1], [], []>} : vector<8x6xf32>, vector<6x32xf32>, vector<8x32xf32> -> vector<8x32xf32>
    %cst_111 = arith.constant dense<0.000000e+00> : vector<8x32xf32>
    %404 = tpu.matmul %386, %374, %cst_111 {dimension_numbers = #tpu.dot_dimension_numbers<[1], [0], [0], [1], [0, 0, 1, 1], [], []>} : vector<8x32xf32>, vector<32x32xf32>, vector<8x32xf32> -> vector<8x32xf32>
    %cst_112 = arith.constant dense<0.000000e+00> : vector<8x32xf32>
    %405 = tpu.matmul %403, %375, %cst_112 {dimension_numbers = #tpu.dot_dimension_numbers<[1], [0], [0], [1], [0, 0, 1, 1], [], []>} : vector<8x32xf32>, vector<32x32xf32>, vector<8x32xf32> -> vector<8x32xf32>
    %406 = arith.addf %404, %405 : vector<8x32xf32>
    %407 = math.tanh %406 : vector<8x32xf32>
    %cst_113 = arith.constant dense<0.000000e+00> : vector<8x128xf32>
    %408 = tpu.matmul %407, %376, %cst_113 {dimension_numbers = #tpu.dot_dimension_numbers<[1], [0], [0], [1], [0, 0, 1, 1], [], []>} : vector<8x32xf32>, vector<32x128xf32>, vector<8x128xf32> -> vector<8x128xf32>
    %409 = vector.broadcast %377 : vector<1x128xf32> to vector<8x128xf32>
    %410 = arith.addf %408, %409 : vector<8x128xf32>
    %cst_114 = arith.constant 1.000000e+00 : f32
    %411 = vector.broadcast %cst_114 : f32 to vector<8x128xf32>
    %412 = arith.mulf %410, %411 : vector<8x128xf32>
    %cst_115 = arith.constant dense<0xFF800000> : vector<8xf32>
    %413 = vector.multi_reduction <maximumf>, %412, %cst_115 [1] : vector<8x128xf32> to vector<8xf32>
    %414 = vector.shape_cast %413 : vector<8xf32> to vector<8x1xf32>
    %415 = vector.broadcast %414 : vector<8x1xf32> to vector<8x128xf32>
    %416 = arith.subf %412, %415 : vector<8x128xf32>
    %417 = math.exp %416 : vector<8x128xf32>
    %cst_116 = arith.constant dense<0.000000e+00> : vector<8xf32>
    %418 = vector.multi_reduction <add>, %417, %cst_116 [1] : vector<8x128xf32> to vector<8xf32>
    %419 = vector.shape_cast %418 : vector<8xf32> to vector<8x1xf32>
    %420 = math.log %419 : vector<8x1xf32>
    %421 = arith.addf %420, %414 : vector<8x1xf32>
    %422 = vector.broadcast %421 : vector<8x1xf32> to vector<8x128xf32>
    %423 = arith.subf %412, %422 : vector<8x128xf32>
    %c0_117 = arith.constant 0 : index
    %c0_118 = arith.constant 0 : index
    %c0_119 = arith.constant 0 : index
    %424 = vector.load %arg16[%c0_117, %c0_118, %c0_119] : memref<2x8x128xf32, #tpu.memory_space<vmem>>, vector<1x8x128xf32>
    %425 = vector.shape_cast %424 : vector<1x8x128xf32> to vector<8x128xf32>
    %426 = vector.shape_cast %423 : vector<8x128xf32> to vector<1x8x128xf32>
    tpu.vector_store %arg16[%c0_117, %c0_118, %c0_119], %426 {strides = array<i32>} : memref<2x8x128xf32, #tpu.memory_space<vmem>>, vector<1x8x128xf32>,
    %427 = vector.extract_strided_slice %92 {offsets = [1, 0], sizes = [1, 32], strides = [1, 1]} : vector<2x32xf32> to vector<1x32xf32>
    %428 = vector.extract_strided_slice %131 {offsets = [1, 0], sizes = [1, 32], strides = [1, 1]} : vector<2x32xf32> to vector<1x32xf32>
    %429 = vector.extract_strided_slice %170 {offsets = [1, 0], sizes = [1, 32], strides = [1, 1]} : vector<2x32xf32> to vector<1x32xf32>
    %430 = vector.extract_strided_slice %209 {offsets = [1, 0], sizes = [1, 32], strides = [1, 1]} : vector<2x32xf32> to vector<1x32xf32>
    %431 = vector.extract_strided_slice %248 {offsets = [1, 0], sizes = [1, 32], strides = [1, 1]} : vector<2x32xf32> to vector<1x32xf32>
    %432 = vector.extract_strided_slice %287 {offsets = [1, 0], sizes = [1, 32], strides = [1, 1]} : vector<2x32xf32> to vector<1x32xf32>
    %433 = vector.extract_strided_slice %326 {offsets = [1, 0], sizes = [1, 32], strides = [1, 1]} : vector<2x32xf32> to vector<1x32xf32>
    %434 = vector.extract_strided_slice %365 {offsets = [1, 0], sizes = [1, 32], strides = [1, 1]} : vector<2x32xf32> to vector<1x32xf32>
    %435 = tpu.concatenate %427, %428, %429, %430, %431, %432, %433, %434 in 0 : vector<1x32xf32>, vector<1x32xf32>, vector<1x32xf32>, vector<1x32xf32>, vector<1x32xf32>, vector<1x32xf32>, vector<1x32xf32>, vector<1x32xf32> -> vector<8x32xf32>
    %c1_120 = arith.constant 1 : index
    %c0_121 = arith.constant 0 : index
    %c0_122 = arith.constant 0 : index
    %436 = vector.load %arg4[%c1_120, %c0_121, %c0_122] : memref<2x6x32xf32, #tpu.memory_space<vmem>>, vector<1x6x32xf32>
    %437 = vector.shape_cast %436 : vector<1x6x32xf32> to vector<6x32xf32>
    %cst_123 = arith.constant dense<0.000000e+00> : vector<8x6xf32>
    %438 = tpu.matmul %435, %437, %cst_123 {dimension_numbers = #tpu.dot_dimension_numbers<[1], [1], [0], [0], [0, 0, 1, 0], [], []>} : vector<8x32xf32>, vector<6x32xf32>, vector<8x6xf32> -> vector<8x6xf32>
    %c1_124 = arith.constant 1 : index
    %c0_125 = arith.constant 0 : index
    %c0_126 = arith.constant 0 : index
    %439 = vector.load %arg5[%c1_124, %c0_125, %c0_126] : memref<2x1x6xf32, #tpu.memory_space<vmem>>, vector<1x1x6xf32>
    %440 = vector.shape_cast %439 : vector<1x1x6xf32> to vector<1x6xf32>
    %441 = vector.broadcast %440 : vector<1x6xf32> to vector<8x6xf32>
    %442 = arith.addf %438, %441 : vector<8x6xf32>
    %cst_127 = arith.constant dense<0xFF800000> : vector<8xf32>
    %443 = vector.multi_reduction <maximumf>, %442, %cst_127 [1] : vector<8x6xf32> to vector<8xf32>
    %444 = vector.shape_cast %443 : vector<8xf32> to vector<8x1xf32>
    %445 = vector.broadcast %444 : vector<8x1xf32> to vector<8x6xf32>
    %446 = arith.subf %442, %445 : vector<8x6xf32>
    %447 = math.exp %446 : vector<8x6xf32>
    %cst_128 = arith.constant dense<0.000000e+00> : vector<8xf32>
    %448 = vector.multi_reduction <add>, %447, %cst_128 [1] : vector<8x6xf32> to vector<8xf32>
    %449 = vector.shape_cast %448 : vector<8xf32> to vector<8x1xf32>
    %450 = vector.broadcast %449 : vector<8x1xf32> to vector<8x6xf32>
    %451 = arith.divf %447, %450 : vector<8x6xf32>
    %cst_129 = arith.constant dense<0.000000e+00> : vector<8x32xf32>
    %452 = tpu.matmul %451, %437, %cst_129 {dimension_numbers = #tpu.dot_dimension_numbers<[1], [0], [0], [1], [0, 0, 1, 1], [], []>} : vector<8x6xf32>, vector<6x32xf32>, vector<8x32xf32> -> vector<8x32xf32>
    %cst_130 = arith.constant dense<0.000000e+00> : vector<8x32xf32>
    %453 = tpu.matmul %435, %374, %cst_130 {dimension_numbers = #tpu.dot_dimension_numbers<[1], [0], [0], [1], [0, 0, 1, 1], [], []>} : vector<8x32xf32>, vector<32x32xf32>, vector<8x32xf32> -> vector<8x32xf32>
    %cst_131 = arith.constant dense<0.000000e+00> : vector<8x32xf32>
    %454 = tpu.matmul %452, %375, %cst_131 {dimension_numbers = #tpu.dot_dimension_numbers<[1], [0], [0], [1], [0, 0, 1, 1], [], []>} : vector<8x32xf32>, vector<32x32xf32>, vector<8x32xf32> -> vector<8x32xf32>
    %455 = arith.addf %453, %454 : vector<8x32xf32>
    %456 = math.tanh %455 : vector<8x32xf32>
    %cst_132 = arith.constant dense<0.000000e+00> : vector<8x128xf32>
    %457 = tpu.matmul %456, %376, %cst_132 {dimension_numbers = #tpu.dot_dimension_numbers<[1], [0], [0], [1], [0, 0, 1, 1], [], []>} : vector<8x32xf32>, vector<32x128xf32>, vector<8x128xf32> -> vector<8x128xf32>
    %458 = vector.broadcast %377 : vector<1x128xf32> to vector<8x128xf32>
    %459 = arith.addf %457, %458 : vector<8x128xf32>
    %cst_133 = arith.constant 1.000000e+00 : f32
    %460 = vector.broadcast %cst_133 : f32 to vector<8x128xf32>
    %461 = arith.mulf %459, %460 : vector<8x128xf32>
    %cst_134 = arith.constant dense<0xFF800000> : vector<8xf32>
    %462 = vector.multi_reduction <maximumf>, %461, %cst_134 [1] : vector<8x128xf32> to vector<8xf32>
    %463 = vector.shape_cast %462 : vector<8xf32> to vector<8x1xf32>
    %464 = vector.broadcast %463 : vector<8x1xf32> to vector<8x128xf32>
    %465 = arith.subf %461, %464 : vector<8x128xf32>
    %466 = math.exp %465 : vector<8x128xf32>
    %cst_135 = arith.constant dense<0.000000e+00> : vector<8xf32>
    %467 = vector.multi_reduction <add>, %466, %cst_135 [1] : vector<8x128xf32> to vector<8xf32>
    %468 = vector.shape_cast %467 : vector<8xf32> to vector<8x1xf32>
    %469 = math.log %468 : vector<8x1xf32>
    %470 = arith.addf %469, %463 : vector<8x1xf32>
    %471 = vector.broadcast %470 : vector<8x1xf32> to vector<8x128xf32>
    %472 = arith.subf %461, %471 : vector<8x128xf32>
    %c1_136 = arith.constant 1 : index
    %c0_137 = arith.constant 0 : index
    %c0_138 = arith.constant 0 : index
    %473 = vector.load %arg16[%c1_136, %c0_137, %c0_138] : memref<2x8x128xf32, #tpu.memory_space<vmem>>, vector<1x8x128xf32>
    %474 = vector.shape_cast %473 : vector<1x8x128xf32> to vector<8x128xf32>
    %475 = vector.shape_cast %472 : vector<8x128xf32> to vector<1x8x128xf32>
    tpu.vector_store %arg16[%c1_136, %c0_137, %c0_138], %475 {strides = array<i32>} : memref<2x8x128xf32, #tpu.memory_space<vmem>>, vector<1x8x128xf32>,
    return
  }
  func.func @transform_0(%arg0: i32) -> (i32, i32, i32) {
    %c0_i32 = arith.constant 0 : i32
    %c0_i32_0 = arith.constant 0 : i32
    %c0_i32_1 = arith.constant 0 : i32
    return %c0_i32, %arg0, %c0_i32_0 : i32, i32, i32
  }
  func.func @transform_1(%arg0: i32) -> (i32, i32, i32) {
    %c0_i32 = arith.constant 0 : i32
    %c0_i32_0 = arith.constant 0 : i32
    %c0_i32_1 = arith.constant 0 : i32
    return %c0_i32, %arg0, %c0_i32_0 : i32, i32, i32
  }
  func.func @transform_2(%arg0: i32) -> (i32, i32, i32) {
    %c0_i32 = arith.constant 0 : i32
    %c0_i32_0 = arith.constant 0 : i32
    %c0_i32_1 = arith.constant 0 : i32
    return %c0_i32, %arg0, %c0_i32_0 : i32, i32, i32
  }
  func.func @transform_3(%arg0: i32) -> (i32, i32, i32) {
    %c0_i32 = arith.constant 0 : i32
    %c0_i32_0 = arith.constant 0 : i32
    %c0_i32_1 = arith.constant 0 : i32
    return %arg0, %c0_i32, %c0_i32_0 : i32, i32, i32
  }
  func.func @transform_4(%arg0: i32) -> (i32, i32, i32) {
    %c0_i32 = arith.constant 0 : i32
    %c0_i32_0 = arith.constant 0 : i32
    %c0_i32_1 = arith.constant 0 : i32
    return %arg0, %c0_i32, %c0_i32_0 : i32, i32, i32
  }
  func.func @transform_5(%arg0: i32) -> (i32, i32) {
    %c0_i32 = arith.constant 0 : i32
    %c0_i32_0 = arith.constant 0 : i32
    %c0_i32_1 = arith.constant 0 : i32
    return %c0_i32, %c0_i32_0 : i32, i32
  }
  func.func @transform_6(%arg0: i32) -> (i32, i32) {
    %c0_i32 = arith.constant 0 : i32
    %c0_i32_0 = arith.constant 0 : i32
    %c0_i32_1 = arith.constant 0 : i32
    return %c0_i32, %c0_i32_0 : i32, i32
  }
  func.func @transform_7(%arg0: i32) -> (i32, i32) {
    %c0_i32 = arith.constant 0 : i32
    %c0_i32_0 = arith.constant 0 : i32
    %c0_i32_1 = arith.constant 0 : i32
    return %c0_i32, %c0_i32_0 : i32, i32
  }
  func.func @transform_8(%arg0: i32) -> (i32, i32) {
    %c0_i32 = arith.constant 0 : i32
    %c0_i32_0 = arith.constant 0 : i32
    %c0_i32_1 = arith.constant 0 : i32
    return %c0_i32, %c0_i32_0 : i32, i32
  }
  func.func @transform_9(%arg0: i32) -> (i32, i32) {
    %c0_i32 = arith.constant 0 : i32
    %c0_i32_0 = arith.constant 0 : i32
    %c0_i32_1 = arith.constant 0 : i32
    return %c0_i32, %c0_i32_0 : i32, i32
  }
  func.func @transform_10(%arg0: i32) -> (i32, i32) {
    %c0_i32 = arith.constant 0 : i32
    %c0_i32_0 = arith.constant 0 : i32
    %c0_i32_1 = arith.constant 0 : i32
    return %c0_i32, %c0_i32_0 : i32, i32
  }
  func.func @transform_11(%arg0: i32) -> (i32, i32) {
    %c0_i32 = arith.constant 0 : i32
    %c0_i32_0 = arith.constant 0 : i32
    %c0_i32_1 = arith.constant 0 : i32
    return %c0_i32, %c0_i32_0 : i32, i32
  }
  func.func @transform_12(%arg0: i32) -> (i32, i32) {
    %c0_i32 = arith.constant 0 : i32
    %c0_i32_0 = arith.constant 0 : i32
    %c0_i32_1 = arith.constant 0 : i32
    return %c0_i32, %c0_i32_0 : i32, i32
  }
  func.func @transform_13(%arg0: i32) -> (i32, i32) {
    %c0_i32 = arith.constant 0 : i32
    %c0_i32_0 = arith.constant 0 : i32
    %c0_i32_1 = arith.constant 0 : i32
    return %c0_i32, %c0_i32_0 : i32, i32
  }
  func.func @transform_14(%arg0: i32) -> (i32, i32) {
    %c0_i32 = arith.constant 0 : i32
    %c0_i32_0 = arith.constant 0 : i32
    %c0_i32_1 = arith.constant 0 : i32
    return %c0_i32, %c0_i32_0 : i32, i32
  }
  func.func @transform_15(%arg0: i32) -> (i32, i32, i32) {
    %c0_i32 = arith.constant 0 : i32
    %c0_i32_0 = arith.constant 0 : i32
    %c0_i32_1 = arith.constant 0 : i32
    return %arg0, %c0_i32, %c0_i32_0 : i32, i32, i32
  }
  func.func @transform_16(%arg0: i32) -> (i32, i32, i32) {
    %c0_i32 = arith.constant 0 : i32
    %c0_i32_0 = arith.constant 0 : i32
    %c0_i32_1 = arith.constant 0 : i32
    return %c0_i32, %arg0, %c0_i32_0 : i32, i32, i32
  }
  func.func @transform_17(%arg0: i32) -> (i32, i32, i32) {
    %c0_i32 = arith.constant 0 : i32
    %c0_i32_0 = arith.constant 0 : i32
    %c0_i32_1 = arith.constant 0 : i32
    return %c0_i32, %arg0, %c0_i32_0 : i32, i32, i32
  }
}

</mosaic_0001>

<llo_original>
// kernel: run.1
$region0: #{run.1}
  #allocation0 [shape = 'u32[]', space=smem, size = 0x4, offset = 0x4, fixed_abs, tag = 'smem constant byte address 0x4 - core index']
  #allocation1 [shape = 'u32[144,128]{1,0:T(1,128)}', space=vmem, size = 0x12000, scoped, tag = 'internal scratch']
  %s0 = inlined_call_operand.vmem [shape: f32[8,2,32], index: 0, kind: input, shape index: {}]
  %s1 = inlined_call_operand.vmem [shape: f32[2,2,32], index: 1, kind: input, shape index: {}]
  %s2 = inlined_call_operand.vmem [shape: f32[2,2,32], index: 2, kind: input, shape index: {}]
  %s3 = inlined_call_operand.vmem [shape: f32[2,6,32], index: 3, kind: input, shape index: {}]
  %s4 = inlined_call_operand.vmem [shape: f32[2,1,6], index: 4, kind: input, shape index: {}]
  %s5 = inlined_call_operand.vmem [shape: f32[32,128], index: 5, kind: input, shape index: {}]
  %s6 = inlined_call_operand.vmem [shape: f32[32,128], index: 6, kind: input, shape index: {}]
  %s7 = inlined_call_operand.vmem [shape: f32[1,128], index: 7, kind: input, shape index: {}]
  %s8 = inlined_call_operand.vmem [shape: f32[32,128], index: 8, kind: input, shape index: {}]
  %s9 = inlined_call_operand.vmem [shape: f32[32,128], index: 9, kind: input, shape index: {}]
  %s10 = inlined_call_operand.vmem [shape: f32[1,128], index: 10, kind: input, shape index: {}]
  %s11 = inlined_call_operand.vmem [shape: f32[32,32], index: 11, kind: input, shape index: {}]
  %s12 = inlined_call_operand.vmem [shape: f32[32,32], index: 12, kind: input, shape index: {}]
  %s13 = inlined_call_operand.vmem [shape: f32[32,128], index: 13, kind: input, shape index: {}]
  %s14 = inlined_call_operand.vmem [shape: f32[1,128], index: 14, kind: input, shape index: {}]
  %s15 = inlined_call_operand.vmem [shape: f32[2,8,128], index: 15, kind: output, shape index: {0}]
  %s16 = inlined_call_operand.hbm [shape: f32[2,2,32], index: 16, kind: output, shape index: {1}]
  %s17 = inlined_call_operand.hbm [shape: f32[2,2,32], index: 17, kind: output, shape index: {2}]
  %18 = xla_tuple %s15, %s16, %s17
  %s19 = sld [smem:[#allocation0]]
  $region86: #{run.1} parent=0
    _
  %s21 = ssub.s32 1, %s19
  %s22 = scalar_select 0, %s21, %s19
  $region1: #{run.1} parent=0
    #allocation2 [shape = 'u8[2048]{0}', space=vmem, size = 0x800, scoped, tag = 'output window, operand 1, single buffered']
    #allocation3 [shape = 's32[1]{0}', space=sflag, size = 0x4, scoped, tag = 'scoped memory for run.1']
    #allocation4 [shape = 'u8[2048]{0}', space=vmem, size = 0x800, scoped, tag = 'output window, operand 2, single buffered']
    #allocation5 [shape = 's32[1]{0}', space=sflag, size = 0x4, scoped, tag = 'scoped memory for run.1']
    %23 = vsyncpa [#allocation3], 0
    %24 = vsyncpa [#allocation5], 0
    // Predicated region
    $region2: #{run.1} parent=1 // pred_check
      _
    $region3: #{run.1} parent=1 // pred_check_branch
      %26 = sbr.rel (0) target = $region5
    $region4: #{run.1} parent=1 // pred_region
      _
    $region5: #{run.1} parent=1 // pred_fallthru
      _
    // Predicated region
    $region6: #{run.1} parent=1 // pred_check
      _
    $region7: #{run.1} parent=1 // pred_check_branch
      %28 = sbr.rel (0) target = $region9
    $region8: #{run.1} parent=1 // pred_region
      _
    $region9: #{run.1} parent=1 // pred_fallthru
      _
    // Predicated region
    $region10: #{run.1} parent=1 // pred_check
      _
    $region11: #{run.1} parent=1 // pred_check_branch
      %30 = sbr.rel (0) target = $region13
    $region12: #{run.1} parent=1 // pred_region
      _
    $region13: #{run.1} parent=1 // pred_fallthru
      _
    // Predicated region
    $region14: #{run.1} parent=1 // pred_check
      _
    $region15: #{run.1} parent=1 // pred_check_branch
      %32 = sbr.rel (0) target = $region17
    $region16: #{run.1} parent=1 // pred_region
      _
    $region17: #{run.1} parent=1 // pred_fallthru
      _
    // Predicated region
    $region18: #{run.1} parent=1 // pred_check
      _
    $region19: #{run.1} parent=1 // pred_check_branch
      %34 = sbr.rel (0) target = $region21
    $region20: #{run.1} parent=1 // pred_region
      _
    $region21: #{run.1} parent=1 // pred_fallthru
      _
    // Predicated region
    $region22: #{run.1} parent=1 // pred_check
      _
    $region23: #{run.1} parent=1 // pred_check_branch
      %36 = sbr.rel (0) target = $region25
    $region24: #{run.1} parent=1 // pred_region
      _
    $region25: #{run.1} parent=1 // pred_fallthru
      _
    // Predicated region
    $region26: #{run.1} parent=1 // pred_check
      _
    $region27: #{run.1} parent=1 // pred_check_branch
      %38 = sbr.rel (0) target = $region29
    $region28: #{run.1} parent=1 // pred_region
      _
    $region29: #{run.1} parent=1 // pred_fallthru
      _
    // Predicated region
    $region30: #{run.1} parent=1 // pred_check
      _
    $region31: #{run.1} parent=1 // pred_check_branch
      %40 = sbr.rel (0) target = $region33
    $region32: #{run.1} parent=1 // pred_region
      _
    $region33: #{run.1} parent=1 // pred_fallthru
      _
    // Predicated region
    $region34: #{run.1} parent=1 // pred_check
      _
    $region35: #{run.1} parent=1 // pred_check_branch
      %42 = sbr.rel (0) target = $region37
    $region36: #{run.1} parent=1 // pred_region
      _
    $region37: #{run.1} parent=1 // pred_fallthru
      _
    // Predicated region
    $region38: #{run.1} parent=1 // pred_check
      _
    $region39: #{run.1} parent=1 // pred_check_branch
      %44 = sbr.rel (0) target = $region41
    $region40: #{run.1} parent=1 // pred_region
      _
    $region41: #{run.1} parent=1 // pred_fallthru
      _
    // Predicated region
    $region42: #{run.1} parent=1 // pred_check
      _
    $region43: #{run.1} parent=1 // pred_check_branch
      %46 = sbr.rel (0) target = $region45
    $region44: #{run.1} parent=1 // pred_region
      _
    $region45: #{run.1} parent=1 // pred_fallthru
      _
    // Predicated region
    $region46: #{run.1} parent=1 // pred_check
      _
    $region47: #{run.1} parent=1 // pred_check_branch
      %48 = sbr.rel (0) target = $region49
    $region48: #{run.1} parent=1 // pred_region
      _
    $region49: #{run.1} parent=1 // pred_fallthru
      _
    // Predicated region
    $region50: #{run.1} parent=1 // pred_check
      _
    $region51: #{run.1} parent=1 // pred_check_branch
      %50 = sbr.rel (0) target = $region53
    $region52: #{run.1} parent=1 // pred_region
      _
    $region53: #{run.1} parent=1 // pred_fallthru
      _
    // Predicated region
    $region54: #{run.1} parent=1 // pred_check
      _
    $region55: #{run.1} parent=1 // pred_check_branch
      %52 = sbr.rel (0) target = $region57
    $region56: #{run.1} parent=1 // pred_region
      _
    $region57: #{run.1} parent=1 // pred_fallthru
      _
    // Predicated region
    $region58: #{run.1} parent=1 // pred_check
      _
    $region59: #{run.1} parent=1 // pred_check_branch
      %54 = sbr.rel (0) target = $region61
    $region60: #{run.1} parent=1 // pred_region
      _
    $region61: #{run.1} parent=1 // pred_fallthru
      _
    %v55 = vld [vmem:[%s5] sm:$0xff]
    %v56 = vld [vmem:[%s5 + $0x8] sm:$0xff]
    %v57 = vld [vmem:[%s5 + $0x10] sm:$0xff]
    %v58 = vld [vmem:[%s5 + $0x18] sm:$0xff]
    %v59 = vld [vmem:[%s6] sm:$0xff]
    %v60 = vld [vmem:[%s6 + $0x8] sm:$0xff]
    %v61 = vld [vmem:[%s6 + $0x10] sm:$0xff]
    %v62 = vld [vmem:[%s6 + $0x18] sm:$0xff]
    %v63 = vld [vmem:[%s8] sm:$0xff]
    %v64 = vld [vmem:[%s8 + $0x8] sm:$0xff]
    %v65 = vld [vmem:[%s8 + $0x10] sm:$0xff]
    %v66 = vld [vmem:[%s8 + $0x18] sm:$0xff]
    %v67 = vld [vmem:[%s9] sm:$0xff]
    %v68 = vld [vmem:[%s9 + $0x8] sm:$0xff]
    %v69 = vld [vmem:[%s9 + $0x10] sm:$0xff]
    %v70 = vld [vmem:[%s9 + $0x18] sm:$0xff]
    %v71 = vld [vmem:[%s7] sm:$0x1]
    %v72 = vld [vmem:[%s10] sm:$0x1]
    %v73 = vld [vmem:[%s0] sm:$0x3]
    %v75 = vlaneseq
    %v76 = vshrl.u32 %v75, 7
    %v77 = vsub.s32 0, %v76
    %v78 = vrot.slane %v71, %v77
    %vm80 = vcmask 261120
    %v82 = vsel %vm80, %v73, 0
    %84 = vmatprep.subr.mxu0 0.0
    %85 = vmatpush1.msra.mxu0 %v55
    %86 = vmatprep.subr.mxu0 0.0
    %87 = vmatpush1.msra.mxu0 %v56
    %88 = vmatprep.subr.mxu0 0.0
    %89 = vmatpush1.msra.mxu0 %v57
    %90 = vmatprep.subr.mxu0 0.0
    %91 = vmatpush1.msra.mxu0 %v58
    %92 = vmatprep.subr.mxu0 0.0
    %93 = vmatpush1.msra.mxu0 0.0
    %94 = vmatprep.subr.mxu0 0.0
    %95 = vmatpush1.msra.mxu0 0.0
    %96 = vmatprep.subr.mxu0 0.0
    %97 = vmatpush1.msra.mxu0 0.0
    %98 = vmatprep.subr.mxu0 0.0
    %99 = vmatpush1.msra.mxu0 0.0
    %100 = vmatprep.subr.mxu0 0.0
    %101 = vmatpush1.msra.mxu0 0.0
    %102 = vmatprep.subr.mxu0 0.0
    %103 = vmatpush1.msra.mxu0 0.0
    %104 = vmatprep.subr.mxu0 0.0
    %105 = vmatpush1.msra.mxu0 0.0
    %106 = vmatprep.subr.mxu0 0.0
    %107 = vmatpush1.msra.mxu0 0.0
    %108 = vmatprep.subr.mxu0 0.0
    %109 = vmatpush1.msra.mxu0 0.0
    %110 = vmatprep.subr.mxu0 0.0
    %111 = vmatpush1.msra.mxu0 0.0
    %112 = vmatprep.subr.mxu0 0.0
    %113 = vmatpush1.msra.mxu0 0.0
    %114 = vmatprep.subr.mxu0 0.0
    %115 = vmatpush1.msra.mxu0 0.0
    %116 = vmatprep.subr.mxu0 0.0
    %117 = vmatpush1.msra.mxu0 0.0
    %118 = vmatprep.subr.mxu0 0.0
    %119 = vmatpush1.msra.mxu0 0.0
    %120 = vmatprep.subr.mxu0 0.0
    %121 = vmatpush1.msra.mxu0 0.0
    %122 = vmatprep.subr.mxu0 0.0
    %123 = vmatpush1.msra.mxu0 0.0
    %124 = vmatprep.subr.mxu0 0.0
    %125 = vmatpush1.msra.mxu0 0.0
    %126 = vmatprep.subr.mxu0 0.0
    %127 = vmatpush1.msra.mxu0 0.0
    %128 = vmatprep.subr.mxu0 0.0
    %129 = vmatpush1.msra.mxu0 0.0
    %130 = vmatprep.subr.mxu0 0.0
    %131 = vmatpush1.msra.mxu0 0.0
    %132 = vmatprep.subr.mxu0 0.0
    %133 = vmatpush1.msra.mxu0 0.0
    %134 = vmatprep.subr.mxu0 0.0
    %135 = vmatpush1.msra.mxu0 0.0
    %136 = vmatprep.subr.mxu0 0.0
    %137 = vmatpush1.msra.mxu0 0.0
    %138 = vmatprep.subr.mxu0 0.0
    %139 = vmatpush1.msra.mxu0 0.0
    %140 = vmatprep.subr.mxu0 0.0
    %141 = vmatpush1.msra.mxu0 0.0
    %142 = vmatprep.subr.mxu0 0.0
    %143 = vmatpush1.msra.mxu0 0.0
    %144 = vmatprep.subr.mxu0 0.0
    %145 = vmatpush1.msra.mxu0 0.0
    %146 = vmatprep.subr.mxu0 0.0
    %147 = vmatpush1.msra.mxu0 0.0
    %148 = vmatprep.mubr.f32.mxu0 0.0
    %149 = vmatmul.mubr.f32.gmra.mrb[0].mxu0 %v82
    %v150 = vpop.f32.mrb[0].mxu0
    %v151 = vadd.f32 %v78, %v150
    %v152 = vpop.f32.mrb[0].mxu0
    %153 = vdwg.mxu0
    %s154 = scalar_lea.vmem %s0, 2
    %v155 = vld [vmem:[%s154] sm:$0x3]
    %v157 = vsel %vm80, %v155, 0
    %159 = vmatprep.subr.mxu0 0.0
    %160 = vmatpush1.msra.mxu0 %v55
    %161 = vmatprep.subr.mxu0 0.0
    %162 = vmatpush1.msra.mxu0 %v56
    %163 = vmatprep.subr.mxu0 0.0
    %164 = vmatpush1.msra.mxu0 %v57
    %165 = vmatprep.subr.mxu0 0.0
    %166 = vmatpush1.msra.mxu0 %v58
    %167 = vmatprep.subr.mxu0 0.0
    %168 = vmatpush1.msra.mxu0 0.0
    %169 = vmatprep.subr.mxu0 0.0
    %170 = vmatpush1.msra.mxu0 0.0
    %171 = vmatprep.subr.mxu0 0.0
    %172 = vmatpush1.msra.mxu0 0.0
    %173 = vmatprep.subr.mxu0 0.0
    %174 = vmatpush1.msra.mxu0 0.0
    %175 = vmatprep.subr.mxu0 0.0
    %176 = vmatpush1.msra.mxu0 0.0
    %177 = vmatprep.subr.mxu0 0.0
    %178 = vmatpush1.msra.mxu0 0.0
    %179 = vmatprep.subr.mxu0 0.0
    %180 = vmatpush1.msra.mxu0 0.0
    %181 = vmatprep.subr.mxu0 0.0
    %182 = vmatpush1.msra.mxu0 0.0
    %183 = vmatprep.subr.mxu0 0.0
    %184 = vmatpush1.msra.mxu0 0.0
    %185 = vmatprep.subr.mxu0 0.0
    %186 = vmatpush1.msra.mxu0 0.0
    %187 = vmatprep.subr.mxu0 0.0
    %188 = vmatpush1.msra.mxu0 0.0
    %189 = vmatprep.subr.mxu0 0.0
    %190 = vmatpush1.msra.mxu0 0.0
    %191 = vmatprep.subr.mxu0 0.0
    %192 = vmatpush1.msra.mxu0 0.0
    %193 = vmatprep.subr.mxu0 0.0
    %194 = vmatpush1.msra.mxu0 0.0
    %195 = vmatprep.subr.mxu0 0.0
    %196 = vmatpush1.msra.mxu0 0.0
    %197 = vmatprep.subr.mxu0 0.0
    %198 = vmatpush1.msra.mxu0 0.0
    %199 = vmatprep.subr.mxu0 0.0
    %200 = vmatpush1.msra.mxu0 0.0
    %201 = vmatprep.subr.mxu0 0.0
    %202 = vmatpush1.msra.mxu0 0.0
    %203 = vmatprep.subr.mxu0 0.0
    %204 = vmatpush1.msra.mxu0 0.0
    %205 = vmatprep.subr.mxu0 0.0
    %206 = vmatpush1.msra.mxu0 0.0
    %207 = vmatprep.subr.mxu0 0.0
    %208 = vmatpush1.msra.mxu0 0.0
    %209 = vmatprep.subr.mxu0 0.0
    %210 = vmatpush1.msra.mxu0 0.0
    %211 = vmatprep.subr.mxu0 0.0
    %212 = vmatpush1.msra.mxu0 0.0
    %213 = vmatprep.subr.mxu0 0.0
    %214 = vmatpush1.msra.mxu0 0.0
    %215 = vmatprep.subr.mxu0 0.0
    %216 = vmatpush1.msra.mxu0 0.0
    %217 = vmatprep.subr.mxu0 0.0
    %218 = vmatpush1.msra.mxu0 0.0
    %219 = vmatprep.subr.mxu0 0.0
    %220 = vmatpush1.msra.mxu0 0.0
    %221 = vmatprep.subr.mxu0 0.0
    %222 = vmatpush1.msra.mxu0 0.0
    %223 = vmatprep.mubr.f32.mxu0 0.0
    %224 = vmatmul.mubr.f32.gmra.mrb[0].mxu0 %v157
    %v225 = vpop.f32.mrb[0].mxu0
    %v226 = vadd.f32 %v78, %v225
    %v227 = vpop.f32.mrb[0].mxu0
    %228 = vdwg.mxu0
    %s229 = scalar_lea.vmem %s0, 4
    %v230 = vld [vmem:[%s229] sm:$0x3]
    %v232 = vsel %vm80, %v230, 0
    %234 = vmatprep.subr.mxu0 0.0
    %235 = vmatpush1.msra.mxu0 %v55
    %236 = vmatprep.subr.mxu0 0.0
    %237 = vmatpush1.msra.mxu0 %v56
    %238 = vmatprep.subr.mxu0 0.0
    %239 = vmatpush1.msra.mxu0 %v57
    %240 = vmatprep.subr.mxu0 0.0
    %241 = vmatpush1.msra.mxu0 %v58
    %242 = vmatprep.subr.mxu0 0.0
    %243 = vmatpush1.msra.mxu0 0.0
    %244 = vmatprep.subr.mxu0 0.0
    %245 = vmatpush1.msra.mxu0 0.0
    %246 = vmatprep.subr.mxu0 0.0
    %247 = vmatpush1.msra.mxu0 0.0
    %248 = vmatprep.subr.mxu0 0.0
    %249 = vmatpush1.msra.mxu0 0.0
    %250 = vmatprep.subr.mxu0 0.0
    %251 = vmatpush1.msra.mxu0 0.0
    %252 = vmatprep.subr.mxu0 0.0
    %253 = vmatpush1.msra.mxu0 0.0
    %254 = vmatprep.subr.mxu0 0.0
    %255 = vmatpush1.msra.mxu0 0.0
    %256 = vmatprep.subr.mxu0 0.0
    %257 = vmatpush1.msra.mxu0 0.0
    %258 = vmatprep.subr.mxu0 0.0
    %259 = vmatpush1.msra.mxu0 0.0
    %260 = vmatprep.subr.mxu0 0.0
    %261 = vmatpush1.msra.mxu0 0.0
    %262 = vmatprep.subr.mxu0 0.0
    %263 = vmatpush1.msra.mxu0 0.0
    %264 = vmatprep.subr.mxu0 0.0
    %265 = vmatpush1.msra.mxu0 0.0
    %266 = vmatprep.subr.mxu0 0.0
    %267 = vmatpush1.msra.mxu0 0.0
    %268 = vmatprep.subr.mxu0 0.0
    %269 = vmatpush1.msra.mxu0 0.0
    %270 = vmatprep.subr.mxu0 0.0
    %271 = vmatpush1.msra.mxu0 0.0
    %272 = vmatprep.subr.mxu0 0.0
    %273 = vmatpush1.msra.mxu0 0.0
    %274 = vmatprep.subr.mxu0 0.0
    %275 = vmatpush1.msra.mxu0 0.0
    %276 = vmatprep.subr.mxu0 0.0
    %277 = vmatpush1.msra.mxu0 0.0
    %278 = vmatprep.subr.mxu0 0.0
    %279 = vmatpush1.msra.mxu0 0.0
    %280 = vmatprep.subr.mxu0 0.0
    %281 = vmatpush1.msra.mxu0 0.0
    %282 = vmatprep.subr.mxu0 0.0
    %283 = vmatpush1.msra.mxu0 0.0
    %284 = vmatprep.subr.mxu0 0.0
    %285 = vmatpush1.msra.mxu0 0.0
    %286 = vmatprep.subr.mxu0 0.0
    %287 = vmatpush1.msra.mxu0 0.0
    %288 = vmatprep.subr.mxu0 0.0
    %289 = vmatpush1.msra.mxu0 0.0
    %290 = vmatprep.subr.mxu0 0.0
    %291 = vmatpush1.msra.mxu0 0.0
    %292 = vmatprep.subr.mxu0 0.0
    %293 = vmatpush1.msra.mxu0 0.0
    %294 = vmatprep.subr.mxu0 0.0
    %295 = vmatpush1.msra.mxu0 0.0
    %296 = vmatprep.subr.mxu0 0.0
    %297 = vmatpush1.msra.mxu0 0.0
    %298 = vmatprep.mubr.f32.mxu0 0.0
    %299 = vmatmul.mubr.f32.gmra.mrb[0].mxu0 %v232
    %v300 = vpop.f32.mrb[0].mxu0
    %v301 = vadd.f32 %v78, %v300
    %v302 = vpop.f32.mrb[0].mxu0
    %303 = vdwg.mxu0
    %s304 = scalar_lea.vmem %s0, 6
    %v305 = vld [vmem:[%s304] sm:$0x3]
    %v307 = vsel %vm80, %v305, 0
    %309 = vmatprep.subr.mxu0 0.0
    %310 = vmatpush1.msra.mxu0 %v55
    %311 = vmatprep.subr.mxu0 0.0
    %312 = vmatpush1.msra.mxu0 %v56
    %313 = vmatprep.subr.mxu0 0.0
    %314 = vmatpush1.msra.mxu0 %v57
    %315 = vmatprep.subr.mxu0 0.0
    %316 = vmatpush1.msra.mxu0 %v58
    %317 = vmatprep.subr.mxu0 0.0
    %318 = vmatpush1.msra.mxu0 0.0
    %319 = vmatprep.subr.mxu0 0.0
    %320 = vmatpush1.msra.mxu0 0.0
    %321 = vmatprep.subr.mxu0 0.0
    %322 = vmatpush1.msra.mxu0 0.0
    %323 = vmatprep.subr.mxu0 0.0
    %324 = vmatpush1.msra.mxu0 0.0
    %325 = vmatprep.subr.mxu0 0.0
    %326 = vmatpush1.msra.mxu0 0.0
    %327 = vmatprep.subr.mxu0 0.0
    %328 = vmatpush1.msra.mxu0 0.0
    %329 = vmatprep.subr.mxu0 0.0
    %330 = vmatpush1.msra.mxu0 0.0
    %331 = vmatprep.subr.mxu0 0.0
    %332 = vmatpush1.msra.mxu0 0.0
    %333 = vmatprep.subr.mxu0 0.0
    %334 = vmatpush1.msra.mxu0 0.0
    %335 = vmatprep.subr.mxu0 0.0
    %336 = vmatpush1.msra.mxu0 0.0
    %337 = vmatprep.subr.mxu0 0.0
    %338 = vmatpush1.msra.mxu0 0.0
    %339 = vmatprep.subr.mxu0 0.0
    %340 = vmatpush1.msra.mxu0 0.0
    %341 = vmatprep.subr.mxu0 0.0
    %342 = vmatpush1.msra.mxu0 0.0
    %343 = vmatprep.subr.mxu0 0.0
    %344 = vmatpush1.msra.mxu0 0.0
    %345 = vmatprep.subr.mxu0 0.0
    %346 = vmatpush1.msra.mxu0 0.0
    %347 = vmatprep.subr.mxu0 0.0
    %348 = vmatpush1.msra.mxu0 0.0
    %349 = vmatprep.subr.mxu0 0.0
    %350 = vmatpush1.msra.mxu0 0.0
    %351 = vmatprep.subr.mxu0 0.0
    %352 = vmatpush1.msra.mxu0 0.0
    %353 = vmatprep.subr.mxu0 0.0
    %354 = vmatpush1.msra.mxu0 0.0
    %355 = vmatprep.subr.mxu0 0.0
    %356 = vmatpush1.msra.mxu0 0.0
    %357 = vmatprep.subr.mxu0 0.0
    %358 = vmatpush1.msra.mxu0 0.0
    %359 = vmatprep.subr.mxu0 0.0
    %360 = vmatpush1.msra.mxu0 0.0
    %361 = vmatprep.subr.mxu0 0.0
    %362 = vmatpush1.msra.mxu0 0.0
    %363 = vmatprep.subr.mxu0 0.0
    %364 = vmatpush1.msra.mxu0 0.0
    %365 = vmatprep.subr.mxu0 0.0
    %366 = vmatpush1.msra.mxu0 0.0
    %367 = vmatprep.subr.mxu0 0.0
    %368 = vmatpush1.msra.mxu0 0.0
    %369 = vmatprep.subr.mxu0 0.0
    %370 = vmatpush1.msra.mxu0 0.0
    %371 = vmatprep.subr.mxu0 0.0
    %372 = vmatpush1.msra.mxu0 0.0
    %373 = vmatprep.mubr.f32.mxu0 0.0
    %374 = vmatmul.mubr.f32.gmra.mrb[0].mxu0 %v307
    %v375 = vpop.f32.mrb[0].mxu0
    %v376 = vadd.f32 %v78, %v375
    %v377 = vpop.f32.mrb[0].mxu0
    %378 = vdwg.mxu0
    %s379 = scalar_lea.vmem %s0, 8
    %v380 = vld [vmem:[%s379] sm:$0x3]
    %v382 = vsel %vm80, %v380, 0
    %384 = vmatprep.subr.mxu0 0.0
    %385 = vmatpush1.msra.mxu0 %v55
    %386 = vmatprep.subr.mxu0 0.0
    %387 = vmatpush1.msra.mxu0 %v56
    %388 = vmatprep.subr.mxu0 0.0
    %389 = vmatpush1.msra.mxu0 %v57
    %390 = vmatprep.subr.mxu0 0.0
    %391 = vmatpush1.msra.mxu0 %v58
    %392 = vmatprep.subr.mxu0 0.0
    %393 = vmatpush1.msra.mxu0 0.0
    %394 = vmatprep.subr.mxu0 0.0
    %395 = vmatpush1.msra.mxu0 0.0
    %396 = vmatprep.subr.mxu0 0.0
    %397 = vmatpush1.msra.mxu0 0.0
    %398 = vmatprep.subr.mxu0 0.0
    %399 = vmatpush1.msra.mxu0 0.0
    %400 = vmatprep.subr.mxu0 0.0
    %401 = vmatpush1.msra.mxu0 0.0
    %402 = vmatprep.subr.mxu0 0.0
    %403 = vmatpush1.msra.mxu0 0.0
    %404 = vmatprep.subr.mxu0 0.0
    %405 = vmatpush1.msra.mxu0 0.0
    %406 = vmatprep.subr.mxu0 0.0
    %407 = vmatpush1.msra.mxu0 0.0
    %408 = vmatprep.subr.mxu0 0.0
    %409 = vmatpush1.msra.mxu0 0.0
    %410 = vmatprep.subr.mxu0 0.0
    %411 = vmatpush1.msra.mxu0 0.0
    %412 = vmatprep.subr.mxu0 0.0
    %413 = vmatpush1.msra.mxu0 0.0
    %414 = vmatprep.subr.mxu0 0.0
    %415 = vmatpush1.msra.mxu0 0.0
    %416 = vmatprep.subr.mxu0 0.0
    %417 = vmatpush1.msra.mxu0 0.0
    %418 = vmatprep.subr.mxu0 0.0
    %419 = vmatpush1.msra.mxu0 0.0
    %420 = vmatprep.subr.mxu0 0.0
    %421 = vmatpush1.msra.mxu0 0.0
    %422 = vmatprep.subr.mxu0 0.0
    %423 = vmatpush1.msra.mxu0 0.0
    %424 = vmatprep.subr.mxu0 0.0
    %425 = vmatpush1.msra.mxu0 0.0
    %426 = vmatprep.subr.mxu0 0.0
    %427 = vmatpush1.msra.mxu0 0.0
    %428 = vmatprep.subr.mxu0 0.0
    %429 = vmatpush1.msra.mxu0 0.0
    %430 = vmatprep.subr.mxu0 0.0
    %431 = vmatpush1.msra.mxu0 0.0
    %432 = vmatprep.subr.mxu0 0.0
    %433 = vmatpush1.msra.mxu0 0.0
    %434 = vmatprep.subr.mxu0 0.0
    %435 = vmatpush1.msra.mxu0 0.0
    %436 = vmatprep.subr.mxu0 0.0
    %437 = vmatpush1.msra.mxu0 0.0
    %438 = vmatprep.subr.mxu0 0.0
    %439 = vmatpush1.msra.mxu0 0.0
    %440 = vmatprep.subr.mxu0 0.0
    %441 = vmatpush1.msra.mxu0 0.0
    %442 = vmatprep.subr.mxu0 0.0
    %443 = vmatpush1.msra.mxu0 0.0
    %444 = vmatprep.subr.mxu0 0.0
    %445 = vmatpush1.msra.mxu0 0.0
    %446 = vmatprep.subr.mxu0 0.0
    %447 = vmatpush1.msra.mxu0 0.0
    %448 = vmatprep.mubr.f32.mxu0 0.0
    %449 = vmatmul.mubr.f32.gmra.mrb[0].mxu0 %v382
    %v450 = vpop.f32.mrb[0].mxu0
    %v451 = vadd.f32 %v78, %v450
    %v452 = vpop.f32.mrb[0].mxu0
    %453 = vdwg.mxu0
    %s454 = scalar_lea.vmem %s0, 10
    %v455 = vld [vmem:[%s454] sm:$0x3]
    %v457 = vsel %vm80, %v455, 0
    %459 = vmatprep.subr.mxu0 0.0
    %460 = vmatpush1.msra.mxu0 %v55
    %461 = vmatprep.subr.mxu0 0.0
    %462 = vmatpush1.msra.mxu0 %v56
    %463 = vmatprep.subr.mxu0 0.0
    %464 = vmatpush1.msra.mxu0 %v57
    %465 = vmatprep.subr.mxu0 0.0
    %466 = vmatpush1.msra.mxu0 %v58
    %467 = vmatprep.subr.mxu0 0.0
    %468 = vmatpush1.msra.mxu0 0.0
    %469 = vmatprep.subr.mxu0 0.0
    %470 = vmatpush1.msra.mxu0 0.0
    %471 = vmatprep.subr.mxu0 0.0
    %472 = vmatpush1.msra.mxu0 0.0
    %473 = vmatprep.subr.mxu0 0.0
    %474 = vmatpush1.msra.mxu0 0.0
    %475 = vmatprep.subr.mxu0 0.0
    %476 = vmatpush1.msra.mxu0 0.0
    %477 = vmatprep.subr.mxu0 0.0
    %478 = vmatpush1.msra.mxu0 0.0
    %479 = vmatprep.subr.mxu0 0.0
    %480 = vmatpush1.msra.mxu0 0.0
    %481 = vmatprep.subr.mxu0 0.0
    %482 = vmatpush1.msra.mxu0 0.0
    %483 = vmatprep.subr.mxu0 0.0
    %484 = vmatpush1.msra.mxu0 0.0
    %485 = vmatprep.subr.mxu0 0.0
    %486 = vmatpush1.msra.mxu0 0.0
    %487 = vmatprep.subr.mxu0 0.0
    %488 = vmatpush1.msra.mxu0 0.0
    %489 = vmatprep.subr.mxu0 0.0
    %490 = vmatpush1.msra.mxu0 0.0
    %491 = vmatprep.subr.mxu0 0.0
    %492 = vmatpush1.msra.mxu0 0.0
    %493 = vmatprep.subr.mxu0 0.0
    %494 = vmatpush1.msra.mxu0 0.0
    %495 = vmatprep.subr.mxu0 0.0
    %496 = vmatpush1.msra.mxu0 0.0
    %497 = vmatprep.subr.mxu0 0.0
    %498 = vmatpush1.msra.mxu0 0.0
    %499 = vmatprep.subr.mxu0 0.0
    %500 = vmatpush1.msra.mxu0 0.0
    %501 = vmatprep.subr.mxu0 0.0
    %502 = vmatpush1.msra.mxu0 0.0
    %503 = vmatprep.subr.mxu0 0.0
    %504 = vmatpush1.msra.mxu0 0.0
    %505 = vmatprep.subr.mxu0 0.0
    %506 = vmatpush1.msra.mxu0 0.0
    %507 = vmatprep.subr.mxu0 0.0
    %508 = vmatpush1.msra.mxu0 0.0
    %509 = vmatprep.subr.mxu0 0.0
    %510 = vmatpush1.msra.mxu0 0.0
    %511 = vmatprep.subr.mxu0 0.0
    %512 = vmatpush1.msra.mxu0 0.0
    %513 = vmatprep.subr.mxu0 0.0
    %514 = vmatpush1.msra.mxu0 0.0
    %515 = vmatprep.subr.mxu0 0.0
    %516 = vmatpush1.msra.mxu0 0.0
    %517 = vmatprep.subr.mxu0 0.0
    %518 = vmatpush1.msra.mxu0 0.0
    %519 = vmatprep.subr.mxu0 0.0
    %520 = vmatpush1.msra.mxu0 0.0
    %521 = vmatprep.subr.mxu0 0.0
    %522 = vmatpush1.msra.mxu0 0.0
    %523 = vmatprep.mubr.f32.mxu0 0.0
    %524 = vmatmul.mubr.f32.gmra.mrb[0].mxu0 %v457
    %v525 = vpop.f32.mrb[0].mxu0
    %v526 = vadd.f32 %v78, %v525
    %v527 = vpop.f32.mrb[0].mxu0
    %528 = vdwg.mxu0
    %s529 = scalar_lea.vmem %s0, 12
    %v530 = vld [vmem:[%s529] sm:$0x3]
    %v532 = vsel %vm80, %v530, 0
    %534 = vmatprep.subr.mxu0 0.0
    %535 = vmatpush1.msra.mxu0 %v55
    %536 = vmatprep.subr.mxu0 0.0
    %537 = vmatpush1.msra.mxu0 %v56
    %538 = vmatprep.subr.mxu0 0.0
    %539 = vmatpush1.msra.mxu0 %v57
    %540 = vmatprep.subr.mxu0 0.0
    %541 = vmatpush1.msra.mxu0 %v58
    %542 = vmatprep.subr.mxu0 0.0
    %543 = vmatpush1.msra.mxu0 0.0
    %544 = vmatprep.subr.mxu0 0.0
    %545 = vmatpush1.msra.mxu0 0.0
    %546 = vmatprep.subr.mxu0 0.0
    %547 = vmatpush1.msra.mxu0 0.0
    %548 = vmatprep.subr.mxu0 0.0
    %549 = vmatpush1.msra.mxu0 0.0
    %550 = vmatprep.subr.mxu0 0.0
    %551 = vmatpush1.msra.mxu0 0.0
    %552 = vmatprep.subr.mxu0 0.0
    %553 = vmatpush1.msra.mxu0 0.0
    %554 = vmatprep.subr.mxu0 0.0
    %555 = vmatpush1.msra.mxu0 0.0
    %556 = vmatprep.subr.mxu0 0.0
    %557 = vmatpush1.msra.mxu0 0.0
    %558 = vmatprep.subr.mxu0 0.0
    %559 = vmatpush1.msra.mxu0 0.0
    %560 = vmatprep.subr.mxu0 0.0
    %561 = vmatpush1.msra.mxu0 0.0
    %562 = vmatprep.subr.mxu0 0.0
    %563 = vmatpush1.msra.mxu0 0.0
    %564 = vmatprep.subr.mxu0 0.0
    %565 = vmatpush1.msra.mxu0 0.0
    %566 = vmatprep.subr.mxu0 0.0
    %567 = vmatpush1.msra.mxu0 0.0
    %568 = vmatprep.subr.mxu0 0.0
    %569 = vmatpush1.msra.mxu0 0.0
    %570 = vmatprep.subr.mxu0 0.0
    %571 = vmatpush1.msra.mxu0 0.0
    %572 = vmatprep.subr.mxu0 0.0
    %573 = vmatpush1.msra.mxu0 0.0
    %574 = vmatprep.subr.mxu0 0.0
    %575 = vmatpush1.msra.mxu0 0.0
    %576 = vmatprep.subr.mxu0 0.0
    %577 = vmatpush1.msra.mxu0 0.0
    %578 = vmatprep.subr.mxu0 0.0
    %579 = vmatpush1.msra.mxu0 0.0
    %580 = vmatprep.subr.mxu0 0.0
    %581 = vmatpush1.msra.mxu0 0.0
    %582 = vmatprep.subr.mxu0 0.0
    %583 = vmatpush1.msra.mxu0 0.0
    %584 = vmatprep.subr.mxu0 0.0
    %585 = vmatpush1.msra.mxu0 0.0
    %586 = vmatprep.subr.mxu0 0.0
    %587 = vmatpush1.msra.mxu0 0.0
    %588 = vmatprep.subr.mxu0 0.0
    %589 = vmatpush1.msra.mxu0 0.0
    %590 = vmatprep.subr.mxu0 0.0
    %591 = vmatpush1.msra.mxu0 0.0
    %592 = vmatprep.subr.mxu0 0.0
    %593 = vmatpush1.msra.mxu0 0.0
    %594 = vmatprep.subr.mxu0 0.0
    %595 = vmatpush1.msra.mxu0 0.0
    %596 = vmatprep.subr.mxu0 0.0
    %597 = vmatpush1.msra.mxu0 0.0
    %598 = vmatprep.mubr.f32.mxu0 0.0
    %599 = vmatmul.mubr.f32.gmra.mrb[0].mxu0 %v532
    %v600 = vpop.f32.mrb[0].mxu0
    %v601 = vadd.f32 %v78, %v600
    %v602 = vpop.f32.mrb[0].mxu0
    %603 = vdwg.mxu0
    %s604 = scalar_lea.vmem %s0, 14
    %v605 = vld [vmem:[%s604] sm:$0x3]
    %v607 = vsel %vm80, %v605, 0
    %609 = vmatprep.subr.mxu0 0.0
    %610 = vmatpush1.msra.mxu0 %v55
    %611 = vmatprep.subr.mxu0 0.0
    %612 = vmatpush1.msra.mxu0 %v56
    %613 = vmatprep.subr.mxu0 0.0
    %614 = vmatpush1.msra.mxu0 %v57
    %615 = vmatprep.subr.mxu0 0.0
    %616 = vmatpush1.msra.mxu0 %v58
    %617 = vmatprep.subr.mxu0 0.0
    %618 = vmatpush1.msra.mxu0 0.0
    %619 = vmatprep.subr.mxu0 0.0
    %620 = vmatpush1.msra.mxu0 0.0
    %621 = vmatprep.subr.mxu0 0.0
    %622 = vmatpush1.msra.mxu0 0.0
    %623 = vmatprep.subr.mxu0 0.0
    %624 = vmatpush1.msra.mxu0 0.0
    %625 = vmatprep.subr.mxu0 0.0
    %626 = vmatpush1.msra.mxu0 0.0
    %627 = vmatprep.subr.mxu0 0.0
    %628 = vmatpush1.msra.mxu0 0.0
    %629 = vmatprep.subr.mxu0 0.0
    %630 = vmatpush1.msra.mxu0 0.0
    %631 = vmatprep.subr.mxu0 0.0
    %632 = vmatpush1.msra.mxu0 0.0
    %633 = vmatprep.subr.mxu0 0.0
    %634 = vmatpush1.msra.mxu0 0.0
    %635 = vmatprep.subr.mxu0 0.0
    %636 = vmatpush1.msra.mxu0 0.0
    %637 = vmatprep.subr.mxu0 0.0
    %638 = vmatpush1.msra.mxu0 0.0
    %639 = vmatprep.subr.mxu0 0.0
    %640 = vmatpush1.msra.mxu0 0.0
    %641 = vmatprep.subr.mxu0 0.0
    %642 = vmatpush1.msra.mxu0 0.0
    %643 = vmatprep.subr.mxu0 0.0
    %644 = vmatpush1.msra.mxu0 0.0
    %645 = vmatprep.subr.mxu0 0.0
    %646 = vmatpush1.msra.mxu0 0.0
    %647 = vmatprep.subr.mxu0 0.0
    %648 = vmatpush1.msra.mxu0 0.0
    %649 = vmatprep.subr.mxu0 0.0
    %650 = vmatpush1.msra.mxu0 0.0
    %651 = vmatprep.subr.mxu0 0.0
    %652 = vmatpush1.msra.mxu0 0.0
    %653 = vmatprep.subr.mxu0 0.0
    %654 = vmatpush1.msra.mxu0 0.0
    %655 = vmatprep.subr.mxu0 0.0
    %656 = vmatpush1.msra.mxu0 0.0
    %657 = vmatprep.subr.mxu0 0.0
    %658 = vmatpush1.msra.mxu0 0.0
    %659 = vmatprep.subr.mxu0 0.0
    %660 = vmatpush1.msra.mxu0 0.0
    %661 = vmatprep.subr.mxu0 0.0
    %662 = vmatpush1.msra.mxu0 0.0
    %663 = vmatprep.subr.mxu0 0.0
    %664 = vmatpush1.msra.mxu0 0.0
    %665 = vmatprep.subr.mxu0 0.0
    %666 = vmatpush1.msra.mxu0 0.0
    %667 = vmatprep.subr.mxu0 0.0
    %668 = vmatpush1.msra.mxu0 0.0
    %669 = vmatprep.subr.mxu0 0.0
    %670 = vmatpush1.msra.mxu0 0.0
    %671 = vmatprep.subr.mxu0 0.0
    %672 = vmatpush1.msra.mxu0 0.0
    %673 = vmatprep.mubr.f32.mxu0 0.0
    %674 = vmatmul.mubr.f32.gmra.mrb[0].mxu0 %v607
    %v675 = vpop.f32.mrb[0].mxu0
    %v676 = vadd.f32 %v78, %v675
    %v677 = vpop.f32.mrb[0].mxu0
    %678 = vdwg.mxu0
    %v679 = vld [vmem:[%s1] sm:$0x3]
    %s680 = scalar_lea.vmem %s1, 2
    %v681 = vld [vmem:[%s680] sm:$0x3]
    %v682 = vld [vmem:[%s2] sm:$0x3]
    %s683 = scalar_lea.vmem %s2, 2
    %v684 = vld [vmem:[%s683] sm:$0x3]
    %v686 = vsel %vm80, %v679, 0
    %688 = vmatprep.subr.mxu0 0.0
    %689 = vmatpush1.msra.mxu0 %v59
    %690 = vmatprep.subr.mxu0 0.0
    %691 = vmatpush1.msra.mxu0 %v60
    %692 = vmatprep.subr.mxu0 0.0
    %693 = vmatpush1.msra.mxu0 %v61
    %694 = vmatprep.subr.mxu0 0.0
    %695 = vmatpush1.msra.mxu0 %v62
    %696 = vmatprep.subr.mxu0 0.0
    %697 = vmatpush1.msra.mxu0 0.0
    %698 = vmatprep.subr.mxu0 0.0
    %699 = vmatpush1.msra.mxu0 0.0
    %700 = vmatprep.subr.mxu0 0.0
    %701 = vmatpush1.msra.mxu0 0.0
    %702 = vmatprep.subr.mxu0 0.0
    %703 = vmatpush1.msra.mxu0 0.0
    %704 = vmatprep.subr.mxu0 0.0
    %705 = vmatpush1.msra.mxu0 0.0
    %706 = vmatprep.subr.mxu0 0.0
    %707 = vmatpush1.msra.mxu0 0.0
    %708 = vmatprep.subr.mxu0 0.0
    %709 = vmatpush1.msra.mxu0 0.0
    %710 = vmatprep.subr.mxu0 0.0
    %711 = vmatpush1.msra.mxu0 0.0
    %712 = vmatprep.subr.mxu0 0.0
    %713 = vmatpush1.msra.mxu0 0.0
    %714 = vmatprep.subr.mxu0 0.0
    %715 = vmatpush1.msra.mxu0 0.0
    %716 = vmatprep.subr.mxu0 0.0
    %717 = vmatpush1.msra.mxu0 0.0
    %718 = vmatprep.subr.mxu0 0.0
    %719 = vmatpush1.msra.mxu0 0.0
    %720 = vmatprep.subr.mxu0 0.0
    %721 = vmatpush1.msra.mxu0 0.0
    %722 = vmatprep.subr.mxu0 0.0
    %723 = vmatpush1.msra.mxu0 0.0
    %724 = vmatprep.subr.mxu0 0.0
    %725 = vmatpush1.msra.mxu0 0.0
    %726 = vmatprep.subr.mxu0 0.0
    %727 = vmatpush1.msra.mxu0 0.0
    %728 = vmatprep.subr.mxu0 0.0
    %729 = vmatpush1.msra.mxu0 0.0
    %730 = vmatprep.subr.mxu0 0.0
    %731 = vmatpush1.msra.mxu0 0.0
    %732 = vmatprep.subr.mxu0 0.0
    %733 = vmatpush1.msra.mxu0 0.0
    %734 = vmatprep.subr.mxu0 0.0
    %735 = vmatpush1.msra.mxu0 0.0
    %736 = vmatprep.subr.mxu0 0.0
    %737 = vmatpush1.msra.mxu0 0.0
    %738 = vmatprep.subr.mxu0 0.0
    %739 = vmatpush1.msra.mxu0 0.0
    %740 = vmatprep.subr.mxu0 0.0
    %741 = vmatpush1.msra.mxu0 0.0
    %742 = vmatprep.subr.mxu0 0.0
    %743 = vmatpush1.msra.mxu0 0.0
    %744 = vmatprep.subr.mxu0 0.0
    %745 = vmatpush1.msra.mxu0 0.0
    %746 = vmatprep.subr.mxu0 0.0
    %747 = vmatpush1.msra.mxu0 0.0
    %748 = vmatprep.subr.mxu0 0.0
    %749 = vmatpush1.msra.mxu0 0.0
    %750 = vmatprep.subr.mxu0 0.0
    %751 = vmatpush1.msra.mxu0 0.0
    %752 = vmatprep.mubr.f32.mxu0 0.0
    %753 = vmatmul.mubr.f32.gmra.mrb[0].mxu0 %v686
    %v754 = vpop.f32.mrb[0].mxu0
    %v755 = vadd.f32 0.0, %v754
    %v756 = vpop.f32.mrb[0].mxu0
    %757 = vdwg.mxu0
    %v758 = vadd.f32 %v151, %v755
    %v759 = vxor.u32 %v758, 2147483648
    %v760 = vmul.f32 %v759, 1.442695
    %v761 = vpow.pop %v760
    %v762 = vadd.f32 %v761, 1.0
    %v763 = vrcp.pop %v762
    %v764 = vmul.f32 1.0, %v763
    %v765 = vtanh.pop %v758
    %767 = vrot.lane.b32.xlu0 %v682, 32
    %v768 = vpop.permute.xlu0 %767
    %v770 = vmul.f32 %v764, %v768
    %772 = vrot.lane.b32.xlu0 %v765, 32
    %v773 = vpop.permute.xlu0 %772
    %v775 = vmul.f32 %v764, %v773
    %777 = vrot.lane.b32.xlu0 %v775, 32
    %v778 = vpop.permute.xlu0 %777
    %v780 = vadd.f32 %v770, %v778
    %v781 = vtanh.pop %v780
    %783 = vrot.lane.b32.xlu0 %v781, 32
    %v784 = vpop.permute.xlu0 %783
    %v786 = vmul.f32 %v764, %v784
    %v788 = vsel %vm80, %v681, 0
    %790 = vmatprep.subr.mxu0 0.0
    %791 = vmatpush1.msra.mxu0 %v67
    %792 = vmatprep.subr.mxu0 0.0
    %793 = vmatpush1.msra.mxu0 %v68
    %794 = vmatprep.subr.mxu0 0.0
    %795 = vmatpush1.msra.mxu0 %v69
    %796 = vmatprep.subr.mxu0 0.0
    %797 = vmatpush1.msra.mxu0 %v70
    %798 = vmatprep.subr.mxu0 0.0
    %799 = vmatpush1.msra.mxu0 0.0
    %800 = vmatprep.subr.mxu0 0.0
    %801 = vmatpush1.msra.mxu0 0.0
    %802 = vmatprep.subr.mxu0 0.0
    %803 = vmatpush1.msra.mxu0 0.0
    %804 = vmatprep.subr.mxu0 0.0
    %805 = vmatpush1.msra.mxu0 0.0
    %806 = vmatprep.subr.mxu0 0.0
    %807 = vmatpush1.msra.mxu0 0.0
    %808 = vmatprep.subr.mxu0 0.0
    %809 = vmatpush1.msra.mxu0 0.0
    %810 = vmatprep.subr.mxu0 0.0
    %811 = vmatpush1.msra.mxu0 0.0
    %812 = vmatprep.subr.mxu0 0.0
    %813 = vmatpush1.msra.mxu0 0.0
    %814 = vmatprep.subr.mxu0 0.0
    %815 = vmatpush1.msra.mxu0 0.0
    %816 = vmatprep.subr.mxu0 0.0
    %817 = vmatpush1.msra.mxu0 0.0
    %818 = vmatprep.subr.mxu0 0.0
    %819 = vmatpush1.msra.mxu0 0.0
    %820 = vmatprep.subr.mxu0 0.0
    %821 = vmatpush1.msra.mxu0 0.0
    %822 = vmatprep.subr.mxu0 0.0
    %823 = vmatpush1.msra.mxu0 0.0
    %824 = vmatprep.subr.mxu0 0.0
    %825 = vmatpush1.msra.mxu0 0.0
    %826 = vmatprep.subr.mxu0 0.0
    %827 = vmatpush1.msra.mxu0 0.0
    %828 = vmatprep.subr.mxu0 0.0
    %829 = vmatpush1.msra.mxu0 0.0
    %830 = vmatprep.subr.mxu0 0.0
    %831 = vmatpush1.msra.mxu0 0.0
    %832 = vmatprep.subr.mxu0 0.0
    %833 = vmatpush1.msra.mxu0 0.0
    %834 = vmatprep.subr.mxu0 0.0
    %835 = vmatpush1.msra.mxu0 0.0
    %836 = vmatprep.subr.mxu0 0.0
    %837 = vmatpush1.msra.mxu0 0.0
    %838 = vmatprep.subr.mxu0 0.0
    %839 = vmatpush1.msra.mxu0 0.0
    %840 = vmatprep.subr.mxu0 0.0
    %841 = vmatpush1.msra.mxu0 0.0
    %842 = vmatprep.subr.mxu0 0.0
    %843 = vmatpush1.msra.mxu0 0.0
    %844 = vmatprep.subr.mxu0 0.0
    %845 = vmatpush1.msra.mxu0 0.0
    %846 = vmatprep.subr.mxu0 0.0
    %847 = vmatpush1.msra.mxu0 0.0
    %848 = vmatprep.subr.mxu0 0.0
    %849 = vmatpush1.msra.mxu0 0.0
    %850 = vmatprep.subr.mxu0 0.0
    %851 = vmatpush1.msra.mxu0 0.0
    %852 = vmatprep.subr.mxu0 0.0
    %853 = vmatpush1.msra.mxu0 0.0
    %854 = vmatprep.mubr.f32.mxu0 0.0
    %855 = vmatmul.mubr.f32.gmra.mrb[0].mxu0 %v788
    %v856 = vpop.f32.mrb[0].mxu0
    %v857 = vadd.f32 0.0, %v856
    %v858 = vpop.f32.mrb[0].mxu0
    %859 = vdwg.mxu0
    %861 = vrot.lane.b32.xlu0 %v786, 64
    %v862 = vpop.permute.xlu0 %861
    %v863 = vsel %vm80, %v862, 0
    %865 = vmatprep.subr.mxu0 0.0
    %866 = vmatpush1.msra.mxu0 %v63
    %867 = vmatprep.subr.mxu0 0.0
    %868 = vmatpush1.msra.mxu0 %v64
    %869 = vmatprep.subr.mxu0 0.0
    %870 = vmatpush1.msra.mxu0 %v65
    %871 = vmatprep.subr.mxu0 0.0
    %872 = vmatpush1.msra.mxu0 %v66
    %873 = vmatprep.subr.mxu0 0.0
    %874 = vmatpush1.msra.mxu0 0.0
    %875 = vmatprep.subr.mxu0 0.0
    %876 = vmatpush1.msra.mxu0 0.0
    %877 = vmatprep.subr.mxu0 0.0
    %878 = vmatpush1.msra.mxu0 0.0
    %879 = vmatprep.subr.mxu0 0.0
    %880 = vmatpush1.msra.mxu0 0.0
    %881 = vmatprep.subr.mxu0 0.0
    %882 = vmatpush1.msra.mxu0 0.0
    %883 = vmatprep.subr.mxu0 0.0
    %884 = vmatpush1.msra.mxu0 0.0
    %885 = vmatprep.subr.mxu0 0.0
    %886 = vmatpush1.msra.mxu0 0.0
    %887 = vmatprep.subr.mxu0 0.0
    %888 = vmatpush1.msra.mxu0 0.0
    %889 = vmatprep.subr.mxu0 0.0
    %890 = vmatpush1.msra.mxu0 0.0
    %891 = vmatprep.subr.mxu0 0.0
    %892 = vmatpush1.msra.mxu0 0.0
    %893 = vmatprep.subr.mxu0 0.0
    %894 = vmatpush1.msra.mxu0 0.0
    %895 = vmatprep.subr.mxu0 0.0
    %896 = vmatpush1.msra.mxu0 0.0
    %897 = vmatprep.subr.mxu0 0.0
    %898 = vmatpush1.msra.mxu0 0.0
    %899 = vmatprep.subr.mxu0 0.0
    %900 = vmatpush1.msra.mxu0 0.0
    %901 = vmatprep.subr.mxu0 0.0
    %902 = vmatpush1.msra.mxu0 0.0
    %903 = vmatprep.subr.mxu0 0.0
    %904 = vmatpush1.msra.mxu0 0.0
    %905 = vmatprep.subr.mxu0 0.0
    %906 = vmatpush1.msra.mxu0 0.0
    %907 = vmatprep.subr.mxu0 0.0
    %908 = vmatpush1.msra.mxu0 0.0
    %909 = vmatprep.subr.mxu0 0.0
    %910 = vmatpush1.msra.mxu0 0.0
    %911 = vmatprep.subr.mxu0 0.0
    %912 = vmatpush1.msra.mxu0 0.0
    %913 = vmatprep.subr.mxu0 0.0
    %914 = vmatpush1.msra.mxu0 0.0
    %915 = vmatprep.subr.mxu0 0.0
    %916 = vmatpush1.msra.mxu0 0.0
    %917 = vmatprep.subr.mxu0 0.0
    %918 = vmatpush1.msra.mxu0 0.0
    %919 = vmatprep.subr.mxu0 0.0
    %920 = vmatpush1.msra.mxu0 0.0
    %921 = vmatprep.subr.mxu0 0.0
    %922 = vmatpush1.msra.mxu0 0.0
    %923 = vmatprep.subr.mxu0 0.0
    %924 = vmatpush1.msra.mxu0 0.0
    %925 = vmatprep.subr.mxu0 0.0
    %926 = vmatpush1.msra.mxu0 0.0
    %927 = vmatprep.subr.mxu0 0.0
    %928 = vmatpush1.msra.mxu0 0.0
    %929 = vmatprep.mubr.f32.mxu0 0.0
    %930 = vmatmul.mubr.f32.gmra.mrb[0].mxu0 %v863
    %v931 = vpop.f32.mrb[0].mxu0
    %v932 = vadd.f32 %v857, %v931
    %v933 = vpop.f32.mrb[0].mxu0
    %934 = vdwg.mxu0
    %v936 = vlaneseq
    %v937 = vshrl.u32 %v936, 7
    %v938 = vsub.s32 0, %v937
    %v939 = vrot.slane %v72, %v938
    %v941 = vadd.f32 %v932, %v939
    %v942 = vxor.u32 %v941, 2147483648
    %v943 = vmul.f32 %v942, 1.442695
    %v944 = vpow.pop %v943
    %v945 = vadd.f32 %v944, 1.0
    %v946 = vrcp.pop %v945
    %v947 = vmul.f32 1.0, %v946
    %v948 = vtanh.pop %v941
    %950 = vrot.lane.b32.xlu0 %v684, 32
    %v951 = vpop.permute.xlu0 %950
    %v953 = vmul.f32 %v947, %v951
    %955 = vrot.lane.b32.xlu0 %v948, 32
    %v956 = vpop.permute.xlu0 %955
    %v958 = vmul.f32 %v947, %v956
    %960 = vrot.lane.b32.xlu0 %v958, 32
    %v961 = vpop.permute.xlu0 %960
    %v963 = vadd.f32 %v953, %v961
    %v964 = vtanh.pop %v963
    %966 = vrot.lane.b32.xlu0 %v964, 32
    %v967 = vpop.permute.xlu0 %966
    %v969 = vmul.f32 %v947, %v967
    %970 = vmatprep.subr.mxu0 0.0
    %971 = vmatpush1.msra.mxu0 %v59
    %972 = vmatprep.subr.mxu0 0.0
    %973 = vmatpush1.msra.mxu0 %v60
    %974 = vmatprep.subr.mxu0 0.0
    %975 = vmatpush1.msra.mxu0 %v61
    %976 = vmatprep.subr.mxu0 0.0
    %977 = vmatpush1.msra.mxu0 %v62
    %978 = vmatprep.subr.mxu0 0.0
    %979 = vmatpush1.msra.mxu0 0.0
    %980 = vmatprep.subr.mxu0 0.0
    %981 = vmatpush1.msra.mxu0 0.0
    %982 = vmatprep.subr.mxu0 0.0
    %983 = vmatpush1.msra.mxu0 0.0
    %984 = vmatprep.subr.mxu0 0.0
    %985 = vmatpush1.msra.mxu0 0.0
    %986 = vmatprep.subr.mxu0 0.0
    %987 = vmatpush1.msra.mxu0 0.0
    %988 = vmatprep.subr.mxu0 0.0
    %989 = vmatpush1.msra.mxu0 0.0
    %990 = vmatprep.subr.mxu0 0.0
    %991 = vmatpush1.msra.mxu0 0.0
    %992 = vmatprep.subr.mxu0 0.0
    %993 = vmatpush1.msra.mxu0 0.0
    %994 = vmatprep.subr.mxu0 0.0
    %995 = vmatpush1.msra.mxu0 0.0
    %996 = vmatprep.subr.mxu0 0.0
    %997 = vmatpush1.msra.mxu0 0.0
    %998 = vmatprep.subr.mxu0 0.0
    %999 = vmatpush1.msra.mxu0 0.0
    %1000 = vmatprep.subr.mxu0 0.0
    %1001 = vmatpush1.msra.mxu0 0.0
    %1002 = vmatprep.subr.mxu0 0.0
    %1003 = vmatpush1.msra.mxu0 0.0
    %1004 = vmatprep.subr.mxu0 0.0
    %1005 = vmatpush1.msra.mxu0 0.0
    %1006 = vmatprep.subr.mxu0 0.0
    %1007 = vmatpush1.msra.mxu0 0.0
    %1008 = vmatprep.subr.mxu0 0.0
    %1009 = vmatpush1.msra.mxu0 0.0
    %1010 = vmatprep.subr.mxu0 0.0
    %1011 = vmatpush1.msra.mxu0 0.0
    %1012 = vmatprep.subr.mxu0 0.0
    %1013 = vmatpush1.msra.mxu0 0.0
    %1014 = vmatprep.subr.mxu0 0.0
    %1015 = vmatpush1.msra.mxu0 0.0
    %1016 = vmatprep.subr.mxu0 0.0
    %1017 = vmatpush1.msra.mxu0 0.0
    %1018 = vmatprep.subr.mxu0 0.0
    %1019 = vmatpush1.msra.mxu0 0.0
    %1020 = vmatprep.subr.mxu0 0.0
    %1021 = vmatpush1.msra.mxu0 0.0
    %1022 = vmatprep.subr.mxu0 0.0
    %1023 = vmatpush1.msra.mxu0 0.0
    %1024 = vmatprep.subr.mxu0 0.0
    %1025 = vmatpush1.msra.mxu0 0.0
    %1026 = vmatprep.subr.mxu0 0.0
    %1027 = vmatpush1.msra.mxu0 0.0
    %1028 = vmatprep.subr.mxu0 0.0
    %1029 = vmatpush1.msra.mxu0 0.0
    %1030 = vmatprep.subr.mxu0 0.0
    %1031 = vmatpush1.msra.mxu0 0.0
    %1032 = vmatprep.subr.mxu0 0.0
    %1033 = vmatpush1.msra.mxu0 0.0
    %1034 = vmatprep.mubr.f32.mxu0 0.0
    %1035 = vmatmul.mubr.f32.gmra.mrb[0].mxu0 %v863
    %v1036 = vpop.f32.mrb[0].mxu0
    %v1037 = vadd.f32 0.0, %v1036
    %v1038 = vpop.f32.mrb[0].mxu0
    %1039 = vdwg.mxu0
    %v1040 = vadd.f32 %v226, %v1037
    %v1041 = vxor.u32 %v1040, 2147483648
    %v1042 = vmul.f32 %v1041, 1.442695
    %v1043 = vpow.pop %v1042
    %v1044 = vadd.f32 %v1043, 1.0
    %v1045 = vrcp.pop %v1044
    %v1046 = vmul.f32 1.0, %v1045
    %v1047 = vtanh.pop %v1040
    %v1048 = vmul.f32 %v1046, %v780
    %1050 = vrot.lane.b32.xlu0 %v1047, 32
    %v1051 = vpop.permute.xlu0 %1050
    %v1053 = vmul.f32 %v1046, %v1051
    %1055 = vrot.lane.b32.xlu0 %v1053, 32
    %v1056 = vpop.permute.xlu0 %1055
    %v1058 = vadd.f32 %v1048, %v1056
    %v1059 = vtanh.pop %v1058
    %1061 = vrot.lane.b32.xlu0 %v1059, 32
    %v1062 = vpop.permute.xlu0 %1061
    %v1064 = vmul.f32 %v1046, %v1062
    %1066 = vrot.lane.b32.xlu0 %v969, 64
    %v1067 = vpop.permute.xlu0 %1066
    %v1068 = vsel %vm80, %v1067, 0
    %1070 = vmatprep.subr.mxu0 0.0
    %1071 = vmatpush1.msra.mxu0 %v67
    %1072 = vmatprep.subr.mxu0 0.0
    %1073 = vmatpush1.msra.mxu0 %v68
    %1074 = vmatprep.subr.mxu0 0.0
    %1075 = vmatpush1.msra.mxu0 %v69
    %1076 = vmatprep.subr.mxu0 0.0
    %1077 = vmatpush1.msra.mxu0 %v70
    %1078 = vmatprep.subr.mxu0 0.0
    %1079 = vmatpush1.msra.mxu0 0.0
    %1080 = vmatprep.subr.mxu0 0.0
    %1081 = vmatpush1.msra.mxu0 0.0
    %1082 = vmatprep.subr.mxu0 0.0
    %1083 = vmatpush1.msra.mxu0 0.0
    %1084 = vmatprep.subr.mxu0 0.0
    %1085 = vmatpush1.msra.mxu0 0.0
    %1086 = vmatprep.subr.mxu0 0.0
    %1087 = vmatpush1.msra.mxu0 0.0
    %1088 = vmatprep.subr.mxu0 0.0
    %1089 = vmatpush1.msra.mxu0 0.0
    %1090 = vmatprep.subr.mxu0 0.0
    %1091 = vmatpush1.msra.mxu0 0.0
    %1092 = vmatprep.subr.mxu0 0.0
    %1093 = vmatpush1.msra.mxu0 0.0
    %1094 = vmatprep.subr.mxu0 0.0
    %1095 = vmatpush1.msra.mxu0 0.0
    %1096 = vmatprep.subr.mxu0 0.0
    %1097 = vmatpush1.msra.mxu0 0.0
    %1098 = vmatprep.subr.mxu0 0.0
    %1099 = vmatpush1.msra.mxu0 0.0
    %1100 = vmatprep.subr.mxu0 0.0
    %1101 = vmatpush1.msra.mxu0 0.0
    %1102 = vmatprep.subr.mxu0 0.0
    %1103 = vmatpush1.msra.mxu0 0.0
    %1104 = vmatprep.subr.mxu0 0.0
    %1105 = vmatpush1.msra.mxu0 0.0
    %1106 = vmatprep.subr.mxu0 0.0
    %1107 = vmatpush1.msra.mxu0 0.0
    %1108 = vmatprep.subr.mxu0 0.0
    %1109 = vmatpush1.msra.mxu0 0.0
    %1110 = vmatprep.subr.mxu0 0.0
    %1111 = vmatpush1.msra.mxu0 0.0
    %1112 = vmatprep.subr.mxu0 0.0
    %1113 = vmatpush1.msra.mxu0 0.0
    %1114 = vmatprep.subr.mxu0 0.0
    %1115 = vmatpush1.msra.mxu0 0.0
    %1116 = vmatprep.subr.mxu0 0.0
    %1117 = vmatpush1.msra.mxu0 0.0
    %1118 = vmatprep.subr.mxu0 0.0
    %1119 = vmatpush1.msra.mxu0 0.0
    %1120 = vmatprep.subr.mxu0 0.0
    %1121 = vmatpush1.msra.mxu0 0.0
    %1122 = vmatprep.subr.mxu0 0.0
    %1123 = vmatpush1.msra.mxu0 0.0
    %1124 = vmatprep.subr.mxu0 0.0
    %1125 = vmatpush1.msra.mxu0 0.0
    %1126 = vmatprep.subr.mxu0 0.0
    %1127 = vmatpush1.msra.mxu0 0.0
    %1128 = vmatprep.subr.mxu0 0.0
    %1129 = vmatpush1.msra.mxu0 0.0
    %1130 = vmatprep.subr.mxu0 0.0
    %1131 = vmatpush1.msra.mxu0 0.0
    %1132 = vmatprep.subr.mxu0 0.0
    %1133 = vmatpush1.msra.mxu0 0.0
    %1134 = vmatprep.mubr.f32.mxu0 0.0
    %1135 = vmatmul.mubr.f32.gmra.mrb[0].mxu0 %v1068
    %v1136 = vpop.f32.mrb[0].mxu0
    %v1137 = vadd.f32 0.0, %v1136
    %v1138 = vpop.f32.mrb[0].mxu0
    %1139 = vdwg.mxu0
    %1141 = vrot.lane.b32.xlu0 %v1064, 64
    %v1142 = vpop.permute.xlu0 %1141
    %v1143 = vsel %vm80, %v1142, 0
    %1145 = vmatprep.subr.mxu0 0.0
    %1146 = vmatpush1.msra.mxu0 %v63
    %1147 = vmatprep.subr.mxu0 0.0
    %1148 = vmatpush1.msra.mxu0 %v64
    %1149 = vmatprep.subr.mxu0 0.0
    %1150 = vmatpush1.msra.mxu0 %v65
    %1151 = vmatprep.subr.mxu0 0.0
    %1152 = vmatpush1.msra.mxu0 %v66
    %1153 = vmatprep.subr.mxu0 0.0
    %1154 = vmatpush1.msra.mxu0 0.0
    %1155 = vmatprep.subr.mxu0 0.0
    %1156 = vmatpush1.msra.mxu0 0.0
    %1157 = vmatprep.subr.mxu0 0.0
    %1158 = vmatpush1.msra.mxu0 0.0
    %1159 = vmatprep.subr.mxu0 0.0
    %1160 = vmatpush1.msra.mxu0 0.0
    %1161 = vmatprep.subr.mxu0 0.0
    %1162 = vmatpush1.msra.mxu0 0.0
    %1163 = vmatprep.subr.mxu0 0.0
    %1164 = vmatpush1.msra.mxu0 0.0
    %1165 = vmatprep.subr.mxu0 0.0
    %1166 = vmatpush1.msra.mxu0 0.0
    %1167 = vmatprep.subr.mxu0 0.0
    %1168 = vmatpush1.msra.mxu0 0.0
    %1169 = vmatprep.subr.mxu0 0.0
    %1170 = vmatpush1.msra.mxu0 0.0
    %1171 = vmatprep.subr.mxu0 0.0
    %1172 = vmatpush1.msra.mxu0 0.0
    %1173 = vmatprep.subr.mxu0 0.0
    %1174 = vmatpush1.msra.mxu0 0.0
    %1175 = vmatprep.subr.mxu0 0.0
    %1176 = vmatpush1.msra.mxu0 0.0
    %1177 = vmatprep.subr.mxu0 0.0
    %1178 = vmatpush1.msra.mxu0 0.0
    %1179 = vmatprep.subr.mxu0 0.0
    %1180 = vmatpush1.msra.mxu0 0.0
    %1181 = vmatprep.subr.mxu0 0.0
    %1182 = vmatpush1.msra.mxu0 0.0
    %1183 = vmatprep.subr.mxu0 0.0
    %1184 = vmatpush1.msra.mxu0 0.0
    %1185 = vmatprep.subr.mxu0 0.0
    %1186 = vmatpush1.msra.mxu0 0.0
    %1187 = vmatprep.subr.mxu0 0.0
    %1188 = vmatpush1.msra.mxu0 0.0
    %1189 = vmatprep.subr.mxu0 0.0
    %1190 = vmatpush1.msra.mxu0 0.0
    %1191 = vmatprep.subr.mxu0 0.0
    %1192 = vmatpush1.msra.mxu0 0.0
    %1193 = vmatprep.subr.mxu0 0.0
    %1194 = vmatpush1.msra.mxu0 0.0
    %1195 = vmatprep.subr.mxu0 0.0
    %1196 = vmatpush1.msra.mxu0 0.0
    %1197 = vmatprep.subr.mxu0 0.0
    %1198 = vmatpush1.msra.mxu0 0.0
    %1199 = vmatprep.subr.mxu0 0.0
    %1200 = vmatpush1.msra.mxu0 0.0
    %1201 = vmatprep.subr.mxu0 0.0
    %1202 = vmatpush1.msra.mxu0 0.0
    %1203 = vmatprep.subr.mxu0 0.0
    %1204 = vmatpush1.msra.mxu0 0.0
    %1205 = vmatprep.subr.mxu0 0.0
    %1206 = vmatpush1.msra.mxu0 0.0
    %1207 = vmatprep.subr.mxu0 0.0
    %1208 = vmatpush1.msra.mxu0 0.0
    %1209 = vmatprep.mubr.f32.mxu0 0.0
    %1210 = vmatmul.mubr.f32.gmra.mrb[0].mxu0 %v1143
    %v1211 = vpop.f32.mrb[0].mxu0
    %v1212 = vadd.f32 %v1137, %v1211
    %v1213 = vpop.f32.mrb[0].mxu0
    %1214 = vdwg.mxu0
    %v1215 = vadd.f32 %v1212, %v939
    %v1216 = vxor.u32 %v1215, 2147483648
    %v1217 = vmul.f32 %v1216, 1.442695
    %v1218 = vpow.pop %v1217
    %v1219 = vadd.f32 %v1218, 1.0
    %v1220 = vrcp.pop %v1219
    %v1221 = vmul.f32 1.0, %v1220
    %v1222 = vtanh.pop %v1215
    %v1223 = vmul.f32 %v1221, %v963
    %1225 = vrot.lane.b32.xlu0 %v1222, 32
    %v1226 = vpop.permute.xlu0 %1225
    %v1228 = vmul.f32 %v1221, %v1226
    %1230 = vrot.lane.b32.xlu0 %v1228, 32
    %v1231 = vpop.permute.xlu0 %1230
    %v1233 = vadd.f32 %v1223, %v1231
    %v1234 = vtanh.pop %v1233
    %1236 = vrot.lane.b32.xlu0 %v1234, 32
    %v1237 = vpop.permute.xlu0 %1236
    %v1239 = vmul.f32 %v1221, %v1237
    %1240 = vmatprep.subr.mxu0 0.0
    %1241 = vmatpush1.msra.mxu0 %v59
    %1242 = vmatprep.subr.mxu0 0.0
    %1243 = vmatpush1.msra.mxu0 %v60
    %1244 = vmatprep.subr.mxu0 0.0
    %1245 = vmatpush1.msra.mxu0 %v61
    %1246 = vmatprep.subr.mxu0 0.0
    %1247 = vmatpush1.msra.mxu0 %v62
    %1248 = vmatprep.subr.mxu0 0.0
    %1249 = vmatpush1.msra.mxu0 0.0
    %1250 = vmatprep.subr.mxu0 0.0
    %1251 = vmatpush1.msra.mxu0 0.0
    %1252 = vmatprep.subr.mxu0 0.0
    %1253 = vmatpush1.msra.mxu0 0.0
    %1254 = vmatprep.subr.mxu0 0.0
    %1255 = vmatpush1.msra.mxu0 0.0
    %1256 = vmatprep.subr.mxu0 0.0
    %1257 = vmatpush1.msra.mxu0 0.0
    %1258 = vmatprep.subr.mxu0 0.0
    %1259 = vmatpush1.msra.mxu0 0.0
    %1260 = vmatprep.subr.mxu0 0.0
    %1261 = vmatpush1.msra.mxu0 0.0
    %1262 = vmatprep.subr.mxu0 0.0
    %1263 = vmatpush1.msra.mxu0 0.0
    %1264 = vmatprep.subr.mxu0 0.0
    %1265 = vmatpush1.msra.mxu0 0.0
    %1266 = vmatprep.subr.mxu0 0.0
    %1267 = vmatpush1.msra.mxu0 0.0
    %1268 = vmatprep.subr.mxu0 0.0
    %1269 = vmatpush1.msra.mxu0 0.0
    %1270 = vmatprep.subr.mxu0 0.0
    %1271 = vmatpush1.msra.mxu0 0.0
    %1272 = vmatprep.subr.mxu0 0.0
    %1273 = vmatpush1.msra.mxu0 0.0
    %1274 = vmatprep.subr.mxu0 0.0
    %1275 = vmatpush1.msra.mxu0 0.0
    %1276 = vmatprep.subr.mxu0 0.0
    %1277 = vmatpush1.msra.mxu0 0.0
    %1278 = vmatprep.subr.mxu0 0.0
    %1279 = vmatpush1.msra.mxu0 0.0
    %1280 = vmatprep.subr.mxu0 0.0
    %1281 = vmatpush1.msra.mxu0 0.0
    %1282 = vmatprep.subr.mxu0 0.0
    %1283 = vmatpush1.msra.mxu0 0.0
    %1284 = vmatprep.subr.mxu0 0.0
    %1285 = vmatpush1.msra.mxu0 0.0
    %1286 = vmatprep.subr.mxu0 0.0
    %1287 = vmatpush1.msra.mxu0 0.0
    %1288 = vmatprep.subr.mxu0 0.0
    %1289 = vmatpush1.msra.mxu0 0.0
    %1290 = vmatprep.subr.mxu0 0.0
    %1291 = vmatpush1.msra.mxu0 0.0
    %1292 = vmatprep.subr.mxu0 0.0
    %1293 = vmatpush1.msra.mxu0 0.0
    %1294 = vmatprep.subr.mxu0 0.0
    %1295 = vmatpush1.msra.mxu0 0.0
    %1296 = vmatprep.subr.mxu0 0.0
    %1297 = vmatpush1.msra.mxu0 0.0
    %1298 = vmatprep.subr.mxu0 0.0
    %1299 = vmatpush1.msra.mxu0 0.0
    %1300 = vmatprep.subr.mxu0 0.0
    %1301 = vmatpush1.msra.mxu0 0.0
    %1302 = vmatprep.subr.mxu0 0.0
    %1303 = vmatpush1.msra.mxu0 0.0
    %1304 = vmatprep.mubr.f32.mxu0 0.0
    %1305 = vmatmul.mubr.f32.gmra.mrb[0].mxu0 %v1143
    %v1306 = vpop.f32.mrb[0].mxu0
    %v1307 = vadd.f32 0.0, %v1306
    %v1308 = vpop.f32.mrb[0].mxu0
    %1309 = vdwg.mxu0
    %v1310 = vadd.f32 %v301, %v1307
    %v1311 = vxor.u32 %v1310, 2147483648
    %v1312 = vmul.f32 %v1311, 1.442695
    %v1313 = vpow.pop %v1312
    %v1314 = vadd.f32 %v1313, 1.0
    %v1315 = vrcp.pop %v1314
    %v1316 = vmul.f32 1.0, %v1315
    %v1317 = vtanh.pop %v1310
    %v1318 = vmul.f32 %v1316, %v1058
    %1320 = vrot.lane.b32.xlu0 %v1317, 32
    %v1321 = vpop.permute.xlu0 %1320
    %v1323 = vmul.f32 %v1316, %v1321
    %1325 = vrot.lane.b32.xlu0 %v1323, 32
    %v1326 = vpop.permute.xlu0 %1325
    %v1328 = vadd.f32 %v1318, %v1326
    %v1329 = vtanh.pop %v1328
    %1331 = vrot.lane.b32.xlu0 %v1329, 32
    %v1332 = vpop.permute.xlu0 %1331
    %v1334 = vmul.f32 %v1316, %v1332
    %1336 = vrot.lane.b32.xlu0 %v1239, 64
    %v1337 = vpop.permute.xlu0 %1336
    %v1338 = vsel %vm80, %v1337, 0
    %1340 = vmatprep.subr.mxu0 0.0
    %1341 = vmatpush1.msra.mxu0 %v67
    %1342 = vmatprep.subr.mxu0 0.0
    %1343 = vmatpush1.msra.mxu0 %v68
    %1344 = vmatprep.subr.mxu0 0.0
    %1345 = vmatpush1.msra.mxu0 %v69
    %1346 = vmatprep.subr.mxu0 0.0
    %1347 = vmatpush1.msra.mxu0 %v70
    %1348 = vmatprep.subr.mxu0 0.0
    %1349 = vmatpush1.msra.mxu0 0.0
    %1350 = vmatprep.subr.mxu0 0.0
    %1351 = vmatpush1.msra.mxu0 0.0
    %1352 = vmatprep.subr.mxu0 0.0
    %1353 = vmatpush1.msra.mxu0 0.0
    %1354 = vmatprep.subr.mxu0 0.0
    %1355 = vmatpush1.msra.mxu0 0.0
    %1356 = vmatprep.subr.mxu0 0.0
    %1357 = vmatpush1.msra.mxu0 0.0
    %1358 = vmatprep.subr.mxu0 0.0
    %1359 = vmatpush1.msra.mxu0 0.0
    %1360 = vmatprep.subr.mxu0 0.0
    %1361 = vmatpush1.msra.mxu0 0.0
    %1362 = vmatprep.subr.mxu0 0.0
    %1363 = vmatpush1.msra.mxu0 0.0
    %1364 = vmatprep.subr.mxu0 0.0
    %1365 = vmatpush1.msra.mxu0 0.0
    %1366 = vmatprep.subr.mxu0 0.0
    %1367 = vmatpush1.msra.mxu0 0.0
    %1368 = vmatprep.subr.mxu0 0.0
    %1369 = vmatpush1.msra.mxu0 0.0
    %1370 = vmatprep.subr.mxu0 0.0
    %1371 = vmatpush1.msra.mxu0 0.0
    %1372 = vmatprep.subr.mxu0 0.0
    %1373 = vmatpush1.msra.mxu0 0.0
    %1374 = vmatprep.subr.mxu0 0.0
    %1375 = vmatpush1.msra.mxu0 0.0
    %1376 = vmatprep.subr.mxu0 0.0
    %1377 = vmatpush1.msra.mxu0 0.0
    %1378 = vmatprep.subr.mxu0 0.0
    %1379 = vmatpush1.msra.mxu0 0.0
    %1380 = vmatprep.subr.mxu0 0.0
    %1381 = vmatpush1.msra.mxu0 0.0
    %1382 = vmatprep.subr.mxu0 0.0
    %1383 = vmatpush1.msra.mxu0 0.0
    %1384 = vmatprep.subr.mxu0 0.0
    %1385 = vmatpush1.msra.mxu0 0.0
    %1386 = vmatprep.subr.mxu0 0.0
    %1387 = vmatpush1.msra.mxu0 0.0
    %1388 = vmatprep.subr.mxu0 0.0
    %1389 = vmatpush1.msra.mxu0 0.0
    %1390 = vmatprep.subr.mxu0 0.0
    %1391 = vmatpush1.msra.mxu0 0.0
    %1392 = vmatprep.subr.mxu0 0.0
    %1393 = vmatpush1.msra.mxu0 0.0
    %1394 = vmatprep.subr.mxu0 0.0
    %1395 = vmatpush1.msra.mxu0 0.0
    %1396 = vmatprep.subr.mxu0 0.0
    %1397 = vmatpush1.msra.mxu0 0.0
    %1398 = vmatprep.subr.mxu0 0.0
    %1399 = vmatpush1.msra.mxu0 0.0
    %1400 = vmatprep.subr.mxu0 0.0
    %1401 = vmatpush1.msra.mxu0 0.0
    %1402 = vmatprep.subr.mxu0 0.0
    %1403 = vmatpush1.msra.mxu0 0.0
    %1404 = vmatprep.mubr.f32.mxu0 0.0
    %1405 = vmatmul.mubr.f32.gmra.mrb[0].mxu0 %v1338
    %v1406 = vpop.f32.mrb[0].mxu0
    %v1407 = vadd.f32 0.0, %v1406
    %v1408 = vpop.f32.mrb[0].mxu0
    %1409 = vdwg.mxu0
    %1411 = vrot.lane.b32.xlu0 %v1334, 64
    %v1412 = vpop.permute.xlu0 %1411
    %v1413 = vsel %vm80, %v1412, 0
    %1415 = vmatprep.subr.mxu0 0.0
    %1416 = vmatpush1.msra.mxu0 %v63
    %1417 = vmatprep.subr.mxu0 0.0
    %1418 = vmatpush1.msra.mxu0 %v64
    %1419 = vmatprep.subr.mxu0 0.0
    %1420 = vmatpush1.msra.mxu0 %v65
    %1421 = vmatprep.subr.mxu0 0.0
    %1422 = vmatpush1.msra.mxu0 %v66
    %1423 = vmatprep.subr.mxu0 0.0
    %1424 = vmatpush1.msra.mxu0 0.0
    %1425 = vmatprep.subr.mxu0 0.0
    %1426 = vmatpush1.msra.mxu0 0.0
    %1427 = vmatprep.subr.mxu0 0.0
    %1428 = vmatpush1.msra.mxu0 0.0
    %1429 = vmatprep.subr.mxu0 0.0
    %1430 = vmatpush1.msra.mxu0 0.0
    %1431 = vmatprep.subr.mxu0 0.0
    %1432 = vmatpush1.msra.mxu0 0.0
    %1433 = vmatprep.subr.mxu0 0.0
    %1434 = vmatpush1.msra.mxu0 0.0
    %1435 = vmatprep.subr.mxu0 0.0
    %1436 = vmatpush1.msra.mxu0 0.0
    %1437 = vmatprep.subr.mxu0 0.0
    %1438 = vmatpush1.msra.mxu0 0.0
    %1439 = vmatprep.subr.mxu0 0.0
    %1440 = vmatpush1.msra.mxu0 0.0
    %1441 = vmatprep.subr.mxu0 0.0
    %1442 = vmatpush1.msra.mxu0 0.0
    %1443 = vmatprep.subr.mxu0 0.0
    %1444 = vmatpush1.msra.mxu0 0.0
    %1445 = vmatprep.subr.mxu0 0.0
    %1446 = vmatpush1.msra.mxu0 0.0
    %1447 = vmatprep.subr.mxu0 0.0
    %1448 = vmatpush1.msra.mxu0 0.0
    %1449 = vmatprep.subr.mxu0 0.0
    %1450 = vmatpush1.msra.mxu0 0.0
    %1451 = vmatprep.subr.mxu0 0.0
    %1452 = vmatpush1.msra.mxu0 0.0
    %1453 = vmatprep.subr.mxu0 0.0
    %1454 = vmatpush1.msra.mxu0 0.0
    %1455 = vmatprep.subr.mxu0 0.0
    %1456 = vmatpush1.msra.mxu0 0.0
    %1457 = vmatprep.subr.mxu0 0.0
    %1458 = vmatpush1.msra.mxu0 0.0
    %1459 = vmatprep.subr.mxu0 0.0
    %1460 = vmatpush1.msra.mxu0 0.0
    %1461 = vmatprep.subr.mxu0 0.0
    %1462 = vmatpush1.msra.mxu0 0.0
    %1463 = vmatprep.subr.mxu0 0.0
    %1464 = vmatpush1.msra.mxu0 0.0
    %1465 = vmatprep.subr.mxu0 0.0
    %1466 = vmatpush1.msra.mxu0 0.0
    %1467 = vmatprep.subr.mxu0 0.0
    %1468 = vmatpush1.msra.mxu0 0.0
    %1469 = vmatprep.subr.mxu0 0.0
    %1470 = vmatpush1.msra.mxu0 0.0
    %1471 = vmatprep.subr.mxu0 0.0
    %1472 = vmatpush1.msra.mxu0 0.0
    %1473 = vmatprep.subr.mxu0 0.0
    %1474 = vmatpush1.msra.mxu0 0.0
    %1475 = vmatprep.subr.mxu0 0.0
    %1476 = vmatpush1.msra.mxu0 0.0
    %1477 = vmatprep.subr.mxu0 0.0
    %1478 = vmatpush1.msra.mxu0 0.0
    %1479 = vmatprep.mubr.f32.mxu0 0.0
    %1480 = vmatmul.mubr.f32.gmra.mrb[0].mxu0 %v1413
    %v1481 = vpop.f32.mrb[0].mxu0
    %v1482 = vadd.f32 %v1407, %v1481
    %v1483 = vpop.f32.mrb[0].mxu0
    %1484 = vdwg.mxu0
    %v1485 = vadd.f32 %v1482, %v939
    %v1486 = vxor.u32 %v1485, 2147483648
    %v1487 = vmul.f32 %v1486, 1.442695
    %v1488 = vpow.pop %v1487
    %v1489 = vadd.f32 %v1488, 1.0
    %v1490 = vrcp.pop %v1489
    %v1491 = vmul.f32 1.0, %v1490
    %v1492 = vtanh.pop %v1485
    %v1493 = vmul.f32 %v1491, %v1233
    %1495 = vrot.lane.b32.xlu0 %v1492, 32
    %v1496 = vpop.permute.xlu0 %1495
    %v1498 = vmul.f32 %v1491, %v1496
    %1500 = vrot.lane.b32.xlu0 %v1498, 32
    %v1501 = vpop.permute.xlu0 %1500
    %v1503 = vadd.f32 %v1493, %v1501
    %v1504 = vtanh.pop %v1503
    %1506 = vrot.lane.b32.xlu0 %v1504, 32
    %v1507 = vpop.permute.xlu0 %1506
    %v1509 = vmul.f32 %v1491, %v1507
    %1510 = vmatprep.subr.mxu0 0.0
    %1511 = vmatpush1.msra.mxu0 %v59
    %1512 = vmatprep.subr.mxu0 0.0
    %1513 = vmatpush1.msra.mxu0 %v60
    %1514 = vmatprep.subr.mxu0 0.0
    %1515 = vmatpush1.msra.mxu0 %v61
    %1516 = vmatprep.subr.mxu0 0.0
    %1517 = vmatpush1.msra.mxu0 %v62
    %1518 = vmatprep.subr.mxu0 0.0
    %1519 = vmatpush1.msra.mxu0 0.0
    %1520 = vmatprep.subr.mxu0 0.0
    %1521 = vmatpush1.msra.mxu0 0.0
    %1522 = vmatprep.subr.mxu0 0.0
    %1523 = vmatpush1.msra.mxu0 0.0
    %1524 = vmatprep.subr.mxu0 0.0
    %1525 = vmatpush1.msra.mxu0 0.0
    %1526 = vmatprep.subr.mxu0 0.0
    %1527 = vmatpush1.msra.mxu0 0.0
    %1528 = vmatprep.subr.mxu0 0.0
    %1529 = vmatpush1.msra.mxu0 0.0
    %1530 = vmatprep.subr.mxu0 0.0
    %1531 = vmatpush1.msra.mxu0 0.0
    %1532 = vmatprep.subr.mxu0 0.0
    %1533 = vmatpush1.msra.mxu0 0.0
    %1534 = vmatprep.subr.mxu0 0.0
    %1535 = vmatpush1.msra.mxu0 0.0
    %1536 = vmatprep.subr.mxu0 0.0
    %1537 = vmatpush1.msra.mxu0 0.0
    %1538 = vmatprep.subr.mxu0 0.0
    %1539 = vmatpush1.msra.mxu0 0.0
    %1540 = vmatprep.subr.mxu0 0.0
    %1541 = vmatpush1.msra.mxu0 0.0
    %1542 = vmatprep.subr.mxu0 0.0
    %1543 = vmatpush1.msra.mxu0 0.0
    %1544 = vmatprep.subr.mxu0 0.0
    %1545 = vmatpush1.msra.mxu0 0.0
    %1546 = vmatprep.subr.mxu0 0.0
    %1547 = vmatpush1.msra.mxu0 0.0
    %1548 = vmatprep.subr.mxu0 0.0
    %1549 = vmatpush1.msra.mxu0 0.0
    %1550 = vmatprep.subr.mxu0 0.0
    %1551 = vmatpush1.msra.mxu0 0.0
    %1552 = vmatprep.subr.mxu0 0.0
    %1553 = vmatpush1.msra.mxu0 0.0
    %1554 = vmatprep.subr.mxu0 0.0
    %1555 = vmatpush1.msra.mxu0 0.0
    %1556 = vmatprep.subr.mxu0 0.0
    %1557 = vmatpush1.msra.mxu0 0.0
    %1558 = vmatprep.subr.mxu0 0.0
    %1559 = vmatpush1.msra.mxu0 0.0
    %1560 = vmatprep.subr.mxu0 0.0
    %1561 = vmatpush1.msra.mxu0 0.0
    %1562 = vmatprep.subr.mxu0 0.0
    %1563 = vmatpush1.msra.mxu0 0.0
    %1564 = vmatprep.subr.mxu0 0.0
    %1565 = vmatpush1.msra.mxu0 0.0
    %1566 = vmatprep.subr.mxu0 0.0
    %1567 = vmatpush1.msra.mxu0 0.0
    %1568 = vmatprep.subr.mxu0 0.0
    %1569 = vmatpush1.msra.mxu0 0.0
    %1570 = vmatprep.subr.mxu0 0.0
    %1571 = vmatpush1.msra.mxu0 0.0
    %1572 = vmatprep.subr.mxu0 0.0
    %1573 = vmatpush1.msra.mxu0 0.0
    %1574 = vmatprep.mubr.f32.mxu0 0.0
    %1575 = vmatmul.mubr.f32.gmra.mrb[0].mxu0 %v1413
    %v1576 = vpop.f32.mrb[0].mxu0
    %v1577 = vadd.f32 0.0, %v1576
    %v1578 = vpop.f32.mrb[0].mxu0
    %1579 = vdwg.mxu0
    %v1580 = vadd.f32 %v376, %v1577
    %v1581 = vxor.u32 %v1580, 2147483648
    %v1582 = vmul.f32 %v1581, 1.442695
    %v1583 = vpow.pop %v1582
    %v1584 = vadd.f32 %v1583, 1.0
    %v1585 = vrcp.pop %v1584
    %v1586 = vmul.f32 1.0, %v1585
    %v1587 = vtanh.pop %v1580
    %v1588 = vmul.f32 %v1586, %v1328
    %1590 = vrot.lane.b32.xlu0 %v1587, 32
    %v1591 = vpop.permute.xlu0 %1590
    %v1593 = vmul.f32 %v1586, %v1591
    %1595 = vrot.lane.b32.xlu0 %v1593, 32
    %v1596 = vpop.permute.xlu0 %1595
    %v1598 = vadd.f32 %v1588, %v1596
    %v1599 = vtanh.pop %v1598
    %1601 = vrot.lane.b32.xlu0 %v1599, 32
    %v1602 = vpop.permute.xlu0 %1601
    %v1604 = vmul.f32 %v1586, %v1602
    %1606 = vrot.lane.b32.xlu0 %v1509, 64
    %v1607 = vpop.permute.xlu0 %1606
    %v1608 = vsel %vm80, %v1607, 0
    %1610 = vmatprep.subr.mxu0 0.0
    %1611 = vmatpush1.msra.mxu0 %v67
    %1612 = vmatprep.subr.mxu0 0.0
    %1613 = vmatpush1.msra.mxu0 %v68
    %1614 = vmatprep.subr.mxu0 0.0
    %1615 = vmatpush1.msra.mxu0 %v69
    %1616 = vmatprep.subr.mxu0 0.0
    %1617 = vmatpush1.msra.mxu0 %v70
    %1618 = vmatprep.subr.mxu0 0.0
    %1619 = vmatpush1.msra.mxu0 0.0
    %1620 = vmatprep.subr.mxu0 0.0
    %1621 = vmatpush1.msra.mxu0 0.0
    %1622 = vmatprep.subr.mxu0 0.0
    %1623 = vmatpush1.msra.mxu0 0.0
    %1624 = vmatprep.subr.mxu0 0.0
    %1625 = vmatpush1.msra.mxu0 0.0
    %1626 = vmatprep.subr.mxu0 0.0
    %1627 = vmatpush1.msra.mxu0 0.0
    %1628 = vmatprep.subr.mxu0 0.0
    %1629 = vmatpush1.msra.mxu0 0.0
    %1630 = vmatprep.subr.mxu0 0.0
    %1631 = vmatpush1.msra.mxu0 0.0
    %1632 = vmatprep.subr.mxu0 0.0
    %1633 = vmatpush1.msra.mxu0 0.0
    %1634 = vmatprep.subr.mxu0 0.0
    %1635 = vmatpush1.msra.mxu0 0.0
    %1636 = vmatprep.subr.mxu0 0.0
    %1637 = vmatpush1.msra.mxu0 0.0
    %1638 = vmatprep.subr.mxu0 0.0
    %1639 = vmatpush1.msra.mxu0 0.0
    %1640 = vmatprep.subr.mxu0 0.0
    %1641 = vmatpush1.msra.mxu0 0.0
    %1642 = vmatprep.subr.mxu0 0.0
    %1643 = vmatpush1.msra.mxu0 0.0
    %1644 = vmatprep.subr.mxu0 0.0
    %1645 = vmatpush1.msra.mxu0 0.0
    %1646 = vmatprep.subr.mxu0 0.0
    %1647 = vmatpush1.msra.mxu0 0.0
    %1648 = vmatprep.subr.mxu0 0.0
    %1649 = vmatpush1.msra.mxu0 0.0
    %1650 = vmatprep.subr.mxu0 0.0
    %1651 = vmatpush1.msra.mxu0 0.0
    %1652 = vmatprep.subr.mxu0 0.0
    %1653 = vmatpush1.msra.mxu0 0.0
    %1654 = vmatprep.subr.mxu0 0.0
    %1655 = vmatpush1.msra.mxu0 0.0
    %1656 = vmatprep.subr.mxu0 0.0
    %1657 = vmatpush1.msra.mxu0 0.0
    %1658 = vmatprep.subr.mxu0 0.0
    %1659 = vmatpush1.msra.mxu0 0.0
    %1660 = vmatprep.subr.mxu0 0.0
    %1661 = vmatpush1.msra.mxu0 0.0
    %1662 = vmatprep.subr.mxu0 0.0
    %1663 = vmatpush1.msra.mxu0 0.0
    %1664 = vmatprep.subr.mxu0 0.0
    %1665 = vmatpush1.msra.mxu0 0.0
    %1666 = vmatprep.subr.mxu0 0.0
    %1667 = vmatpush1.msra.mxu0 0.0
    %1668 = vmatprep.subr.mxu0 0.0
    %1669 = vmatpush1.msra.mxu0 0.0
    %1670 = vmatprep.subr.mxu0 0.0
    %1671 = vmatpush1.msra.mxu0 0.0
    %1672 = vmatprep.subr.mxu0 0.0
    %1673 = vmatpush1.msra.mxu0 0.0
    %1674 = vmatprep.mubr.f32.mxu0 0.0
    %1675 = vmatmul.mubr.f32.gmra.mrb[0].mxu0 %v1608
    %v1676 = vpop.f32.mrb[0].mxu0
    %v1677 = vadd.f32 0.0, %v1676
    %v1678 = vpop.f32.mrb[0].mxu0
    %1679 = vdwg.mxu0
    %1681 = vrot.lane.b32.xlu0 %v1604, 64
    %v1682 = vpop.permute.xlu0 %1681
    %v1683 = vsel %vm80, %v1682, 0
    %1685 = vmatprep.subr.mxu0 0.0
    %1686 = vmatpush1.msra.mxu0 %v63
    %1687 = vmatprep.subr.mxu0 0.0
    %1688 = vmatpush1.msra.mxu0 %v64
    %1689 = vmatprep.subr.mxu0 0.0
    %1690 = vmatpush1.msra.mxu0 %v65
    %1691 = vmatprep.subr.mxu0 0.0
    %1692 = vmatpush1.msra.mxu0 %v66
    %1693 = vmatprep.subr.mxu0 0.0
    %1694 = vmatpush1.msra.mxu0 0.0
    %1695 = vmatprep.subr.mxu0 0.0
    %1696 = vmatpush1.msra.mxu0 0.0
    %1697 = vmatprep.subr.mxu0 0.0
    %1698 = vmatpush1.msra.mxu0 0.0
    %1699 = vmatprep.subr.mxu0 0.0
    %1700 = vmatpush1.msra.mxu0 0.0
    %1701 = vmatprep.subr.mxu0 0.0
    %1702 = vmatpush1.msra.mxu0 0.0
    %1703 = vmatprep.subr.mxu0 0.0
    %1704 = vmatpush1.msra.mxu0 0.0
    %1705 = vmatprep.subr.mxu0 0.0
    %1706 = vmatpush1.msra.mxu0 0.0
    %1707 = vmatprep.subr.mxu0 0.0
    %1708 = vmatpush1.msra.mxu0 0.0
    %1709 = vmatprep.subr.mxu0 0.0
    %1710 = vmatpush1.msra.mxu0 0.0
    %1711 = vmatprep.subr.mxu0 0.0
    %1712 = vmatpush1.msra.mxu0 0.0
    %1713 = vmatprep.subr.mxu0 0.0
    %1714 = vmatpush1.msra.mxu0 0.0
    %1715 = vmatprep.subr.mxu0 0.0
    %1716 = vmatpush1.msra.mxu0 0.0
    %1717 = vmatprep.subr.mxu0 0.0
    %1718 = vmatpush1.msra.mxu0 0.0
    %1719 = vmatprep.subr.mxu0 0.0
    %1720 = vmatpush1.msra.mxu0 0.0
    %1721 = vmatprep.subr.mxu0 0.0
    %1722 = vmatpush1.msra.mxu0 0.0
    %1723 = vmatprep.subr.mxu0 0.0
    %1724 = vmatpush1.msra.mxu0 0.0
    %1725 = vmatprep.subr.mxu0 0.0
    %1726 = vmatpush1.msra.mxu0 0.0
    %1727 = vmatprep.subr.mxu0 0.0
    %1728 = vmatpush1.msra.mxu0 0.0
    %1729 = vmatprep.subr.mxu0 0.0
    %1730 = vmatpush1.msra.mxu0 0.0
    %1731 = vmatprep.subr.mxu0 0.0
    %1732 = vmatpush1.msra.mxu0 0.0
    %1733 = vmatprep.subr.mxu0 0.0
    %1734 = vmatpush1.msra.mxu0 0.0
    %1735 = vmatprep.subr.mxu0 0.0
    %1736 = vmatpush1.msra.mxu0 0.0
    %1737 = vmatprep.subr.mxu0 0.0
    %1738 = vmatpush1.msra.mxu0 0.0
    %1739 = vmatprep.subr.mxu0 0.0
    %1740 = vmatpush1.msra.mxu0 0.0
    %1741 = vmatprep.subr.mxu0 0.0
    %1742 = vmatpush1.msra.mxu0 0.0
    %1743 = vmatprep.subr.mxu0 0.0
    %1744 = vmatpush1.msra.mxu0 0.0
    %1745 = vmatprep.subr.mxu0 0.0
    %1746 = vmatpush1.msra.mxu0 0.0
    %1747 = vmatprep.subr.mxu0 0.0
    %1748 = vmatpush1.msra.mxu0 0.0
    %1749 = vmatprep.mubr.f32.mxu0 0.0
    %1750 = vmatmul.mubr.f32.gmra.mrb[0].mxu0 %v1683
    %v1751 = vpop.f32.mrb[0].mxu0
    %v1752 = vadd.f32 %v1677, %v1751
    %v1753 = vpop.f32.mrb[0].mxu0
    %1754 = vdwg.mxu0
    %v1755 = vadd.f32 %v1752, %v939
    %v1756 = vxor.u32 %v1755, 2147483648
    %v1757 = vmul.f32 %v1756, 1.442695
    %v1758 = vpow.pop %v1757
    %v1759 = vadd.f32 %v1758, 1.0
    %v1760 = vrcp.pop %v1759
    %v1761 = vmul.f32 1.0, %v1760
    %v1762 = vtanh.pop %v1755
    %v1763 = vmul.f32 %v1761, %v1503
    %1765 = vrot.lane.b32.xlu0 %v1762, 32
    %v1766 = vpop.permute.xlu0 %1765
    %v1768 = vmul.f32 %v1761, %v1766
    %1770 = vrot.lane.b32.xlu0 %v1768, 32
    %v1771 = vpop.permute.xlu0 %1770
    %v1773 = vadd.f32 %v1763, %v1771
    %v1774 = vtanh.pop %v1773
    %1776 = vrot.lane.b32.xlu0 %v1774, 32
    %v1777 = vpop.permute.xlu0 %1776
    %v1779 = vmul.f32 %v1761, %v1777
    %1780 = vmatprep.subr.mxu0 0.0
    %1781 = vmatpush1.msra.mxu0 %v59
    %1782 = vmatprep.subr.mxu0 0.0
    %1783 = vmatpush1.msra.mxu0 %v60
    %1784 = vmatprep.subr.mxu0 0.0
    %1785 = vmatpush1.msra.mxu0 %v61
    %1786 = vmatprep.subr.mxu0 0.0
    %1787 = vmatpush1.msra.mxu0 %v62
    %1788 = vmatprep.subr.mxu0 0.0
    %1789 = vmatpush1.msra.mxu0 0.0
    %1790 = vmatprep.subr.mxu0 0.0
    %1791 = vmatpush1.msra.mxu0 0.0
    %1792 = vmatprep.subr.mxu0 0.0
    %1793 = vmatpush1.msra.mxu0 0.0
    %1794 = vmatprep.subr.mxu0 0.0
    %1795 = vmatpush1.msra.mxu0 0.0
    %1796 = vmatprep.subr.mxu0 0.0
    %1797 = vmatpush1.msra.mxu0 0.0
    %1798 = vmatprep.subr.mxu0 0.0
    %1799 = vmatpush1.msra.mxu0 0.0
    %1800 = vmatprep.subr.mxu0 0.0
    %1801 = vmatpush1.msra.mxu0 0.0
    %1802 = vmatprep.subr.mxu0 0.0
    %1803 = vmatpush1.msra.mxu0 0.0
    %1804 = vmatprep.subr.mxu0 0.0
    %1805 = vmatpush1.msra.mxu0 0.0
    %1806 = vmatprep.subr.mxu0 0.0
    %1807 = vmatpush1.msra.mxu0 0.0
    %1808 = vmatprep.subr.mxu0 0.0
    %1809 = vmatpush1.msra.mxu0 0.0
    %1810 = vmatprep.subr.mxu0 0.0
    %1811 = vmatpush1.msra.mxu0 0.0
    %1812 = vmatprep.subr.mxu0 0.0
    %1813 = vmatpush1.msra.mxu0 0.0
    %1814 = vmatprep.subr.mxu0 0.0
    %1815 = vmatpush1.msra.mxu0 0.0
    %1816 = vmatprep.subr.mxu0 0.0
    %1817 = vmatpush1.msra.mxu0 0.0
    %1818 = vmatprep.subr.mxu0 0.0
    %1819 = vmatpush1.msra.mxu0 0.0
    %1820 = vmatprep.subr.mxu0 0.0
    %1821 = vmatpush1.msra.mxu0 0.0
    %1822 = vmatprep.subr.mxu0 0.0
    %1823 = vmatpush1.msra.mxu0 0.0
    %1824 = vmatprep.subr.mxu0 0.0
    %1825 = vmatpush1.msra.mxu0 0.0
    %1826 = vmatprep.subr.mxu0 0.0
    %1827 = vmatpush1.msra.mxu0 0.0
    %1828 = vmatprep.subr.mxu0 0.0
    %1829 = vmatpush1.msra.mxu0 0.0
    %1830 = vmatprep.subr.mxu0 0.0
    %1831 = vmatpush1.msra.mxu0 0.0
    %1832 = vmatprep.subr.mxu0 0.0
    %1833 = vmatpush1.msra.mxu0 0.0
    %1834 = vmatprep.subr.mxu0 0.0
    %1835 = vmatpush1.msra.mxu0 0.0
    %1836 = vmatprep.subr.mxu0 0.0
    %1837 = vmatpush1.msra.mxu0 0.0
    %1838 = vmatprep.subr.mxu0 0.0
    %1839 = vmatpush1.msra.mxu0 0.0
    %1840 = vmatprep.subr.mxu0 0.0
    %1841 = vmatpush1.msra.mxu0 0.0
    %1842 = vmatprep.subr.mxu0 0.0
    %1843 = vmatpush1.msra.mxu0 0.0
    %1844 = vmatprep.mubr.f32.mxu0 0.0
    %1845 = vmatmul.mubr.f32.gmra.mrb[0].mxu0 %v1683
    %v1846 = vpop.f32.mrb[0].mxu0
    %v1847 = vadd.f32 0.0, %v1846
    %v1848 = vpop.f32.mrb[0].mxu0
    %1849 = vdwg.mxu0
    %v1850 = vadd.f32 %v451, %v1847
    %v1851 = vxor.u32 %v1850, 2147483648
    %v1852 = vmul.f32 %v1851, 1.442695
    %v1853 = vpow.pop %v1852
    %v1854 = vadd.f32 %v1853, 1.0
    %v1855 = vrcp.pop %v1854
    %v1856 = vmul.f32 1.0, %v1855
    %v1857 = vtanh.pop %v1850
    %v1858 = vmul.f32 %v1856, %v1598
    %1860 = vrot.lane.b32.xlu0 %v1857, 32
    %v1861 = vpop.permute.xlu0 %1860
    %v1863 = vmul.f32 %v1856, %v1861
    %1865 = vrot.lane.b32.xlu0 %v1863, 32
    %v1866 = vpop.permute.xlu0 %1865
    %v1868 = vadd.f32 %v1858, %v1866
    %v1869 = vtanh.pop %v1868
    %1871 = vrot.lane.b32.xlu0 %v1869, 32
    %v1872 = vpop.permute.xlu0 %1871
    %v1874 = vmul.f32 %v1856, %v1872
    %1876 = vrot.lane.b32.xlu0 %v1779, 64
    %v1877 = vpop.permute.xlu0 %1876
    %v1878 = vsel %vm80, %v1877, 0
    %1880 = vmatprep.subr.mxu0 0.0
    %1881 = vmatpush1.msra.mxu0 %v67
    %1882 = vmatprep.subr.mxu0 0.0
    %1883 = vmatpush1.msra.mxu0 %v68
    %1884 = vmatprep.subr.mxu0 0.0
    %1885 = vmatpush1.msra.mxu0 %v69
    %1886 = vmatprep.subr.mxu0 0.0
    %1887 = vmatpush1.msra.mxu0 %v70
    %1888 = vmatprep.subr.mxu0 0.0
    %1889 = vmatpush1.msra.mxu0 0.0
    %1890 = vmatprep.subr.mxu0 0.0
    %1891 = vmatpush1.msra.mxu0 0.0
    %1892 = vmatprep.subr.mxu0 0.0
    %1893 = vmatpush1.msra.mxu0 0.0
    %1894 = vmatprep.subr.mxu0 0.0
    %1895 = vmatpush1.msra.mxu0 0.0
    %1896 = vmatprep.subr.mxu0 0.0
    %1897 = vmatpush1.msra.mxu0 0.0
    %1898 = vmatprep.subr.mxu0 0.0
    %1899 = vmatpush1.msra.mxu0 0.0
    %1900 = vmatprep.subr.mxu0 0.0
    %1901 = vmatpush1.msra.mxu0 0.0
    %1902 = vmatprep.subr.mxu0 0.0
    %1903 = vmatpush1.msra.mxu0 0.0
    %1904 = vmatprep.subr.mxu0 0.0
    %1905 = vmatpush1.msra.mxu0 0.0
    %1906 = vmatprep.subr.mxu0 0.0
    %1907 = vmatpush1.msra.mxu0 0.0
    %1908 = vmatprep.subr.mxu0 0.0
    %1909 = vmatpush1.msra.mxu0 0.0
    %1910 = vmatprep.subr.mxu0 0.0
    %1911 = vmatpush1.msra.mxu0 0.0
    %1912 = vmatprep.subr.mxu0 0.0
    %1913 = vmatpush1.msra.mxu0 0.0
    %1914 = vmatprep.subr.mxu0 0.0
    %1915 = vmatpush1.msra.mxu0 0.0
    %1916 = vmatprep.subr.mxu0 0.0
    %1917 = vmatpush1.msra.mxu0 0.0
    %1918 = vmatprep.subr.mxu0 0.0
    %1919 = vmatpush1.msra.mxu0 0.0
    %1920 = vmatprep.subr.mxu0 0.0
    %1921 = vmatpush1.msra.mxu0 0.0
    %1922 = vmatprep.subr.mxu0 0.0
    %1923 = vmatpush1.msra.mxu0 0.0
    %1924 = vmatprep.subr.mxu0 0.0
    %1925 = vmatpush1.msra.mxu0 0.0
    %1926 = vmatprep.subr.mxu0 0.0
    %1927 = vmatpush1.msra.mxu0 0.0
    %1928 = vmatprep.subr.mxu0 0.0
    %1929 = vmatpush1.msra.mxu0 0.0
    %1930 = vmatprep.subr.mxu0 0.0
    %1931 = vmatpush1.msra.mxu0 0.0
    %1932 = vmatprep.subr.mxu0 0.0
    %1933 = vmatpush1.msra.mxu0 0.0
    %1934 = vmatprep.subr.mxu0 0.0
    %1935 = vmatpush1.msra.mxu0 0.0
    %1936 = vmatprep.subr.mxu0 0.0
    %1937 = vmatpush1.msra.mxu0 0.0
    %1938 = vmatprep.subr.mxu0 0.0
    %1939 = vmatpush1.msra.mxu0 0.0
    %1940 = vmatprep.subr.mxu0 0.0
    %1941 = vmatpush1.msra.mxu0 0.0
    %1942 = vmatprep.subr.mxu0 0.0
    %1943 = vmatpush1.msra.mxu0 0.0
    %1944 = vmatprep.mubr.f32.mxu0 0.0
    %1945 = vmatmul.mubr.f32.gmra.mrb[0].mxu0 %v1878
    %v1946 = vpop.f32.mrb[0].mxu0
    %v1947 = vadd.f32 0.0, %v1946
    %v1948 = vpop.f32.mrb[0].mxu0
    %1949 = vdwg.mxu0
    %1951 = vrot.lane.b32.xlu0 %v1874, 64
    %v1952 = vpop.permute.xlu0 %1951
    %v1953 = vsel %vm80, %v1952, 0
    %1955 = vmatprep.subr.mxu0 0.0
    %1956 = vmatpush1.msra.mxu0 %v63
    %1957 = vmatprep.subr.mxu0 0.0
    %1958 = vmatpush1.msra.mxu0 %v64
    %1959 = vmatprep.subr.mxu0 0.0
    %1960 = vmatpush1.msra.mxu0 %v65
    %1961 = vmatprep.subr.mxu0 0.0
    %1962 = vmatpush1.msra.mxu0 %v66
    %1963 = vmatprep.subr.mxu0 0.0
    %1964 = vmatpush1.msra.mxu0 0.0
    %1965 = vmatprep.subr.mxu0 0.0
    %1966 = vmatpush1.msra.mxu0 0.0
    %1967 = vmatprep.subr.mxu0 0.0
    %1968 = vmatpush1.msra.mxu0 0.0
    %1969 = vmatprep.subr.mxu0 0.0
    %1970 = vmatpush1.msra.mxu0 0.0
    %1971 = vmatprep.subr.mxu0 0.0
    %1972 = vmatpush1.msra.mxu0 0.0
    %1973 = vmatprep.subr.mxu0 0.0
    %1974 = vmatpush1.msra.mxu0 0.0
    %1975 = vmatprep.subr.mxu0 0.0
    %1976 = vmatpush1.msra.mxu0 0.0
    %1977 = vmatprep.subr.mxu0 0.0
    %1978 = vmatpush1.msra.mxu0 0.0
    %1979 = vmatprep.subr.mxu0 0.0
    %1980 = vmatpush1.msra.mxu0 0.0
    %1981 = vmatprep.subr.mxu0 0.0
    %1982 = vmatpush1.msra.mxu0 0.0
    %1983 = vmatprep.subr.mxu0 0.0
    %1984 = vmatpush1.msra.mxu0 0.0
    %1985 = vmatprep.subr.mxu0 0.0
    %1986 = vmatpush1.msra.mxu0 0.0
    %1987 = vmatprep.subr.mxu0 0.0
    %1988 = vmatpush1.msra.mxu0 0.0
    %1989 = vmatprep.subr.mxu0 0.0
    %1990 = vmatpush1.msra.mxu0 0.0
    %1991 = vmatprep.subr.mxu0 0.0
    %1992 = vmatpush1.msra.mxu0 0.0
    %1993 = vmatprep.subr.mxu0 0.0
    %1994 = vmatpush1.msra.mxu0 0.0
    %1995 = vmatprep.subr.mxu0 0.0
    %1996 = vmatpush1.msra.mxu0 0.0
    %1997 = vmatprep.subr.mxu0 0.0
    %1998 = vmatpush1.msra.mxu0 0.0
    %1999 = vmatprep.subr.mxu0 0.0
    %2000 = vmatpush1.msra.mxu0 0.0
    %2001 = vmatprep.subr.mxu0 0.0
    %2002 = vmatpush1.msra.mxu0 0.0
    %2003 = vmatprep.subr.mxu0 0.0
    %2004 = vmatpush1.msra.mxu0 0.0
    %2005 = vmatprep.subr.mxu0 0.0
    %2006 = vmatpush1.msra.mxu0 0.0
    %2007 = vmatprep.subr.mxu0 0.0
    %2008 = vmatpush1.msra.mxu0 0.0
    %2009 = vmatprep.subr.mxu0 0.0
    %2010 = vmatpush1.msra.mxu0 0.0
    %2011 = vmatprep.subr.mxu0 0.0
    %2012 = vmatpush1.msra.mxu0 0.0
    %2013 = vmatprep.subr.mxu0 0.0
    %2014 = vmatpush1.msra.mxu0 0.0
    %2015 = vmatprep.subr.mxu0 0.0
    %2016 = vmatpush1.msra.mxu0 0.0
    %2017 = vmatprep.subr.mxu0 0.0
    %2018 = vmatpush1.msra.mxu0 0.0
    %2019 = vmatprep.mubr.f32.mxu0 0.0
    %2020 = vmatmul.mubr.f32.gmra.mrb[0].mxu0 %v1953
    %v2021 = vpop.f32.mrb[0].mxu0
    %v2022 = vadd.f32 %v1947, %v2021
    %v2023 = vpop.f32.mrb[0].mxu0
    %2024 = vdwg.mxu0
    %v2025 = vadd.f32 %v2022, %v939
    %v2026 = vxor.u32 %v2025, 2147483648
    %v2027 = vmul.f32 %v2026, 1.442695
    %v2028 = vpow.pop %v2027
    %v2029 = vadd.f32 %v2028, 1.0
    %v2030 = vrcp.pop %v2029
    %v2031 = vmul.f32 1.0, %v2030
    %v2032 = vtanh.pop %v2025
    %v2033 = vmul.f32 %v2031, %v1773
    %2035 = vrot.lane.b32.xlu0 %v2032, 32
    %v2036 = vpop.permute.xlu0 %2035
    %v2038 = vmul.f32 %v2031, %v2036
    %2040 = vrot.lane.b32.xlu0 %v2038, 32
    %v2041 = vpop.permute.xlu0 %2040
    %v2043 = vadd.f32 %v2033, %v2041
    %v2044 = vtanh.pop %v2043
    %2046 = vrot.lane.b32.xlu0 %v2044, 32
    %v2047 = vpop.permute.xlu0 %2046
    %v2049 = vmul.f32 %v2031, %v2047
    %2050 = vmatprep.subr.mxu0 0.0
    %2051 = vmatpush1.msra.mxu0 %v59
    %2052 = vmatprep.subr.mxu0 0.0
    %2053 = vmatpush1.msra.mxu0 %v60
    %2054 = vmatprep.subr.mxu0 0.0
    %2055 = vmatpush1.msra.mxu0 %v61
    %2056 = vmatprep.subr.mxu0 0.0
    %2057 = vmatpush1.msra.mxu0 %v62
    %2058 = vmatprep.subr.mxu0 0.0
    %2059 = vmatpush1.msra.mxu0 0.0
    %2060 = vmatprep.subr.mxu0 0.0
    %2061 = vmatpush1.msra.mxu0 0.0
    %2062 = vmatprep.subr.mxu0 0.0
    %2063 = vmatpush1.msra.mxu0 0.0
    %2064 = vmatprep.subr.mxu0 0.0
    %2065 = vmatpush1.msra.mxu0 0.0
    %2066 = vmatprep.subr.mxu0 0.0
    %2067 = vmatpush1.msra.mxu0 0.0
    %2068 = vmatprep.subr.mxu0 0.0
    %2069 = vmatpush1.msra.mxu0 0.0
    %2070 = vmatprep.subr.mxu0 0.0
    %2071 = vmatpush1.msra.mxu0 0.0
    %2072 = vmatprep.subr.mxu0 0.0
    %2073 = vmatpush1.msra.mxu0 0.0
    %2074 = vmatprep.subr.mxu0 0.0
    %2075 = vmatpush1.msra.mxu0 0.0
    %2076 = vmatprep.subr.mxu0 0.0
    %2077 = vmatpush1.msra.mxu0 0.0
    %2078 = vmatprep.subr.mxu0 0.0
    %2079 = vmatpush1.msra.mxu0 0.0
    %2080 = vmatprep.subr.mxu0 0.0
    %2081 = vmatpush1.msra.mxu0 0.0
    %2082 = vmatprep.subr.mxu0 0.0
    %2083 = vmatpush1.msra.mxu0 0.0
    %2084 = vmatprep.subr.mxu0 0.0
    %2085 = vmatpush1.msra.mxu0 0.0
    %2086 = vmatprep.subr.mxu0 0.0
    %2087 = vmatpush1.msra.mxu0 0.0
    %2088 = vmatprep.subr.mxu0 0.0
    %2089 = vmatpush1.msra.mxu0 0.0
    %2090 = vmatprep.subr.mxu0 0.0
    %2091 = vmatpush1.msra.mxu0 0.0
    %2092 = vmatprep.subr.mxu0 0.0
    %2093 = vmatpush1.msra.mxu0 0.0
    %2094 = vmatprep.subr.mxu0 0.0
    %2095 = vmatpush1.msra.mxu0 0.0
    %2096 = vmatprep.subr.mxu0 0.0
    %2097 = vmatpush1.msra.mxu0 0.0
    %2098 = vmatprep.subr.mxu0 0.0
    %2099 = vmatpush1.msra.mxu0 0.0
    %2100 = vmatprep.subr.mxu0 0.0
    %2101 = vmatpush1.msra.mxu0 0.0
    %2102 = vmatprep.subr.mxu0 0.0
    %2103 = vmatpush1.msra.mxu0 0.0
    %2104 = vmatprep.subr.mxu0 0.0
    %2105 = vmatpush1.msra.mxu0 0.0
    %2106 = vmatprep.subr.mxu0 0.0
    %2107 = vmatpush1.msra.mxu0 0.0
    %2108 = vmatprep.subr.mxu0 0.0
    %2109 = vmatpush1.msra.mxu0 0.0
    %2110 = vmatprep.subr.mxu0 0.0
    %2111 = vmatpush1.msra.mxu0 0.0
    %2112 = vmatprep.subr.mxu0 0.0
    %2113 = vmatpush1.msra.mxu0 0.0
    %2114 = vmatprep.mubr.f32.mxu0 0.0
    %2115 = vmatmul.mubr.f32.gmra.mrb[0].mxu0 %v1953
    %v2116 = vpop.f32.mrb[0].mxu0
    %v2117 = vadd.f32 0.0, %v2116
    %v2118 = vpop.f32.mrb[0].mxu0
    %2119 = vdwg.mxu0
    %v2120 = vadd.f32 %v526, %v2117
    %v2121 = vxor.u32 %v2120, 2147483648
    %v2122 = vmul.f32 %v2121, 1.442695
    %v2123 = vpow.pop %v2122
    %v2124 = vadd.f32 %v2123, 1.0
    %v2125 = vrcp.pop %v2124
    %v2126 = vmul.f32 1.0, %v2125
    %v2127 = vtanh.pop %v2120
    %v2128 = vmul.f32 %v2126, %v1868
    %2130 = vrot.lane.b32.xlu0 %v2127, 32
    %v2131 = vpop.permute.xlu0 %2130
    %v2133 = vmul.f32 %v2126, %v2131
    %2135 = vrot.lane.b32.xlu0 %v2133, 32
    %v2136 = vpop.permute.xlu0 %2135
    %v2138 = vadd.f32 %v2128, %v2136
    %v2139 = vtanh.pop %v2138
    %2141 = vrot.lane.b32.xlu0 %v2139, 32
    %v2142 = vpop.permute.xlu0 %2141
    %v2144 = vmul.f32 %v2126, %v2142
    %2146 = vrot.lane.b32.xlu0 %v2049, 64
    %v2147 = vpop.permute.xlu0 %2146
    %v2148 = vsel %vm80, %v2147, 0
    %2150 = vmatprep.subr.mxu0 0.0
    %2151 = vmatpush1.msra.mxu0 %v67
    %2152 = vmatprep.subr.mxu0 0.0
    %2153 = vmatpush1.msra.mxu0 %v68
    %2154 = vmatprep.subr.mxu0 0.0
    %2155 = vmatpush1.msra.mxu0 %v69
    %2156 = vmatprep.subr.mxu0 0.0
    %2157 = vmatpush1.msra.mxu0 %v70
    %2158 = vmatprep.subr.mxu0 0.0
    %2159 = vmatpush1.msra.mxu0 0.0
    %2160 = vmatprep.subr.mxu0 0.0
    %2161 = vmatpush1.msra.mxu0 0.0
    %2162 = vmatprep.subr.mxu0 0.0
    %2163 = vmatpush1.msra.mxu0 0.0
    %2164 = vmatprep.subr.mxu0 0.0
    %2165 = vmatpush1.msra.mxu0 0.0
    %2166 = vmatprep.subr.mxu0 0.0
    %2167 = vmatpush1.msra.mxu0 0.0
    %2168 = vmatprep.subr.mxu0 0.0
    %2169 = vmatpush1.msra.mxu0 0.0
    %2170 = vmatprep.subr.mxu0 0.0
    %2171 = vmatpush1.msra.mxu0 0.0
    %2172 = vmatprep.subr.mxu0 0.0
    %2173 = vmatpush1.msra.mxu0 0.0
    %2174 = vmatprep.subr.mxu0 0.0
    %2175 = vmatpush1.msra.mxu0 0.0
    %2176 = vmatprep.subr.mxu0 0.0
    %2177 = vmatpush1.msra.mxu0 0.0
    %2178 = vmatprep.subr.mxu0 0.0
    %2179 = vmatpush1.msra.mxu0 0.0
    %2180 = vmatprep.subr.mxu0 0.0
    %2181 = vmatpush1.msra.mxu0 0.0
    %2182 = vmatprep.subr.mxu0 0.0
    %2183 = vmatpush1.msra.mxu0 0.0
    %2184 = vmatprep.subr.mxu0 0.0
    %2185 = vmatpush1.msra.mxu0 0.0
    %2186 = vmatprep.subr.mxu0 0.0
    %2187 = vmatpush1.msra.mxu0 0.0
    %2188 = vmatprep.subr.mxu0 0.0
    %2189 = vmatpush1.msra.mxu0 0.0
    %2190 = vmatprep.subr.mxu0 0.0
    %2191 = vmatpush1.msra.mxu0 0.0
    %2192 = vmatprep.subr.mxu0 0.0
    %2193 = vmatpush1.msra.mxu0 0.0
    %2194 = vmatprep.subr.mxu0 0.0
    %2195 = vmatpush1.msra.mxu0 0.0
    %2196 = vmatprep.subr.mxu0 0.0
    %2197 = vmatpush1.msra.mxu0 0.0
    %2198 = vmatprep.subr.mxu0 0.0
    %2199 = vmatpush1.msra.mxu0 0.0
    %2200 = vmatprep.subr.mxu0 0.0
    %2201 = vmatpush1.msra.mxu0 0.0
    %2202 = vmatprep.subr.mxu0 0.0
    %2203 = vmatpush1.msra.mxu0 0.0
    %2204 = vmatprep.subr.mxu0 0.0
    %2205 = vmatpush1.msra.mxu0 0.0
    %2206 = vmatprep.subr.mxu0 0.0
    %2207 = vmatpush1.msra.mxu0 0.0
    %2208 = vmatprep.subr.mxu0 0.0
    %2209 = vmatpush1.msra.mxu0 0.0
    %2210 = vmatprep.subr.mxu0 0.0
    %2211 = vmatpush1.msra.mxu0 0.0
    %2212 = vmatprep.subr.mxu0 0.0
    %2213 = vmatpush1.msra.mxu0 0.0
    %2214 = vmatprep.mubr.f32.mxu0 0.0
    %2215 = vmatmul.mubr.f32.gmra.mrb[0].mxu0 %v2148
    %v2216 = vpop.f32.mrb[0].mxu0
    %v2217 = vadd.f32 0.0, %v2216
    %v2218 = vpop.f32.mrb[0].mxu0
    %2219 = vdwg.mxu0
    %2221 = vrot.lane.b32.xlu0 %v2144, 64
    %v2222 = vpop.permute.xlu0 %2221
    %v2223 = vsel %vm80, %v2222, 0
    %2225 = vmatprep.subr.mxu0 0.0
    %2226 = vmatpush1.msra.mxu0 %v63
    %2227 = vmatprep.subr.mxu0 0.0
    %2228 = vmatpush1.msra.mxu0 %v64
    %2229 = vmatprep.subr.mxu0 0.0
    %2230 = vmatpush1.msra.mxu0 %v65
    %2231 = vmatprep.subr.mxu0 0.0
    %2232 = vmatpush1.msra.mxu0 %v66
    %2233 = vmatprep.subr.mxu0 0.0
    %2234 = vmatpush1.msra.mxu0 0.0
    %2235 = vmatprep.subr.mxu0 0.0
    %2236 = vmatpush1.msra.mxu0 0.0
    %2237 = vmatprep.subr.mxu0 0.0
    %2238 = vmatpush1.msra.mxu0 0.0
    %2239 = vmatprep.subr.mxu0 0.0
    %2240 = vmatpush1.msra.mxu0 0.0
    %2241 = vmatprep.subr.mxu0 0.0
    %2242 = vmatpush1.msra.mxu0 0.0
    %2243 = vmatprep.subr.mxu0 0.0
    %2244 = vmatpush1.msra.mxu0 0.0
    %2245 = vmatprep.subr.mxu0 0.0
    %2246 = vmatpush1.msra.mxu0 0.0
    %2247 = vmatprep.subr.mxu0 0.0
    %2248 = vmatpush1.msra.mxu0 0.0
    %2249 = vmatprep.subr.mxu0 0.0
    %2250 = vmatpush1.msra.mxu0 0.0
    %2251 = vmatprep.subr.mxu0 0.0
    %2252 = vmatpush1.msra.mxu0 0.0
    %2253 = vmatprep.subr.mxu0 0.0
    %2254 = vmatpush1.msra.mxu0 0.0
    %2255 = vmatprep.subr.mxu0 0.0
    %2256 = vmatpush1.msra.mxu0 0.0
    %2257 = vmatprep.subr.mxu0 0.0
    %2258 = vmatpush1.msra.mxu0 0.0
    %2259 = vmatprep.subr.mxu0 0.0
    %2260 = vmatpush1.msra.mxu0 0.0
    %2261 = vmatprep.subr.mxu0 0.0
    %2262 = vmatpush1.msra.mxu0 0.0
    %2263 = vmatprep.subr.mxu0 0.0
    %2264 = vmatpush1.msra.mxu0 0.0
    %2265 = vmatprep.subr.mxu0 0.0
    %2266 = vmatpush1.msra.mxu0 0.0
    %2267 = vmatprep.subr.mxu0 0.0
    %2268 = vmatpush1.msra.mxu0 0.0
    %2269 = vmatprep.subr.mxu0 0.0
    %2270 = vmatpush1.msra.mxu0 0.0
    %2271 = vmatprep.subr.mxu0 0.0
    %2272 = vmatpush1.msra.mxu0 0.0
    %2273 = vmatprep.subr.mxu0 0.0
    %2274 = vmatpush1.msra.mxu0 0.0
    %2275 = vmatprep.subr.mxu0 0.0
    %2276 = vmatpush1.msra.mxu0 0.0
    %2277 = vmatprep.subr.mxu0 0.0
    %2278 = vmatpush1.msra.mxu0 0.0
    %2279 = vmatprep.subr.mxu0 0.0
    %2280 = vmatpush1.msra.mxu0 0.0
    %2281 = vmatprep.subr.mxu0 0.0
    %2282 = vmatpush1.msra.mxu0 0.0
    %2283 = vmatprep.subr.mxu0 0.0
    %2284 = vmatpush1.msra.mxu0 0.0
    %2285 = vmatprep.subr.mxu0 0.0
    %2286 = vmatpush1.msra.mxu0 0.0
    %2287 = vmatprep.subr.mxu0 0.0
    %2288 = vmatpush1.msra.mxu0 0.0
    %2289 = vmatprep.mubr.f32.mxu0 0.0
    %2290 = vmatmul.mubr.f32.gmra.mrb[0].mxu0 %v2223
    %v2291 = vpop.f32.mrb[0].mxu0
    %v2292 = vadd.f32 %v2217, %v2291
    %v2293 = vpop.f32.mrb[0].mxu0
    %2294 = vdwg.mxu0
    %v2295 = vadd.f32 %v2292, %v939
    %v2296 = vxor.u32 %v2295, 2147483648
    %v2297 = vmul.f32 %v2296, 1.442695
    %v2298 = vpow.pop %v2297
    %v2299 = vadd.f32 %v2298, 1.0
    %v2300 = vrcp.pop %v2299
    %v2301 = vmul.f32 1.0, %v2300
    %v2302 = vtanh.pop %v2295
    %v2303 = vmul.f32 %v2301, %v2043
    %2305 = vrot.lane.b32.xlu0 %v2302, 32
    %v2306 = vpop.permute.xlu0 %2305
    %v2308 = vmul.f32 %v2301, %v2306
    %2310 = vrot.lane.b32.xlu0 %v2308, 32
    %v2311 = vpop.permute.xlu0 %2310
    %v2313 = vadd.f32 %v2303, %v2311
    %v2314 = vtanh.pop %v2313
    %2316 = vrot.lane.b32.xlu0 %v2314, 32
    %v2317 = vpop.permute.xlu0 %2316
    %v2319 = vmul.f32 %v2301, %v2317
    %2320 = vmatprep.subr.mxu0 0.0
    %2321 = vmatpush1.msra.mxu0 %v59
    %2322 = vmatprep.subr.mxu0 0.0
    %2323 = vmatpush1.msra.mxu0 %v60
    %2324 = vmatprep.subr.mxu0 0.0
    %2325 = vmatpush1.msra.mxu0 %v61
    %2326 = vmatprep.subr.mxu0 0.0
    %2327 = vmatpush1.msra.mxu0 %v62
    %2328 = vmatprep.subr.mxu0 0.0
    %2329 = vmatpush1.msra.mxu0 0.0
    %2330 = vmatprep.subr.mxu0 0.0
    %2331 = vmatpush1.msra.mxu0 0.0
    %2332 = vmatprep.subr.mxu0 0.0
    %2333 = vmatpush1.msra.mxu0 0.0
    %2334 = vmatprep.subr.mxu0 0.0
    %2335 = vmatpush1.msra.mxu0 0.0
    %2336 = vmatprep.subr.mxu0 0.0
    %2337 = vmatpush1.msra.mxu0 0.0
    %2338 = vmatprep.subr.mxu0 0.0
    %2339 = vmatpush1.msra.mxu0 0.0
    %2340 = vmatprep.subr.mxu0 0.0
    %2341 = vmatpush1.msra.mxu0 0.0
    %2342 = vmatprep.subr.mxu0 0.0
    %2343 = vmatpush1.msra.mxu0 0.0
    %2344 = vmatprep.subr.mxu0 0.0
    %2345 = vmatpush1.msra.mxu0 0.0
    %2346 = vmatprep.subr.mxu0 0.0
    %2347 = vmatpush1.msra.mxu0 0.0
    %2348 = vmatprep.subr.mxu0 0.0
    %2349 = vmatpush1.msra.mxu0 0.0
    %2350 = vmatprep.subr.mxu0 0.0
    %2351 = vmatpush1.msra.mxu0 0.0
    %2352 = vmatprep.subr.mxu0 0.0
    %2353 = vmatpush1.msra.mxu0 0.0
    %2354 = vmatprep.subr.mxu0 0.0
    %2355 = vmatpush1.msra.mxu0 0.0
    %2356 = vmatprep.subr.mxu0 0.0
    %2357 = vmatpush1.msra.mxu0 0.0
    %2358 = vmatprep.subr.mxu0 0.0
    %2359 = vmatpush1.msra.mxu0 0.0
    %2360 = vmatprep.subr.mxu0 0.0
    %2361 = vmatpush1.msra.mxu0 0.0
    %2362 = vmatprep.subr.mxu0 0.0
    %2363 = vmatpush1.msra.mxu0 0.0
    %2364 = vmatprep.subr.mxu0 0.0
    %2365 = vmatpush1.msra.mxu0 0.0
    %2366 = vmatprep.subr.mxu0 0.0
    %2367 = vmatpush1.msra.mxu0 0.0
    %2368 = vmatprep.subr.mxu0 0.0
    %2369 = vmatpush1.msra.mxu0 0.0
    %2370 = vmatprep.subr.mxu0 0.0
    %2371 = vmatpush1.msra.mxu0 0.0
    %2372 = vmatprep.subr.mxu0 0.0
    %2373 = vmatpush1.msra.mxu0 0.0
    %2374 = vmatprep.subr.mxu0 0.0
    %2375 = vmatpush1.msra.mxu0 0.0
    %2376 = vmatprep.subr.mxu0 0.0
    %2377 = vmatpush1.msra.mxu0 0.0
    %2378 = vmatprep.subr.mxu0 0.0
    %2379 = vmatpush1.msra.mxu0 0.0
    %2380 = vmatprep.subr.mxu0 0.0
    %2381 = vmatpush1.msra.mxu0 0.0
    %2382 = vmatprep.subr.mxu0 0.0
    %2383 = vmatpush1.msra.mxu0 0.0
    %2384 = vmatprep.mubr.f32.mxu0 0.0
    %2385 = vmatmul.mubr.f32.gmra.mrb[0].mxu0 %v2223
    %v2386 = vpop.f32.mrb[0].mxu0
    %v2387 = vadd.f32 0.0, %v2386
    %v2388 = vpop.f32.mrb[0].mxu0
    %2389 = vdwg.mxu0
    %v2390 = vadd.f32 %v601, %v2387
    %v2391 = vxor.u32 %v2390, 2147483648
    %v2392 = vmul.f32 %v2391, 1.442695
    %v2393 = vpow.pop %v2392
    %v2394 = vadd.f32 %v2393, 1.0
    %v2395 = vrcp.pop %v2394
    %v2396 = vmul.f32 1.0, %v2395
    %v2397 = vtanh.pop %v2390
    %v2398 = vmul.f32 %v2396, %v2138
    %2400 = vrot.lane.b32.xlu0 %v2397, 32
    %v2401 = vpop.permute.xlu0 %2400
    %v2403 = vmul.f32 %v2396, %v2401
    %2405 = vrot.lane.b32.xlu0 %v2403, 32
    %v2406 = vpop.permute.xlu0 %2405
    %v2408 = vadd.f32 %v2398, %v2406
    %v2409 = vtanh.pop %v2408
    %2411 = vrot.lane.b32.xlu0 %v2409, 32
    %v2412 = vpop.permute.xlu0 %2411
    %v2414 = vmul.f32 %v2396, %v2412
    %2416 = vrot.lane.b32.xlu0 %v2319, 64
    %v2417 = vpop.permute.xlu0 %2416
    %v2418 = vsel %vm80, %v2417, 0
    %2420 = vmatprep.subr.mxu0 0.0
    %2421 = vmatpush1.msra.mxu0 %v67
    %2422 = vmatprep.subr.mxu0 0.0
    %2423 = vmatpush1.msra.mxu0 %v68
    %2424 = vmatprep.subr.mxu0 0.0
    %2425 = vmatpush1.msra.mxu0 %v69
    %2426 = vmatprep.subr.mxu0 0.0
    %2427 = vmatpush1.msra.mxu0 %v70
    %2428 = vmatprep.subr.mxu0 0.0
    %2429 = vmatpush1.msra.mxu0 0.0
    %2430 = vmatprep.subr.mxu0 0.0
    %2431 = vmatpush1.msra.mxu0 0.0
    %2432 = vmatprep.subr.mxu0 0.0
    %2433 = vmatpush1.msra.mxu0 0.0
    %2434 = vmatprep.subr.mxu0 0.0
    %2435 = vmatpush1.msra.mxu0 0.0
    %2436 = vmatprep.subr.mxu0 0.0
    %2437 = vmatpush1.msra.mxu0 0.0
    %2438 = vmatprep.subr.mxu0 0.0
    %2439 = vmatpush1.msra.mxu0 0.0
    %2440 = vmatprep.subr.mxu0 0.0
    %2441 = vmatpush1.msra.mxu0 0.0
    %2442 = vmatprep.subr.mxu0 0.0
    %2443 = vmatpush1.msra.mxu0 0.0
    %2444 = vmatprep.subr.mxu0 0.0
    %2445 = vmatpush1.msra.mxu0 0.0
    %2446 = vmatprep.subr.mxu0 0.0
    %2447 = vmatpush1.msra.mxu0 0.0
    %2448 = vmatprep.subr.mxu0 0.0
    %2449 = vmatpush1.msra.mxu0 0.0
    %2450 = vmatprep.subr.mxu0 0.0
    %2451 = vmatpush1.msra.mxu0 0.0
    %2452 = vmatprep.subr.mxu0 0.0
    %2453 = vmatpush1.msra.mxu0 0.0
    %2454 = vmatprep.subr.mxu0 0.0
    %2455 = vmatpush1.msra.mxu0 0.0
    %2456 = vmatprep.subr.mxu0 0.0
    %2457 = vmatpush1.msra.mxu0 0.0
    %2458 = vmatprep.subr.mxu0 0.0
    %2459 = vmatpush1.msra.mxu0 0.0
    %2460 = vmatprep.subr.mxu0 0.0
    %2461 = vmatpush1.msra.mxu0 0.0
    %2462 = vmatprep.subr.mxu0 0.0
    %2463 = vmatpush1.msra.mxu0 0.0
    %2464 = vmatprep.subr.mxu0 0.0
    %2465 = vmatpush1.msra.mxu0 0.0
    %2466 = vmatprep.subr.mxu0 0.0
    %2467 = vmatpush1.msra.mxu0 0.0
    %2468 = vmatprep.subr.mxu0 0.0
    %2469 = vmatpush1.msra.mxu0 0.0
    %2470 = vmatprep.subr.mxu0 0.0
    %2471 = vmatpush1.msra.mxu0 0.0
    %2472 = vmatprep.subr.mxu0 0.0
    %2473 = vmatpush1.msra.mxu0 0.0
    %2474 = vmatprep.subr.mxu0 0.0
    %2475 = vmatpush1.msra.mxu0 0.0
    %2476 = vmatprep.subr.mxu0 0.0
    %2477 = vmatpush1.msra.mxu0 0.0
    %2478 = vmatprep.subr.mxu0 0.0
    %2479 = vmatpush1.msra.mxu0 0.0
    %2480 = vmatprep.subr.mxu0 0.0
    %2481 = vmatpush1.msra.mxu0 0.0
    %2482 = vmatprep.subr.mxu0 0.0
    %2483 = vmatpush1.msra.mxu0 0.0
    %2484 = vmatprep.mubr.f32.mxu0 0.0
    %2485 = vmatmul.mubr.f32.gmra.mrb[0].mxu0 %v2418
    %v2486 = vpop.f32.mrb[0].mxu0
    %v2487 = vadd.f32 0.0, %v2486
    %v2488 = vpop.f32.mrb[0].mxu0
    %2489 = vdwg.mxu0
    %2491 = vrot.lane.b32.xlu0 %v2414, 64
    %v2492 = vpop.permute.xlu0 %2491
    %v2493 = vsel %vm80, %v2492, 0
    %2495 = vmatprep.subr.mxu0 0.0
    %2496 = vmatpush1.msra.mxu0 %v63
    %2497 = vmatprep.subr.mxu0 0.0
    %2498 = vmatpush1.msra.mxu0 %v64
    %2499 = vmatprep.subr.mxu0 0.0
    %2500 = vmatpush1.msra.mxu0 %v65
    %2501 = vmatprep.subr.mxu0 0.0
    %2502 = vmatpush1.msra.mxu0 %v66
    %2503 = vmatprep.subr.mxu0 0.0
    %2504 = vmatpush1.msra.mxu0 0.0
    %2505 = vmatprep.subr.mxu0 0.0
    %2506 = vmatpush1.msra.mxu0 0.0
    %2507 = vmatprep.subr.mxu0 0.0
    %2508 = vmatpush1.msra.mxu0 0.0
    %2509 = vmatprep.subr.mxu0 0.0
    %2510 = vmatpush1.msra.mxu0 0.0
    %2511 = vmatprep.subr.mxu0 0.0
    %2512 = vmatpush1.msra.mxu0 0.0
    %2513 = vmatprep.subr.mxu0 0.0
    %2514 = vmatpush1.msra.mxu0 0.0
    %2515 = vmatprep.subr.mxu0 0.0
    %2516 = vmatpush1.msra.mxu0 0.0
    %2517 = vmatprep.subr.mxu0 0.0
    %2518 = vmatpush1.msra.mxu0 0.0
    %2519 = vmatprep.subr.mxu0 0.0
    %2520 = vmatpush1.msra.mxu0 0.0
    %2521 = vmatprep.subr.mxu0 0.0
    %2522 = vmatpush1.msra.mxu0 0.0
    %2523 = vmatprep.subr.mxu0 0.0
    %2524 = vmatpush1.msra.mxu0 0.0
    %2525 = vmatprep.subr.mxu0 0.0
    %2526 = vmatpush1.msra.mxu0 0.0
    %2527 = vmatprep.subr.mxu0 0.0
    %2528 = vmatpush1.msra.mxu0 0.0
    %2529 = vmatprep.subr.mxu0 0.0
    %2530 = vmatpush1.msra.mxu0 0.0
    %2531 = vmatprep.subr.mxu0 0.0
    %2532 = vmatpush1.msra.mxu0 0.0
    %2533 = vmatprep.subr.mxu0 0.0
    %2534 = vmatpush1.msra.mxu0 0.0
    %2535 = vmatprep.subr.mxu0 0.0
    %2536 = vmatpush1.msra.mxu0 0.0
    %2537 = vmatprep.subr.mxu0 0.0
    %2538 = vmatpush1.msra.mxu0 0.0
    %2539 = vmatprep.subr.mxu0 0.0
    %2540 = vmatpush1.msra.mxu0 0.0
    %2541 = vmatprep.subr.mxu0 0.0
    %2542 = vmatpush1.msra.mxu0 0.0
    %2543 = vmatprep.subr.mxu0 0.0
    %2544 = vmatpush1.msra.mxu0 0.0
    %2545 = vmatprep.subr.mxu0 0.0
    %2546 = vmatpush1.msra.mxu0 0.0
    %2547 = vmatprep.subr.mxu0 0.0
    %2548 = vmatpush1.msra.mxu0 0.0
    %2549 = vmatprep.subr.mxu0 0.0
    %2550 = vmatpush1.msra.mxu0 0.0
    %2551 = vmatprep.subr.mxu0 0.0
    %2552 = vmatpush1.msra.mxu0 0.0
    %2553 = vmatprep.subr.mxu0 0.0
    %2554 = vmatpush1.msra.mxu0 0.0
    %2555 = vmatprep.subr.mxu0 0.0
    %2556 = vmatpush1.msra.mxu0 0.0
    %2557 = vmatprep.subr.mxu0 0.0
    %2558 = vmatpush1.msra.mxu0 0.0
    %2559 = vmatprep.mubr.f32.mxu0 0.0
    %2560 = vmatmul.mubr.f32.gmra.mrb[0].mxu0 %v2493
    %v2561 = vpop.f32.mrb[0].mxu0
    %v2562 = vadd.f32 %v2487, %v2561
    %v2563 = vpop.f32.mrb[0].mxu0
    %2564 = vdwg.mxu0
    %v2565 = vadd.f32 %v2562, %v939
    %v2566 = vxor.u32 %v2565, 2147483648
    %v2567 = vmul.f32 %v2566, 1.442695
    %v2568 = vpow.pop %v2567
    %v2569 = vadd.f32 %v2568, 1.0
    %v2570 = vrcp.pop %v2569
    %v2571 = vmul.f32 1.0, %v2570
    %v2572 = vtanh.pop %v2565
    %v2573 = vmul.f32 %v2571, %v2313
    %2575 = vrot.lane.b32.xlu0 %v2572, 32
    %v2576 = vpop.permute.xlu0 %2575
    %v2578 = vmul.f32 %v2571, %v2576
    %2580 = vrot.lane.b32.xlu0 %v2578, 32
    %v2581 = vpop.permute.xlu0 %2580
    %v2583 = vadd.f32 %v2573, %v2581
    %v2584 = vtanh.pop %v2583
    %2586 = vrot.lane.b32.xlu0 %v2584, 32
    %v2587 = vpop.permute.xlu0 %2586
    %v2589 = vmul.f32 %v2571, %v2587
    %2590 = vmatprep.subr.mxu0 0.0
    %2591 = vmatpush1.msra.mxu0 %v59
    %2592 = vmatprep.subr.mxu0 0.0
    %2593 = vmatpush1.msra.mxu0 %v60
    %2594 = vmatprep.subr.mxu0 0.0
    %2595 = vmatpush1.msra.mxu0 %v61
    %2596 = vmatprep.subr.mxu0 0.0
    %2597 = vmatpush1.msra.mxu0 %v62
    %2598 = vmatprep.subr.mxu0 0.0
    %2599 = vmatpush1.msra.mxu0 0.0
    %2600 = vmatprep.subr.mxu0 0.0
    %2601 = vmatpush1.msra.mxu0 0.0
    %2602 = vmatprep.subr.mxu0 0.0
    %2603 = vmatpush1.msra.mxu0 0.0
    %2604 = vmatprep.subr.mxu0 0.0
    %2605 = vmatpush1.msra.mxu0 0.0
    %2606 = vmatprep.subr.mxu0 0.0
    %2607 = vmatpush1.msra.mxu0 0.0
    %2608 = vmatprep.subr.mxu0 0.0
    %2609 = vmatpush1.msra.mxu0 0.0
    %2610 = vmatprep.subr.mxu0 0.0
    %2611 = vmatpush1.msra.mxu0 0.0
    %2612 = vmatprep.subr.mxu0 0.0
    %2613 = vmatpush1.msra.mxu0 0.0
    %2614 = vmatprep.subr.mxu0 0.0
    %2615 = vmatpush1.msra.mxu0 0.0
    %2616 = vmatprep.subr.mxu0 0.0
    %2617 = vmatpush1.msra.mxu0 0.0
    %2618 = vmatprep.subr.mxu0 0.0
    %2619 = vmatpush1.msra.mxu0 0.0
    %2620 = vmatprep.subr.mxu0 0.0
    %2621 = vmatpush1.msra.mxu0 0.0
    %2622 = vmatprep.subr.mxu0 0.0
    %2623 = vmatpush1.msra.mxu0 0.0
    %2624 = vmatprep.subr.mxu0 0.0
    %2625 = vmatpush1.msra.mxu0 0.0
    %2626 = vmatprep.subr.mxu0 0.0
    %2627 = vmatpush1.msra.mxu0 0.0
    %2628 = vmatprep.subr.mxu0 0.0
    %2629 = vmatpush1.msra.mxu0 0.0
    %2630 = vmatprep.subr.mxu0 0.0
    %2631 = vmatpush1.msra.mxu0 0.0
    %2632 = vmatprep.subr.mxu0 0.0
    %2633 = vmatpush1.msra.mxu0 0.0
    %2634 = vmatprep.subr.mxu0 0.0
    %2635 = vmatpush1.msra.mxu0 0.0
    %2636 = vmatprep.subr.mxu0 0.0
    %2637 = vmatpush1.msra.mxu0 0.0
    %2638 = vmatprep.subr.mxu0 0.0
    %2639 = vmatpush1.msra.mxu0 0.0
    %2640 = vmatprep.subr.mxu0 0.0
    %2641 = vmatpush1.msra.mxu0 0.0
    %2642 = vmatprep.subr.mxu0 0.0
    %2643 = vmatpush1.msra.mxu0 0.0
    %2644 = vmatprep.subr.mxu0 0.0
    %2645 = vmatpush1.msra.mxu0 0.0
    %2646 = vmatprep.subr.mxu0 0.0
    %2647 = vmatpush1.msra.mxu0 0.0
    %2648 = vmatprep.subr.mxu0 0.0
    %2649 = vmatpush1.msra.mxu0 0.0
    %2650 = vmatprep.subr.mxu0 0.0
    %2651 = vmatpush1.msra.mxu0 0.0
    %2652 = vmatprep.subr.mxu0 0.0
    %2653 = vmatpush1.msra.mxu0 0.0
    %2654 = vmatprep.mubr.f32.mxu0 0.0
    %2655 = vmatmul.mubr.f32.gmra.mrb[0].mxu0 %v2493
    %v2656 = vpop.f32.mrb[0].mxu0
    %v2657 = vadd.f32 0.0, %v2656
    %v2658 = vpop.f32.mrb[0].mxu0
    %2659 = vdwg.mxu0
    %v2660 = vadd.f32 %v676, %v2657
    %v2661 = vxor.u32 %v2660, 2147483648
    %v2662 = vmul.f32 %v2661, 1.442695
    %v2663 = vpow.pop %v2662
    %v2664 = vadd.f32 %v2663, 1.0
    %v2665 = vrcp.pop %v2664
    %v2666 = vmul.f32 1.0, %v2665
    %v2667 = vtanh.pop %v2660
    %v2668 = vmul.f32 %v2666, %v2408
    %2670 = vrot.lane.b32.xlu0 %v2667, 32
    %v2671 = vpop.permute.xlu0 %2670
    %v2673 = vmul.f32 %v2666, %v2671
    %2675 = vrot.lane.b32.xlu0 %v2673, 32
    %v2676 = vpop.permute.xlu0 %2675
    %v2678 = vadd.f32 %v2668, %v2676
    %v2679 = vtanh.pop %v2678
    %2681 = vrot.lane.b32.xlu0 %v2679, 32
    %v2682 = vpop.permute.xlu0 %2681
    %v2684 = vmul.f32 %v2666, %v2682
    %2686 = vrot.lane.b32.xlu0 %v2589, 64
    %v2687 = vpop.permute.xlu0 %2686
    %v2688 = vsel %vm80, %v2687, 0
    %2690 = vmatprep.subr.mxu0 0.0
    %2691 = vmatpush1.msra.mxu0 %v67
    %2692 = vmatprep.subr.mxu0 0.0
    %2693 = vmatpush1.msra.mxu0 %v68
    %2694 = vmatprep.subr.mxu0 0.0
    %2695 = vmatpush1.msra.mxu0 %v69
    %2696 = vmatprep.subr.mxu0 0.0
    %2697 = vmatpush1.msra.mxu0 %v70
    %2698 = vmatprep.subr.mxu0 0.0
    %2699 = vmatpush1.msra.mxu0 0.0
    %2700 = vmatprep.subr.mxu0 0.0
    %2701 = vmatpush1.msra.mxu0 0.0
    %2702 = vmatprep.subr.mxu0 0.0
    %2703 = vmatpush1.msra.mxu0 0.0
    %2704 = vmatprep.subr.mxu0 0.0
    %2705 = vmatpush1.msra.mxu0 0.0
    %2706 = vmatprep.subr.mxu0 0.0
    %2707 = vmatpush1.msra.mxu0 0.0
    %2708 = vmatprep.subr.mxu0 0.0
    %2709 = vmatpush1.msra.mxu0 0.0
    %2710 = vmatprep.subr.mxu0 0.0
    %2711 = vmatpush1.msra.mxu0 0.0
    %2712 = vmatprep.subr.mxu0 0.0
    %2713 = vmatpush1.msra.mxu0 0.0
    %2714 = vmatprep.subr.mxu0 0.0
    %2715 = vmatpush1.msra.mxu0 0.0
    %2716 = vmatprep.subr.mxu0 0.0
    %2717 = vmatpush1.msra.mxu0 0.0
    %2718 = vmatprep.subr.mxu0 0.0
    %2719 = vmatpush1.msra.mxu0 0.0
    %2720 = vmatprep.subr.mxu0 0.0
    %2721 = vmatpush1.msra.mxu0 0.0
    %2722 = vmatprep.subr.mxu0 0.0
    %2723 = vmatpush1.msra.mxu0 0.0
    %2724 = vmatprep.subr.mxu0 0.0
    %2725 = vmatpush1.msra.mxu0 0.0
    %2726 = vmatprep.subr.mxu0 0.0
    %2727 = vmatpush1.msra.mxu0 0.0
    %2728 = vmatprep.subr.mxu0 0.0
    %2729 = vmatpush1.msra.mxu0 0.0
    %2730 = vmatprep.subr.mxu0 0.0
    %2731 = vmatpush1.msra.mxu0 0.0
    %2732 = vmatprep.subr.mxu0 0.0
    %2733 = vmatpush1.msra.mxu0 0.0
    %2734 = vmatprep.subr.mxu0 0.0
    %2735 = vmatpush1.msra.mxu0 0.0
    %2736 = vmatprep.subr.mxu0 0.0
    %2737 = vmatpush1.msra.mxu0 0.0
    %2738 = vmatprep.subr.mxu0 0.0
    %2739 = vmatpush1.msra.mxu0 0.0
    %2740 = vmatprep.subr.mxu0 0.0
    %2741 = vmatpush1.msra.mxu0 0.0
    %2742 = vmatprep.subr.mxu0 0.0
    %2743 = vmatpush1.msra.mxu0 0.0
    %2744 = vmatprep.subr.mxu0 0.0
    %2745 = vmatpush1.msra.mxu0 0.0
    %2746 = vmatprep.subr.mxu0 0.0
    %2747 = vmatpush1.msra.mxu0 0.0
    %2748 = vmatprep.subr.mxu0 0.0
    %2749 = vmatpush1.msra.mxu0 0.0
    %2750 = vmatprep.subr.mxu0 0.0
    %2751 = vmatpush1.msra.mxu0 0.0
    %2752 = vmatprep.subr.mxu0 0.0
    %2753 = vmatpush1.msra.mxu0 0.0
    %2754 = vmatprep.mubr.f32.mxu0 0.0
    %2755 = vmatmul.mubr.f32.gmra.mrb[0].mxu0 %v2688
    %v2756 = vpop.f32.mrb[0].mxu0
    %v2757 = vadd.f32 0.0, %v2756
    %v2758 = vpop.f32.mrb[0].mxu0
    %2759 = vdwg.mxu0
    %2761 = vrot.lane.b32.xlu0 %v2684, 64
    %v2762 = vpop.permute.xlu0 %2761
    %v2763 = vsel %vm80, %v2762, 0
    %2765 = vmatprep.subr.mxu0 0.0
    %2766 = vmatpush1.msra.mxu0 %v63
    %2767 = vmatprep.subr.mxu0 0.0
    %2768 = vmatpush1.msra.mxu0 %v64
    %2769 = vmatprep.subr.mxu0 0.0
    %2770 = vmatpush1.msra.mxu0 %v65
    %2771 = vmatprep.subr.mxu0 0.0
    %2772 = vmatpush1.msra.mxu0 %v66
    %2773 = vmatprep.subr.mxu0 0.0
    %2774 = vmatpush1.msra.mxu0 0.0
    %2775 = vmatprep.subr.mxu0 0.0
    %2776 = vmatpush1.msra.mxu0 0.0
    %2777 = vmatprep.subr.mxu0 0.0
    %2778 = vmatpush1.msra.mxu0 0.0
    %2779 = vmatprep.subr.mxu0 0.0
    %2780 = vmatpush1.msra.mxu0 0.0
    %2781 = vmatprep.subr.mxu0 0.0
    %2782 = vmatpush1.msra.mxu0 0.0
    %2783 = vmatprep.subr.mxu0 0.0
    %2784 = vmatpush1.msra.mxu0 0.0
    %2785 = vmatprep.subr.mxu0 0.0
    %2786 = vmatpush1.msra.mxu0 0.0
    %2787 = vmatprep.subr.mxu0 0.0
    %2788 = vmatpush1.msra.mxu0 0.0
    %2789 = vmatprep.subr.mxu0 0.0
    %2790 = vmatpush1.msra.mxu0 0.0
    %2791 = vmatprep.subr.mxu0 0.0
    %2792 = vmatpush1.msra.mxu0 0.0
    %2793 = vmatprep.subr.mxu0 0.0
    %2794 = vmatpush1.msra.mxu0 0.0
    %2795 = vmatprep.subr.mxu0 0.0
    %2796 = vmatpush1.msra.mxu0 0.0
    %2797 = vmatprep.subr.mxu0 0.0
    %2798 = vmatpush1.msra.mxu0 0.0
    %2799 = vmatprep.subr.mxu0 0.0
    %2800 = vmatpush1.msra.mxu0 0.0
    %2801 = vmatprep.subr.mxu0 0.0
    %2802 = vmatpush1.msra.mxu0 0.0
    %2803 = vmatprep.subr.mxu0 0.0
    %2804 = vmatpush1.msra.mxu0 0.0
    %2805 = vmatprep.subr.mxu0 0.0
    %2806 = vmatpush1.msra.mxu0 0.0
    %2807 = vmatprep.subr.mxu0 0.0
    %2808 = vmatpush1.msra.mxu0 0.0
    %2809 = vmatprep.subr.mxu0 0.0
    %2810 = vmatpush1.msra.mxu0 0.0
    %2811 = vmatprep.subr.mxu0 0.0
    %2812 = vmatpush1.msra.mxu0 0.0
    %2813 = vmatprep.subr.mxu0 0.0
    %2814 = vmatpush1.msra.mxu0 0.0
    %2815 = vmatprep.subr.mxu0 0.0
    %2816 = vmatpush1.msra.mxu0 0.0
    %2817 = vmatprep.subr.mxu0 0.0
    %2818 = vmatpush1.msra.mxu0 0.0
    %2819 = vmatprep.subr.mxu0 0.0
    %2820 = vmatpush1.msra.mxu0 0.0
    %2821 = vmatprep.subr.mxu0 0.0
    %2822 = vmatpush1.msra.mxu0 0.0
    %2823 = vmatprep.subr.mxu0 0.0
    %2824 = vmatpush1.msra.mxu0 0.0
    %2825 = vmatprep.subr.mxu0 0.0
    %2826 = vmatpush1.msra.mxu0 0.0
    %2827 = vmatprep.subr.mxu0 0.0
    %2828 = vmatpush1.msra.mxu0 0.0
    %2829 = vmatprep.mubr.f32.mxu0 0.0
    %2830 = vmatmul.mubr.f32.gmra.mrb[0].mxu0 %v2763
    %v2831 = vpop.f32.mrb[0].mxu0
    %v2832 = vadd.f32 %v2757, %v2831
    %v2833 = vpop.f32.mrb[0].mxu0
    %2834 = vdwg.mxu0
    %v2835 = vadd.f32 %v2832, %v939
    %v2836 = vxor.u32 %v2835, 2147483648
    %v2837 = vmul.f32 %v2836, 1.442695
    %v2838 = vpow.pop %v2837
    %v2839 = vadd.f32 %v2838, 1.0
    %v2840 = vrcp.pop %v2839
    %v2841 = vmul.f32 1.0, %v2840
    %v2842 = vtanh.pop %v2835
    %v2843 = vmul.f32 %v2841, %v2583
    %2845 = vrot.lane.b32.xlu0 %v2842, 32
    %v2846 = vpop.permute.xlu0 %2845
    %v2848 = vmul.f32 %v2841, %v2846
    %2850 = vrot.lane.b32.xlu0 %v2848, 32
    %v2851 = vpop.permute.xlu0 %2850
    %v2853 = vadd.f32 %v2843, %v2851
    %v2854 = vtanh.pop %v2853
    %2856 = vrot.lane.b32.xlu0 %v2854, 32
    %v2857 = vpop.permute.xlu0 %2856
    %v2859 = vmul.f32 %v2841, %v2857
    %2861 = vrot.lane.b32.xlu0 %v2859, 64
    %v2862 = vpop.permute.xlu0 %2861
    %vm2865 = vcmask 254976
    %2866 = vst.msk [vmem:[#allocation2] sm:$0x3] %vm2865, %v2762
    %2867 = vst.msk [vmem:[#allocation2 + $0x2] sm:$0x3] %vm2865, %v2862
    %2870 = vrot.lane.b32.xlu0 %v2678, 96
    %v2871 = vpop.permute.xlu0 %2870
    %2872 = vrot.lane.b32.xlu0 %v2853, 96
    %v2873 = vpop.permute.xlu0 %2872
    %2876 = vst.msk [vmem:[#allocation4] sm:$0x3] %vm2865, %v2871
    %2877 = vst.msk [vmem:[#allocation4 + $0x2] sm:$0x3] %vm2865, %v2873
    %v2878 = vld [vmem:[%s11] sm:$0xff]
    %v2879 = vld [vmem:[%s11 + $0x8] sm:$0xff]
    %v2880 = vld [vmem:[%s11 + $0x10] sm:$0xff]
    %v2881 = vld [vmem:[%s11 + $0x18] sm:$0xff]
    %v2882 = vld [vmem:[%s12] sm:$0xff]
    %v2883 = vld [vmem:[%s12 + $0x8] sm:$0xff]
    %v2884 = vld [vmem:[%s12 + $0x10] sm:$0xff]
    %v2885 = vld [vmem:[%s12 + $0x18] sm:$0xff]
    %v2886 = vld [vmem:[%s13] sm:$0xff]
    %v2887 = vld [vmem:[%s13 + $0x8] sm:$0xff]
    %v2888 = vld [vmem:[%s13 + $0x10] sm:$0xff]
    %v2889 = vld [vmem:[%s13 + $0x18] sm:$0xff]
    %v2890 = vld [vmem:[%s14] sm:$0x1]
    %v2891 = vrot.slane %v1239, 7
    %v2893 = vrot.slane %v1509, 6
    %v2895 = vrot.slane %v1779, 5
    %v2897 = vrot.slane %v2049, 4
    %v2899 = vrot.slane %v2319, 3
    %v2901 = vrot.slane %v2589, 2
    %v2903 = vrot.slane %v2859, 1
    %vm2905 = vcmask 1040384
    %v2906 = vsel %vm2905, %v969, %v2891
    %vm2907 = vcmask 1041408
    %v2908 = vsel %vm2907, %v2906, %v2893
    %vm2909 = vcmask 1042432
    %v2910 = vsel %vm2909, %v2908, %v2895
    %vm2911 = vcmask 1043456
    %v2912 = vsel %vm2911, %v2910, %v2897
    %vm2913 = vcmask 1044480
    %v2914 = vsel %vm2913, %v2912, %v2899
    %vm2915 = vcmask 1045504
    %v2916 = vsel %vm2915, %v2914, %v2901
    %vm2917 = vcmask 1046528
    %v2918 = vsel %vm2917, %v2916, %v2903
    %v2919 = vld [vmem:[%s3] sm:$0x3f]
    %v2920 = vld [vmem:[%s4] sm:$0x1]
    %v2922 = vlaneseq
    %v2923 = vshrl.u32 %v2922, 7
    %v2924 = vsub.s32 0, %v2923
    %v2925 = vrot.slane %v2920, %v2924
    %2928 = vrot.lane.b32.xlu0 %v2918, 64
    %v2929 = vpop.permute.xlu0 %2928
    %v2930 = vsel %vm80, %v2929, 0
    %v2933 = vsel %vm80, %v2919, 0
    %2935 = vmatprep.subr.mxu0 0.0
    %2936 = vmatpush1.xpose.msra.mxu0 %v2933
    %2937 = vmatprep.subr.mxu0 0.0
    %2938 = vmatpush1.xpose.msra.mxu0 0.0
    %2939 = vmatprep.subr.mxu0 0.0
    %2940 = vmatpush1.xpose.msra.mxu0 0.0
    %2941 = vmatprep.subr.mxu0 0.0
    %2942 = vmatpush1.xpose.msra.mxu0 0.0
    %2943 = vmatprep.subr.mxu0 0.0
    %2944 = vmatpush1.xpose.msra.mxu0 0.0
    %2945 = vmatprep.subr.mxu0 0.0
    %2946 = vmatpush1.xpose.msra.mxu0 0.0
    %2947 = vmatprep.subr.mxu0 0.0
    %2948 = vmatpush1.xpose.msra.mxu0 0.0
    %2949 = vmatprep.subr.mxu0 0.0
    %2950 = vmatpush1.xpose.msra.mxu0 0.0
    %2951 = vmatprep.subr.mxu0 0.0
    %2952 = vmatpush1.xpose.msra.mxu0 0.0
    %2953 = vmatprep.subr.mxu0 0.0
    %2954 = vmatpush1.xpose.msra.mxu0 0.0
    %2955 = vmatprep.subr.mxu0 0.0
    %2956 = vmatpush1.xpose.msra.mxu0 0.0
    %2957 = vmatprep.subr.mxu0 0.0
    %2958 = vmatpush1.xpose.msra.mxu0 0.0
    %2959 = vmatprep.subr.mxu0 0.0
    %2960 = vmatpush1.xpose.msra.mxu0 0.0
    %2961 = vmatprep.subr.mxu0 0.0
    %2962 = vmatpush1.xpose.msra.mxu0 0.0
    %2963 = vmatprep.subr.mxu0 0.0
    %2964 = vmatpush1.xpose.msra.mxu0 0.0
    %2965 = vmatprep.subr.mxu0 0.0
    %2966 = vmatpush1.xpose.msra.mxu0 0.0
    %2967 = vmatprep.subr.mxu0 0.0
    %2968 = vmatpush1.xpose.msra.mxu0 0.0
    %2969 = vmatprep.subr.mxu0 0.0
    %2970 = vmatpush1.xpose.msra.mxu0 0.0
    %2971 = vmatprep.subr.mxu0 0.0
    %2972 = vmatpush1.xpose.msra.mxu0 0.0
    %2973 = vmatprep.subr.mxu0 0.0
    %2974 = vmatpush1.xpose.msra.mxu0 0.0
    %2975 = vmatprep.subr.mxu0 0.0
    %2976 = vmatpush1.xpose.msra.mxu0 0.0
    %2977 = vmatprep.subr.mxu0 0.0
    %2978 = vmatpush1.xpose.msra.mxu0 0.0
    %2979 = vmatprep.subr.mxu0 0.0
    %2980 = vmatpush1.xpose.msra.mxu0 0.0
    %2981 = vmatprep.subr.mxu0 0.0
    %2982 = vmatpush1.xpose.msra.mxu0 0.0
    %2983 = vmatprep.subr.mxu0 0.0
    %2984 = vmatpush1.xpose.msra.mxu0 0.0
    %2985 = vmatprep.subr.mxu0 0.0
    %2986 = vmatpush1.xpose.msra.mxu0 0.0
    %2987 = vmatprep.subr.mxu0 0.0
    %2988 = vmatpush1.xpose.msra.mxu0 0.0
    %2989 = vmatprep.subr.mxu0 0.0
    %2990 = vmatpush1.xpose.msra.mxu0 0.0
    %2991 = vmatprep.subr.mxu0 0.0
    %2992 = vmatpush1.xpose.msra.mxu0 0.0
    %2993 = vmatprep.subr.mxu0 0.0
    %2994 = vmatpush1.xpose.msra.mxu0 0.0
    %2995 = vmatprep.subr.mxu0 0.0
    %2996 = vmatpush1.xpose.msra.mxu0 0.0
    %2997 = vmatprep.subr.mxu0 0.0
    %2998 = vmatpush1.xpose.msra.mxu0 0.0
    %2999 = vmatprep.mubr.f32.mxu0 0.0
    %3000 = vmatmul.mubr.f32.gmra.mrb[0].mxu0 %v2930
    %v3001 = vpop.f32.mrb[0].mxu0
    %v3002 = vadd.f32 %v2925, %v3001
    %v3003 = vpop.f32.mrb[0].mxu0
    %3004 = vdwg.mxu0
    %vm3005 = vcmask 48128
    %v3006 = vsel %vm3005, %v3002, -inf
    %3007 = vmax.xlane.f32.xlu0 %v3006
    %v3008 = vpop.xlane.xlu0 %3007
    %v3009 = vsub.f32 %v3002, %v3008
    %v3010 = vmul.f32 %v3009, 1.442695
    %v3011 = vpow.pop %v3010
    %v3012 = vsel %vm3005, %v3011, 0.0
    %3013 = vadd.xlane.f32.xlu0 %v3012
    %v3014 = vpop.xlane.xlu0 %3013
    %v3015 = vrcp.pop %v3014
    %v3016 = vmul.f32 %v3011, %v3015
    %v3018 = vsel %vm3005, %v3016, 0
    %v3020 = vsel %vm2915, %v2919, 0
    %3022 = vmatprep.subr.mxu0 0.0
    %3023 = vmatpush1.msra.mxu0 %v3020
    %3024 = vmatprep.subr.mxu0 0.0
    %3025 = vmatpush1.msra.mxu0 0.0
    %3026 = vmatprep.subr.mxu0 0.0
    %3027 = vmatpush1.msra.mxu0 0.0
    %3028 = vmatprep.subr.mxu0 0.0
    %3029 = vmatpush1.msra.mxu0 0.0
    %3030 = vmatprep.subr.mxu0 0.0
    %3031 = vmatpush1.msra.mxu0 0.0
    %3032 = vmatprep.subr.mxu0 0.0
    %3033 = vmatpush1.msra.mxu0 0.0
    %3034 = vmatprep.subr.mxu0 0.0
    %3035 = vmatpush1.msra.mxu0 0.0
    %3036 = vmatprep.subr.mxu0 0.0
    %3037 = vmatpush1.msra.mxu0 0.0
    %3038 = vmatprep.subr.mxu0 0.0
    %3039 = vmatpush1.msra.mxu0 0.0
    %3040 = vmatprep.subr.mxu0 0.0
    %3041 = vmatpush1.msra.mxu0 0.0
    %3042 = vmatprep.subr.mxu0 0.0
    %3043 = vmatpush1.msra.mxu0 0.0
    %3044 = vmatprep.subr.mxu0 0.0
    %3045 = vmatpush1.msra.mxu0 0.0
    %3046 = vmatprep.subr.mxu0 0.0
    %3047 = vmatpush1.msra.mxu0 0.0
    %3048 = vmatprep.subr.mxu0 0.0
    %3049 = vmatpush1.msra.mxu0 0.0
    %3050 = vmatprep.subr.mxu0 0.0
    %3051 = vmatpush1.msra.mxu0 0.0
    %3052 = vmatprep.subr.mxu0 0.0
    %3053 = vmatpush1.msra.mxu0 0.0
    %3054 = vmatprep.subr.mxu0 0.0
    %3055 = vmatpush1.msra.mxu0 0.0
    %3056 = vmatprep.subr.mxu0 0.0
    %3057 = vmatpush1.msra.mxu0 0.0
    %3058 = vmatprep.subr.mxu0 0.0
    %3059 = vmatpush1.msra.mxu0 0.0
    %3060 = vmatprep.subr.mxu0 0.0
    %3061 = vmatpush1.msra.mxu0 0.0
    %3062 = vmatprep.subr.mxu0 0.0
    %3063 = vmatpush1.msra.mxu0 0.0
    %3064 = vmatprep.subr.mxu0 0.0
    %3065 = vmatpush1.msra.mxu0 0.0
    %3066 = vmatprep.subr.mxu0 0.0
    %3067 = vmatpush1.msra.mxu0 0.0
    %3068 = vmatprep.subr.mxu0 0.0
    %3069 = vmatpush1.msra.mxu0 0.0
    %3070 = vmatprep.subr.mxu0 0.0
    %3071 = vmatpush1.msra.mxu0 0.0
    %3072 = vmatprep.subr.mxu0 0.0
    %3073 = vmatpush1.msra.mxu0 0.0
    %3074 = vmatprep.subr.mxu0 0.0
    %3075 = vmatpush1.msra.mxu0 0.0
    %3076 = vmatprep.subr.mxu0 0.0
    %3077 = vmatpush1.msra.mxu0 0.0
    %3078 = vmatprep.subr.mxu0 0.0
    %3079 = vmatpush1.msra.mxu0 0.0
    %3080 = vmatprep.subr.mxu0 0.0
    %3081 = vmatpush1.msra.mxu0 0.0
    %3082 = vmatprep.subr.mxu0 0.0
    %3083 = vmatpush1.msra.mxu0 0.0
    %3084 = vmatprep.subr.mxu0 0.0
    %3085 = vmatpush1.msra.mxu0 0.0
    %3086 = vmatprep.mubr.f32.mxu0 0.0
    %3087 = vmatmul.mubr.f32.gmra.mrb[0].mxu0 %v3018
    %v3088 = vpop.f32.mrb[0].mxu0
    %v3089 = vadd.f32 0.0, %v3088
    %v3090 = vpop.f32.mrb[0].mxu0
    %3091 = vdwg.mxu0
    %v3093 = vsel %vm80, %v3089, 0
    %3095 = vmatprep.subr.mxu0 0.0
    %3096 = vmatpush1.msra.mxu0 %v2882
    %3097 = vmatprep.subr.mxu0 0.0
    %3098 = vmatpush1.msra.mxu0 %v2883
    %3099 = vmatprep.subr.mxu0 0.0
    %3100 = vmatpush1.msra.mxu0 %v2884
    %3101 = vmatprep.subr.mxu0 0.0
    %3102 = vmatpush1.msra.mxu0 %v2885
    %3103 = vmatprep.subr.mxu0 0.0
    %3104 = vmatpush1.msra.mxu0 0.0
    %3105 = vmatprep.subr.mxu0 0.0
    %3106 = vmatpush1.msra.mxu0 0.0
    %3107 = vmatprep.subr.mxu0 0.0
    %3108 = vmatpush1.msra.mxu0 0.0
    %3109 = vmatprep.subr.mxu0 0.0
    %3110 = vmatpush1.msra.mxu0 0.0
    %3111 = vmatprep.subr.mxu0 0.0
    %3112 = vmatpush1.msra.mxu0 0.0
    %3113 = vmatprep.subr.mxu0 0.0
    %3114 = vmatpush1.msra.mxu0 0.0
    %3115 = vmatprep.subr.mxu0 0.0
    %3116 = vmatpush1.msra.mxu0 0.0
    %3117 = vmatprep.subr.mxu0 0.0
    %3118 = vmatpush1.msra.mxu0 0.0
    %3119 = vmatprep.subr.mxu0 0.0
    %3120 = vmatpush1.msra.mxu0 0.0
    %3121 = vmatprep.subr.mxu0 0.0
    %3122 = vmatpush1.msra.mxu0 0.0
    %3123 = vmatprep.subr.mxu0 0.0
    %3124 = vmatpush1.msra.mxu0 0.0
    %3125 = vmatprep.subr.mxu0 0.0
    %3126 = vmatpush1.msra.mxu0 0.0
    %3127 = vmatprep.subr.mxu0 0.0
    %3128 = vmatpush1.msra.mxu0 0.0
    %3129 = vmatprep.subr.mxu0 0.0
    %3130 = vmatpush1.msra.mxu0 0.0
    %3131 = vmatprep.subr.mxu0 0.0
    %3132 = vmatpush1.msra.mxu0 0.0
    %3133 = vmatprep.subr.mxu0 0.0
    %3134 = vmatpush1.msra.mxu0 0.0
    %3135 = vmatprep.subr.mxu0 0.0
    %3136 = vmatpush1.msra.mxu0 0.0
    %3137 = vmatprep.subr.mxu0 0.0
    %3138 = vmatpush1.msra.mxu0 0.0
    %3139 = vmatprep.subr.mxu0 0.0
    %3140 = vmatpush1.msra.mxu0 0.0
    %3141 = vmatprep.subr.mxu0 0.0
    %3142 = vmatpush1.msra.mxu0 0.0
    %3143 = vmatprep.subr.mxu0 0.0
    %3144 = vmatpush1.msra.mxu0 0.0
    %3145 = vmatprep.subr.mxu0 0.0
    %3146 = vmatpush1.msra.mxu0 0.0
    %3147 = vmatprep.subr.mxu0 0.0
    %3148 = vmatpush1.msra.mxu0 0.0
    %3149 = vmatprep.subr.mxu0 0.0
    %3150 = vmatpush1.msra.mxu0 0.0
    %3151 = vmatprep.subr.mxu0 0.0
    %3152 = vmatpush1.msra.mxu0 0.0
    %3153 = vmatprep.subr.mxu0 0.0
    %3154 = vmatpush1.msra.mxu0 0.0
    %3155 = vmatprep.subr.mxu0 0.0
    %3156 = vmatpush1.msra.mxu0 0.0
    %3157 = vmatprep.subr.mxu0 0.0
    %3158 = vmatpush1.msra.mxu0 0.0
    %3159 = vmatprep.mubr.f32.mxu0 0.0
    %3160 = vmatmul.mubr.f32.gmra.mrb[0].mxu0 %v3093
    %v3161 = vpop.f32.mrb[0].mxu0
    %v3162 = vadd.f32 0.0, %v3161
    %v3163 = vpop.f32.mrb[0].mxu0
    %3164 = vdwg.mxu0
    %3165 = vmatprep.subr.mxu0 0.0
    %3166 = vmatpush1.msra.mxu0 %v2878
    %3167 = vmatprep.subr.mxu0 0.0
    %3168 = vmatpush1.msra.mxu0 %v2879
    %3169 = vmatprep.subr.mxu0 0.0
    %3170 = vmatpush1.msra.mxu0 %v2880
    %3171 = vmatprep.subr.mxu0 0.0
    %3172 = vmatpush1.msra.mxu0 %v2881
    %3173 = vmatprep.subr.mxu0 0.0
    %3174 = vmatpush1.msra.mxu0 0.0
    %3175 = vmatprep.subr.mxu0 0.0
    %3176 = vmatpush1.msra.mxu0 0.0
    %3177 = vmatprep.subr.mxu0 0.0
    %3178 = vmatpush1.msra.mxu0 0.0
    %3179 = vmatprep.subr.mxu0 0.0
    %3180 = vmatpush1.msra.mxu0 0.0
    %3181 = vmatprep.subr.mxu0 0.0
    %3182 = vmatpush1.msra.mxu0 0.0
    %3183 = vmatprep.subr.mxu0 0.0
    %3184 = vmatpush1.msra.mxu0 0.0
    %3185 = vmatprep.subr.mxu0 0.0
    %3186 = vmatpush1.msra.mxu0 0.0
    %3187 = vmatprep.subr.mxu0 0.0
    %3188 = vmatpush1.msra.mxu0 0.0
    %3189 = vmatprep.subr.mxu0 0.0
    %3190 = vmatpush1.msra.mxu0 0.0
    %3191 = vmatprep.subr.mxu0 0.0
    %3192 = vmatpush1.msra.mxu0 0.0
    %3193 = vmatprep.subr.mxu0 0.0
    %3194 = vmatpush1.msra.mxu0 0.0
    %3195 = vmatprep.subr.mxu0 0.0
    %3196 = vmatpush1.msra.mxu0 0.0
    %3197 = vmatprep.subr.mxu0 0.0
    %3198 = vmatpush1.msra.mxu0 0.0
    %3199 = vmatprep.subr.mxu0 0.0
    %3200 = vmatpush1.msra.mxu0 0.0
    %3201 = vmatprep.subr.mxu0 0.0
    %3202 = vmatpush1.msra.mxu0 0.0
    %3203 = vmatprep.subr.mxu0 0.0
    %3204 = vmatpush1.msra.mxu0 0.0
    %3205 = vmatprep.subr.mxu0 0.0
    %3206 = vmatpush1.msra.mxu0 0.0
    %3207 = vmatprep.subr.mxu0 0.0
    %3208 = vmatpush1.msra.mxu0 0.0
    %3209 = vmatprep.subr.mxu0 0.0
    %3210 = vmatpush1.msra.mxu0 0.0
    %3211 = vmatprep.subr.mxu0 0.0
    %3212 = vmatpush1.msra.mxu0 0.0
    %3213 = vmatprep.subr.mxu0 0.0
    %3214 = vmatpush1.msra.mxu0 0.0
    %3215 = vmatprep.subr.mxu0 0.0
    %3216 = vmatpush1.msra.mxu0 0.0
    %3217 = vmatprep.subr.mxu0 0.0
    %3218 = vmatpush1.msra.mxu0 0.0
    %3219 = vmatprep.subr.mxu0 0.0
    %3220 = vmatpush1.msra.mxu0 0.0
    %3221 = vmatprep.subr.mxu0 0.0
    %3222 = vmatpush1.msra.mxu0 0.0
    %3223 = vmatprep.subr.mxu0 0.0
    %3224 = vmatpush1.msra.mxu0 0.0
    %3225 = vmatprep.subr.mxu0 0.0
    %3226 = vmatpush1.msra.mxu0 0.0
    %3227 = vmatprep.subr.mxu0 0.0
    %3228 = vmatpush1.msra.mxu0 0.0
    %3229 = vmatprep.mubr.f32.mxu0 0.0
    %3230 = vmatmul.mubr.f32.gmra.mrb[0].mxu0 %v2930
    %v3231 = vpop.f32.mrb[0].mxu0
    %v3232 = vadd.f32 %v3162, %v3231
    %v3233 = vpop.f32.mrb[0].mxu0
    %3234 = vdwg.mxu0
    %v3235 = vtanh.pop %v3232
    %v3237 = vlaneseq
    %v3238 = vshrl.u32 %v3237, 7
    %v3239 = vsub.s32 0, %v3238
    %v3240 = vrot.slane %v2890, %v3239
    %v3243 = vsel %vm80, %v3235, 0
    %3245 = vmatprep.subr.mxu0 0.0
    %3246 = vmatpush1.msra.mxu0 %v2886
    %3247 = vmatprep.subr.mxu0 0.0
    %3248 = vmatpush1.msra.mxu0 %v2887
    %3249 = vmatprep.subr.mxu0 0.0
    %3250 = vmatpush1.msra.mxu0 %v2888
    %3251 = vmatprep.subr.mxu0 0.0
    %3252 = vmatpush1.msra.mxu0 %v2889
    %3253 = vmatprep.subr.mxu0 0.0
    %3254 = vmatpush1.msra.mxu0 0.0
    %3255 = vmatprep.subr.mxu0 0.0
    %3256 = vmatpush1.msra.mxu0 0.0
    %3257 = vmatprep.subr.mxu0 0.0
    %3258 = vmatpush1.msra.mxu0 0.0
    %3259 = vmatprep.subr.mxu0 0.0
    %3260 = vmatpush1.msra.mxu0 0.0
    %3261 = vmatprep.subr.mxu0 0.0
    %3262 = vmatpush1.msra.mxu0 0.0
    %3263 = vmatprep.subr.mxu0 0.0
    %3264 = vmatpush1.msra.mxu0 0.0
    %3265 = vmatprep.subr.mxu0 0.0
    %3266 = vmatpush1.msra.mxu0 0.0
    %3267 = vmatprep.subr.mxu0 0.0
    %3268 = vmatpush1.msra.mxu0 0.0
    %3269 = vmatprep.subr.mxu0 0.0
    %3270 = vmatpush1.msra.mxu0 0.0
    %3271 = vmatprep.subr.mxu0 0.0
    %3272 = vmatpush1.msra.mxu0 0.0
    %3273 = vmatprep.subr.mxu0 0.0
    %3274 = vmatpush1.msra.mxu0 0.0
    %3275 = vmatprep.subr.mxu0 0.0
    %3276 = vmatpush1.msra.mxu0 0.0
    %3277 = vmatprep.subr.mxu0 0.0
    %3278 = vmatpush1.msra.mxu0 0.0
    %3279 = vmatprep.subr.mxu0 0.0
    %3280 = vmatpush1.msra.mxu0 0.0
    %3281 = vmatprep.subr.mxu0 0.0
    %3282 = vmatpush1.msra.mxu0 0.0
    %3283 = vmatprep.subr.mxu0 0.0
    %3284 = vmatpush1.msra.mxu0 0.0
    %3285 = vmatprep.subr.mxu0 0.0
    %3286 = vmatpush1.msra.mxu0 0.0
    %3287 = vmatprep.subr.mxu0 0.0
    %3288 = vmatpush1.msra.mxu0 0.0
    %3289 = vmatprep.subr.mxu0 0.0
    %3290 = vmatpush1.msra.mxu0 0.0
    %3291 = vmatprep.subr.mxu0 0.0
    %3292 = vmatpush1.msra.mxu0 0.0
    %3293 = vmatprep.subr.mxu0 0.0
    %3294 = vmatpush1.msra.mxu0 0.0
    %3295 = vmatprep.subr.mxu0 0.0
    %3296 = vmatpush1.msra.mxu0 0.0
    %3297 = vmatprep.subr.mxu0 0.0
    %3298 = vmatpush1.msra.mxu0 0.0
    %3299 = vmatprep.subr.mxu0 0.0
    %3300 = vmatpush1.msra.mxu0 0.0
    %3301 = vmatprep.subr.mxu0 0.0
    %3302 = vmatpush1.msra.mxu0 0.0
    %3303 = vmatprep.subr.mxu0 0.0
    %3304 = vmatpush1.msra.mxu0 0.0
    %3305 = vmatprep.subr.mxu0 0.0
    %3306 = vmatpush1.msra.mxu0 0.0
    %3307 = vmatprep.subr.mxu0 0.0
    %3308 = vmatpush1.msra.mxu0 0.0
    %3309 = vmatprep.mubr.f32.mxu0 0.0
    %3310 = vmatmul.mubr.f32.gmra.mrb[0].mxu0 %v3243
    %v3311 = vpop.f32.mrb[0].mxu0
    %v3312 = vadd.f32 %v3240, %v3311
    %v3313 = vpop.f32.mrb[0].mxu0
    %3314 = vdwg.mxu0
    %3315 = vmax.xlane.f32.xlu0 %v3312
    %v3316 = vpop.xlane.xlu0 %3315
    %v3317 = vsub.f32 %v3312, %v3316
    %v3318 = vmul.f32 %v3317, 1.442695
    %v3319 = vpow.pop %v3318
    %3320 = vadd.xlane.f32.xlu0 %v3319
    %v3321 = vpop.xlane.xlu0 %3320
    %v3322 = vlog2.pop %v3321
    %v3323 = vmul.f32 %v3322, 0.6931472
    %v3324 = vadd.f32 %v3323, %v3316
    %v3325 = vsub.f32 %v3312, %v3324
    %3326 = vst [vmem:[%s15] sm:$0xff] %v3325
    %v3327 = vrot.slane %v969, 1
    %v3329 = vrot.slane %v1509, 7
    %v3331 = vrot.slane %v1779, 6
    %v3333 = vrot.slane %v2049, 5
    %v3335 = vrot.slane %v2319, 4
    %v3337 = vrot.slane %v2589, 3
    %v3339 = vrot.slane %v2859, 2
    %v3341 = vsel %vm2905, %v3327, %v1239
    %v3342 = vsel %vm2907, %v3341, %v3329
    %v3343 = vsel %vm2909, %v3342, %v3331
    %v3344 = vsel %vm2911, %v3343, %v3333
    %v3345 = vsel %vm2913, %v3344, %v3335
    %v3346 = vsel %vm2915, %v3345, %v3337
    %v3347 = vsel %vm2917, %v3346, %v3339
    %s3348 = scalar_lea.vmem %s3, 8
    %v3349 = vld [vmem:[%s3348] sm:$0x3f]
    %s3350 = scalar_lea.vmem %s4, 1
    %v3351 = vld [vmem:[%s3350] sm:$0x1]
    %v3353 = vlaneseq
    %v3354 = vshrl.u32 %v3353, 7
    %v3355 = vsub.s32 0, %v3354
    %v3356 = vrot.slane %v3351, %v3355
    %3359 = vrot.lane.b32.xlu0 %v3347, 64
    %v3360 = vpop.permute.xlu0 %3359
    %v3361 = vsel %vm80, %v3360, 0
    %v3364 = vsel %vm80, %v3349, 0
    %3366 = vmatprep.subr.mxu0 0.0
    %3367 = vmatpush1.xpose.msra.mxu0 %v3364
    %3368 = vmatprep.subr.mxu0 0.0
    %3369 = vmatpush1.xpose.msra.mxu0 0.0
    %3370 = vmatprep.subr.mxu0 0.0
    %3371 = vmatpush1.xpose.msra.mxu0 0.0
    %3372 = vmatprep.subr.mxu0 0.0
    %3373 = vmatpush1.xpose.msra.mxu0 0.0
    %3374 = vmatprep.subr.mxu0 0.0
    %3375 = vmatpush1.xpose.msra.mxu0 0.0
    %3376 = vmatprep.subr.mxu0 0.0
    %3377 = vmatpush1.xpose.msra.mxu0 0.0
    %3378 = vmatprep.subr.mxu0 0.0
    %3379 = vmatpush1.xpose.msra.mxu0 0.0
    %3380 = vmatprep.subr.mxu0 0.0
    %3381 = vmatpush1.xpose.msra.mxu0 0.0
    %3382 = vmatprep.subr.mxu0 0.0
    %3383 = vmatpush1.xpose.msra.mxu0 0.0
    %3384 = vmatprep.subr.mxu0 0.0
    %3385 = vmatpush1.xpose.msra.mxu0 0.0
    %3386 = vmatprep.subr.mxu0 0.0
    %3387 = vmatpush1.xpose.msra.mxu0 0.0
    %3388 = vmatprep.subr.mxu0 0.0
    %3389 = vmatpush1.xpose.msra.mxu0 0.0
    %3390 = vmatprep.subr.mxu0 0.0
    %3391 = vmatpush1.xpose.msra.mxu0 0.0
    %3392 = vmatprep.subr.mxu0 0.0
    %3393 = vmatpush1.xpose.msra.mxu0 0.0
    %3394 = vmatprep.subr.mxu0 0.0
    %3395 = vmatpush1.xpose.msra.mxu0 0.0
    %3396 = vmatprep.subr.mxu0 0.0
    %3397 = vmatpush1.xpose.msra.mxu0 0.0
    %3398 = vmatprep.subr.mxu0 0.0
    %3399 = vmatpush1.xpose.msra.mxu0 0.0
    %3400 = vmatprep.subr.mxu0 0.0
    %3401 = vmatpush1.xpose.msra.mxu0 0.0
    %3402 = vmatprep.subr.mxu0 0.0
    %3403 = vmatpush1.xpose.msra.mxu0 0.0
    %3404 = vmatprep.subr.mxu0 0.0
    %3405 = vmatpush1.xpose.msra.mxu0 0.0
    %3406 = vmatprep.subr.mxu0 0.0
    %3407 = vmatpush1.xpose.msra.mxu0 0.0
    %3408 = vmatprep.subr.mxu0 0.0
    %3409 = vmatpush1.xpose.msra.mxu0 0.0
    %3410 = vmatprep.subr.mxu0 0.0
    %3411 = vmatpush1.xpose.msra.mxu0 0.0
    %3412 = vmatprep.subr.mxu0 0.0
    %3413 = vmatpush1.xpose.msra.mxu0 0.0
    %3414 = vmatprep.subr.mxu0 0.0
    %3415 = vmatpush1.xpose.msra.mxu0 0.0
    %3416 = vmatprep.subr.mxu0 0.0
    %3417 = vmatpush1.xpose.msra.mxu0 0.0
    %3418 = vmatprep.subr.mxu0 0.0
    %3419 = vmatpush1.xpose.msra.mxu0 0.0
    %3420 = vmatprep.subr.mxu0 0.0
    %3421 = vmatpush1.xpose.msra.mxu0 0.0
    %3422 = vmatprep.subr.mxu0 0.0
    %3423 = vmatpush1.xpose.msra.mxu0 0.0
    %3424 = vmatprep.subr.mxu0 0.0
    %3425 = vmatpush1.xpose.msra.mxu0 0.0
    %3426 = vmatprep.subr.mxu0 0.0
    %3427 = vmatpush1.xpose.msra.mxu0 0.0
    %3428 = vmatprep.subr.mxu0 0.0
    %3429 = vmatpush1.xpose.msra.mxu0 0.0
    %3430 = vmatprep.mubr.f32.mxu0 0.0
    %3431 = vmatmul.mubr.f32.gmra.mrb[0].mxu0 %v3361
    %v3432 = vpop.f32.mrb[0].mxu0
    %v3433 = vadd.f32 %v3356, %v3432
    %v3434 = vpop.f32.mrb[0].mxu0
    %3435 = vdwg.mxu0
    %v3436 = vsel %vm3005, %v3433, -inf
    %3437 = vmax.xlane.f32.xlu0 %v3436
    %v3438 = vpop.xlane.xlu0 %3437
    %v3439 = vsub.f32 %v3433, %v3438
    %v3440 = vmul.f32 %v3439, 1.442695
    %v3441 = vpow.pop %v3440
    %v3442 = vsel %vm3005, %v3441, 0.0
    %3443 = vadd.xlane.f32.xlu0 %v3442
    %v3444 = vpop.xlane.xlu0 %3443
    %v3445 = vrcp.pop %v3444
    %v3446 = vmul.f32 %v3441, %v3445
    %v3448 = vsel %vm3005, %v3446, 0
    %v3450 = vsel %vm2915, %v3349, 0
    %3452 = vmatprep.subr.mxu0 0.0
    %3453 = vmatpush1.msra.mxu0 %v3450
    %3454 = vmatprep.subr.mxu0 0.0
    %3455 = vmatpush1.msra.mxu0 0.0
    %3456 = vmatprep.subr.mxu0 0.0
    %3457 = vmatpush1.msra.mxu0 0.0
    %3458 = vmatprep.subr.mxu0 0.0
    %3459 = vmatpush1.msra.mxu0 0.0
    %3460 = vmatprep.subr.mxu0 0.0
    %3461 = vmatpush1.msra.mxu0 0.0
    %3462 = vmatprep.subr.mxu0 0.0
    %3463 = vmatpush1.msra.mxu0 0.0
    %3464 = vmatprep.subr.mxu0 0.0
    %3465 = vmatpush1.msra.mxu0 0.0
    %3466 = vmatprep.subr.mxu0 0.0
    %3467 = vmatpush1.msra.mxu0 0.0
    %3468 = vmatprep.subr.mxu0 0.0
    %3469 = vmatpush1.msra.mxu0 0.0
    %3470 = vmatprep.subr.mxu0 0.0
    %3471 = vmatpush1.msra.mxu0 0.0
    %3472 = vmatprep.subr.mxu0 0.0
    %3473 = vmatpush1.msra.mxu0 0.0
    %3474 = vmatprep.subr.mxu0 0.0
    %3475 = vmatpush1.msra.mxu0 0.0
    %3476 = vmatprep.subr.mxu0 0.0
    %3477 = vmatpush1.msra.mxu0 0.0
    %3478 = vmatprep.subr.mxu0 0.0
    %3479 = vmatpush1.msra.mxu0 0.0
    %3480 = vmatprep.subr.mxu0 0.0
    %3481 = vmatpush1.msra.mxu0 0.0
    %3482 = vmatprep.subr.mxu0 0.0
    %3483 = vmatpush1.msra.mxu0 0.0
    %3484 = vmatprep.subr.mxu0 0.0
    %3485 = vmatpush1.msra.mxu0 0.0
    %3486 = vmatprep.subr.mxu0 0.0
    %3487 = vmatpush1.msra.mxu0 0.0
    %3488 = vmatprep.subr.mxu0 0.0
    %3489 = vmatpush1.msra.mxu0 0.0
    %3490 = vmatprep.subr.mxu0 0.0
    %3491 = vmatpush1.msra.mxu0 0.0
    %3492 = vmatprep.subr.mxu0 0.0
    %3493 = vmatpush1.msra.mxu0 0.0
    %3494 = vmatprep.subr.mxu0 0.0
    %3495 = vmatpush1.msra.mxu0 0.0
    %3496 = vmatprep.subr.mxu0 0.0
    %3497 = vmatpush1.msra.mxu0 0.0
    %3498 = vmatprep.subr.mxu0 0.0
    %3499 = vmatpush1.msra.mxu0 0.0
    %3500 = vmatprep.subr.mxu0 0.0
    %3501 = vmatpush1.msra.mxu0 0.0
    %3502 = vmatprep.subr.mxu0 0.0
    %3503 = vmatpush1.msra.mxu0 0.0
    %3504 = vmatprep.subr.mxu0 0.0
    %3505 = vmatpush1.msra.mxu0 0.0
    %3506 = vmatprep.subr.mxu0 0.0
    %3507 = vmatpush1.msra.mxu0 0.0
    %3508 = vmatprep.subr.mxu0 0.0
    %3509 = vmatpush1.msra.mxu0 0.0
    %3510 = vmatprep.subr.mxu0 0.0
    %3511 = vmatpush1.msra.mxu0 0.0
    %3512 = vmatprep.subr.mxu0 0.0
    %3513 = vmatpush1.msra.mxu0 0.0
    %3514 = vmatprep.subr.mxu0 0.0
    %3515 = vmatpush1.msra.mxu0 0.0
    %3516 = vmatprep.mubr.f32.mxu0 0.0
    %3517 = vmatmul.mubr.f32.gmra.mrb[0].mxu0 %v3448
    %v3518 = vpop.f32.mrb[0].mxu0
    %v3519 = vadd.f32 0.0, %v3518
    %v3520 = vpop.f32.mrb[0].mxu0
    %3521 = vdwg.mxu0
    %v3523 = vsel %vm80, %v3519, 0
    %3525 = vmatprep.subr.mxu0 0.0
    %3526 = vmatpush1.msra.mxu0 %v2882
    %3527 = vmatprep.subr.mxu0 0.0
    %3528 = vmatpush1.msra.mxu0 %v2883
    %3529 = vmatprep.subr.mxu0 0.0
    %3530 = vmatpush1.msra.mxu0 %v2884
    %3531 = vmatprep.subr.mxu0 0.0
    %3532 = vmatpush1.msra.mxu0 %v2885
    %3533 = vmatprep.subr.mxu0 0.0
    %3534 = vmatpush1.msra.mxu0 0.0
    %3535 = vmatprep.subr.mxu0 0.0
    %3536 = vmatpush1.msra.mxu0 0.0
    %3537 = vmatprep.subr.mxu0 0.0
    %3538 = vmatpush1.msra.mxu0 0.0
    %3539 = vmatprep.subr.mxu0 0.0
    %3540 = vmatpush1.msra.mxu0 0.0
    %3541 = vmatprep.subr.mxu0 0.0
    %3542 = vmatpush1.msra.mxu0 0.0
    %3543 = vmatprep.subr.mxu0 0.0
    %3544 = vmatpush1.msra.mxu0 0.0
    %3545 = vmatprep.subr.mxu0 0.0
    %3546 = vmatpush1.msra.mxu0 0.0
    %3547 = vmatprep.subr.mxu0 0.0
    %3548 = vmatpush1.msra.mxu0 0.0
    %3549 = vmatprep.subr.mxu0 0.0
    %3550 = vmatpush1.msra.mxu0 0.0
    %3551 = vmatprep.subr.mxu0 0.0
    %3552 = vmatpush1.msra.mxu0 0.0
    %3553 = vmatprep.subr.mxu0 0.0
    %3554 = vmatpush1.msra.mxu0 0.0
    %3555 = vmatprep.subr.mxu0 0.0
    %3556 = vmatpush1.msra.mxu0 0.0
    %3557 = vmatprep.subr.mxu0 0.0
    %3558 = vmatpush1.msra.mxu0 0.0
    %3559 = vmatprep.subr.mxu0 0.0
    %3560 = vmatpush1.msra.mxu0 0.0
    %3561 = vmatprep.subr.mxu0 0.0
    %3562 = vmatpush1.msra.mxu0 0.0
    %3563 = vmatprep.subr.mxu0 0.0
    %3564 = vmatpush1.msra.mxu0 0.0
    %3565 = vmatprep.subr.mxu0 0.0
    %3566 = vmatpush1.msra.mxu0 0.0
    %3567 = vmatprep.subr.mxu0 0.0
    %3568 = vmatpush1.msra.mxu0 0.0
    %3569 = vmatprep.subr.mxu0 0.0
    %3570 = vmatpush1.msra.mxu0 0.0
    %3571 = vmatprep.subr.mxu0 0.0
    %3572 = vmatpush1.msra.mxu0 0.0
    %3573 = vmatprep.subr.mxu0 0.0
    %3574 = vmatpush1.msra.mxu0 0.0
    %3575 = vmatprep.subr.mxu0 0.0
    %3576 = vmatpush1.msra.mxu0 0.0
    %3577 = vmatprep.subr.mxu0 0.0
    %3578 = vmatpush1.msra.mxu0 0.0
    %3579 = vmatprep.subr.mxu0 0.0
    %3580 = vmatpush1.msra.mxu0 0.0
    %3581 = vmatprep.subr.mxu0 0.0
    %3582 = vmatpush1.msra.mxu0 0.0
    %3583 = vmatprep.subr.mxu0 0.0
    %3584 = vmatpush1.msra.mxu0 0.0
    %3585 = vmatprep.subr.mxu0 0.0
    %3586 = vmatpush1.msra.mxu0 0.0
    %3587 = vmatprep.subr.mxu0 0.0
    %3588 = vmatpush1.msra.mxu0 0.0
    %3589 = vmatprep.mubr.f32.mxu0 0.0
    %3590 = vmatmul.mubr.f32.gmra.mrb[0].mxu0 %v3523
    %v3591 = vpop.f32.mrb[0].mxu0
    %v3592 = vadd.f32 0.0, %v3591
    %v3593 = vpop.f32.mrb[0].mxu0
    %3594 = vdwg.mxu0
    %3595 = vmatprep.subr.mxu0 0.0
    %3596 = vmatpush1.msra.mxu0 %v2878
    %3597 = vmatprep.subr.mxu0 0.0
    %3598 = vmatpush1.msra.mxu0 %v2879
    %3599 = vmatprep.subr.mxu0 0.0
    %3600 = vmatpush1.msra.mxu0 %v2880
    %3601 = vmatprep.subr.mxu0 0.0
    %3602 = vmatpush1.msra.mxu0 %v2881
    %3603 = vmatprep.subr.mxu0 0.0
    %3604 = vmatpush1.msra.mxu0 0.0
    %3605 = vmatprep.subr.mxu0 0.0
    %3606 = vmatpush1.msra.mxu0 0.0
    %3607 = vmatprep.subr.mxu0 0.0
    %3608 = vmatpush1.msra.mxu0 0.0
    %3609 = vmatprep.subr.mxu0 0.0
    %3610 = vmatpush1.msra.mxu0 0.0
    %3611 = vmatprep.subr.mxu0 0.0
    %3612 = vmatpush1.msra.mxu0 0.0
    %3613 = vmatprep.subr.mxu0 0.0
    %3614 = vmatpush1.msra.mxu0 0.0
    %3615 = vmatprep.subr.mxu0 0.0
    %3616 = vmatpush1.msra.mxu0 0.0
    %3617 = vmatprep.subr.mxu0 0.0
    %3618 = vmatpush1.msra.mxu0 0.0
    %3619 = vmatprep.subr.mxu0 0.0
    %3620 = vmatpush1.msra.mxu0 0.0
    %3621 = vmatprep.subr.mxu0 0.0
    %3622 = vmatpush1.msra.mxu0 0.0
    %3623 = vmatprep.subr.mxu0 0.0
    %3624 = vmatpush1.msra.mxu0 0.0
    %3625 = vmatprep.subr.mxu0 0.0
    %3626 = vmatpush1.msra.mxu0 0.0
    %3627 = vmatprep.subr.mxu0 0.0
    %3628 = vmatpush1.msra.mxu0 0.0
    %3629 = vmatprep.subr.mxu0 0.0
    %3630 = vmatpush1.msra.mxu0 0.0
    %3631 = vmatprep.subr.mxu0 0.0
    %3632 = vmatpush1.msra.mxu0 0.0
    %3633 = vmatprep.subr.mxu0 0.0
    %3634 = vmatpush1.msra.mxu0 0.0
    %3635 = vmatprep.subr.mxu0 0.0
    %3636 = vmatpush1.msra.mxu0 0.0
    %3637 = vmatprep.subr.mxu0 0.0
    %3638 = vmatpush1.msra.mxu0 0.0
    %3639 = vmatprep.subr.mxu0 0.0
    %3640 = vmatpush1.msra.mxu0 0.0
    %3641 = vmatprep.subr.mxu0 0.0
    %3642 = vmatpush1.msra.mxu0 0.0
    %3643 = vmatprep.subr.mxu0 0.0
    %3644 = vmatpush1.msra.mxu0 0.0
    %3645 = vmatprep.subr.mxu0 0.0
    %3646 = vmatpush1.msra.mxu0 0.0
    %3647 = vmatprep.subr.mxu0 0.0
    %3648 = vmatpush1.msra.mxu0 0.0
    %3649 = vmatprep.subr.mxu0 0.0
    %3650 = vmatpush1.msra.mxu0 0.0
    %3651 = vmatprep.subr.mxu0 0.0
    %3652 = vmatpush1.msra.mxu0 0.0
    %3653 = vmatprep.subr.mxu0 0.0
    %3654 = vmatpush1.msra.mxu0 0.0
    %3655 = vmatprep.subr.mxu0 0.0
    %3656 = vmatpush1.msra.mxu0 0.0
    %3657 = vmatprep.subr.mxu0 0.0
    %3658 = vmatpush1.msra.mxu0 0.0
    %3659 = vmatprep.mubr.f32.mxu0 0.0
    %3660 = vmatmul.mubr.f32.gmra.mrb[0].mxu0 %v3361
    %v3661 = vpop.f32.mrb[0].mxu0
    %v3662 = vadd.f32 %v3592, %v3661
    %v3663 = vpop.f32.mrb[0].mxu0
    %3664 = vdwg.mxu0
    %v3665 = vtanh.pop %v3662
    %v3667 = vsel %vm80, %v3665, 0
    %3669 = vmatprep.subr.mxu0 0.0
    %3670 = vmatpush1.msra.mxu0 %v2886
    %3671 = vmatprep.subr.mxu0 0.0
    %3672 = vmatpush1.msra.mxu0 %v2887
    %3673 = vmatprep.subr.mxu0 0.0
    %3674 = vmatpush1.msra.mxu0 %v2888
    %3675 = vmatprep.subr.mxu0 0.0
    %3676 = vmatpush1.msra.mxu0 %v2889
    %3677 = vmatprep.subr.mxu0 0.0
    %3678 = vmatpush1.msra.mxu0 0.0
    %3679 = vmatprep.subr.mxu0 0.0
    %3680 = vmatpush1.msra.mxu0 0.0
    %3681 = vmatprep.subr.mxu0 0.0
    %3682 = vmatpush1.msra.mxu0 0.0
    %3683 = vmatprep.subr.mxu0 0.0
    %3684 = vmatpush1.msra.mxu0 0.0
    %3685 = vmatprep.subr.mxu0 0.0
    %3686 = vmatpush1.msra.mxu0 0.0
    %3687 = vmatprep.subr.mxu0 0.0
    %3688 = vmatpush1.msra.mxu0 0.0
    %3689 = vmatprep.subr.mxu0 0.0
    %3690 = vmatpush1.msra.mxu0 0.0
    %3691 = vmatprep.subr.mxu0 0.0
    %3692 = vmatpush1.msra.mxu0 0.0
    %3693 = vmatprep.subr.mxu0 0.0
    %3694 = vmatpush1.msra.mxu0 0.0
    %3695 = vmatprep.subr.mxu0 0.0
    %3696 = vmatpush1.msra.mxu0 0.0
    %3697 = vmatprep.subr.mxu0 0.0
    %3698 = vmatpush1.msra.mxu0 0.0
    %3699 = vmatprep.subr.mxu0 0.0
    %3700 = vmatpush1.msra.mxu0 0.0
    %3701 = vmatprep.subr.mxu0 0.0
    %3702 = vmatpush1.msra.mxu0 0.0
    %3703 = vmatprep.subr.mxu0 0.0
    %3704 = vmatpush1.msra.mxu0 0.0
    %3705 = vmatprep.subr.mxu0 0.0
    %3706 = vmatpush1.msra.mxu0 0.0
    %3707 = vmatprep.subr.mxu0 0.0
    %3708 = vmatpush1.msra.mxu0 0.0
    %3709 = vmatprep.subr.mxu0 0.0
    %3710 = vmatpush1.msra.mxu0 0.0
    %3711 = vmatprep.subr.mxu0 0.0
    %3712 = vmatpush1.msra.mxu0 0.0
    %3713 = vmatprep.subr.mxu0 0.0
    %3714 = vmatpush1.msra.mxu0 0.0
    %3715 = vmatprep.subr.mxu0 0.0
    %3716 = vmatpush1.msra.mxu0 0.0
    %3717 = vmatprep.subr.mxu0 0.0
    %3718 = vmatpush1.msra.mxu0 0.0
    %3719 = vmatprep.subr.mxu0 0.0
    %3720 = vmatpush1.msra.mxu0 0.0
    %3721 = vmatprep.subr.mxu0 0.0
    %3722 = vmatpush1.msra.mxu0 0.0
    %3723 = vmatprep.subr.mxu0 0.0
    %3724 = vmatpush1.msra.mxu0 0.0
    %3725 = vmatprep.subr.mxu0 0.0
    %3726 = vmatpush1.msra.mxu0 0.0
    %3727 = vmatprep.subr.mxu0 0.0
    %3728 = vmatpush1.msra.mxu0 0.0
    %3729 = vmatprep.subr.mxu0 0.0
    %3730 = vmatpush1.msra.mxu0 0.0
    %3731 = vmatprep.subr.mxu0 0.0
    %3732 = vmatpush1.msra.mxu0 0.0
    %3733 = vmatprep.mubr.f32.mxu0 0.0
    %3734 = vmatmul.mubr.f32.gmra.mrb[0].mxu0 %v3667
    %v3735 = vpop.f32.mrb[0].mxu0
    %v3736 = vadd.f32 %v3240, %v3735
    %v3737 = vpop.f32.mrb[0].mxu0
    %3738 = vdwg.mxu0
    %3739 = vmax.xlane.f32.xlu0 %v3736
    %v3740 = vpop.xlane.xlu0 %3739
    %v3741 = vsub.f32 %v3736, %v3740
    %v3742 = vmul.f32 %v3741, 1.442695
    %v3743 = vpow.pop %v3742
    %3744 = vadd.xlane.f32.xlu0 %v3743
    %v3745 = vpop.xlane.xlu0 %3744
    %v3746 = vlog2.pop %v3745
    %v3747 = vmul.f32 %v3746, 0.6931472
    %v3748 = vadd.f32 %v3747, %v3740
    %v3749 = vsub.f32 %v3736, %v3748
    %s3750 = scalar_lea.vmem %s15, 8
    %3751 = vst [vmem:[%s3750] sm:$0xff] %v3749
    // Predicated region
    $region62: #{run.1} parent=1 // pred_check
      _
    $region63: #{run.1} parent=1 // pred_check_branch
      %3753 = sbr.rel (0) target = $region65
    $region64: #{run.1} parent=1 // pred_region
      _
    $region65: #{run.1} parent=1 // pred_fallthru
      _
    // Predicated region
    $region66: #{run.1} parent=1 // pred_check
      _
    $region67: #{run.1} parent=1 // pred_check_branch
      %3755 = sbr.rel (0) target = $region69
    $region68: #{run.1} parent=1 // pred_region
      %s3757 = ssub.s32 64, 64
      %3758 = vsyncadd [#allocation3], %s3757
      %s3759 = sshll.u32 [#allocation2], 4
      %s3760 = int_to_ptr.vmem [resolvable:$true] %s3759
      %3765 = dma.vmem_to_hbm [thread:$0]  %s3760, 64, %s16, [#allocation3], 32, 32, 2
    $region69: #{run.1} parent=1 // pred_fallthru
      _
    // Predicated region
    $region70: #{run.1} parent=1 // pred_check
      _
    $region71: #{run.1} parent=1 // pred_check_branch
      %3767 = sbr.rel (0) target = $region73
    $region72: #{run.1} parent=1 // pred_region
      %s3769 = ssub.s32 64, 64
      %3770 = vsyncadd [#allocation5], %s3769
      %s3771 = sshll.u32 [#allocation4], 4
      %s3772 = int_to_ptr.vmem [resolvable:$true] %s3771
      %3777 = dma.vmem_to_hbm [thread:$0]  %s3772, 64, %s17, [#allocation5], 32, 32, 2
    $region73: #{run.1} parent=1 // pred_fallthru
      _
    // Predicated region
    $region74: #{run.1} parent=1 // pred_check
      _
    $region75: #{run.1} parent=1 // pred_check_branch
      %3779 = sbr.rel (0) target = $region77
    $region76: #{run.1} parent=1 // pred_region
      _
    $region77: #{run.1} parent=1 // pred_fallthru
      _
    // Predicated region
    $region78: #{run.1} parent=1 // pred_check
      _
    $region79: #{run.1} parent=1 // pred_check_branch
      %3781 = sbr.rel (0) target = $region81
    $region80: #{run.1} parent=1 // pred_region
      %3782 = dma.done [#allocation3], 64
    $region81: #{run.1} parent=1 // pred_fallthru
      _
    // Predicated region
    $region82: #{run.1} parent=1 // pred_check
      _
    $region83: #{run.1} parent=1 // pred_check_branch
      %3784 = sbr.rel (0) target = $region85
    $region84: #{run.1} parent=1 // pred_region
      %3785 = dma.done [#allocation5], 64
    $region85: #{run.1} parent=1 // pred_fallthru
      _
    %3786 = vsyncpa [#allocation3], 1
    %3787 = vsyncpa [#allocation5], 1

</llo_original>
